<compile_context>
chip_gen: v6e
topology: v6e:2x2x1
jax: 0.10.0
libtpu: 0.0.40
codegen_flags: <defaults>
</compile_context>

<pallas_src>
import functools

import jax
import jax.numpy as jnp
from jax.experimental import pallas as pl
from jax.experimental.pallas import tpu as pltpu

CHAR_COUNT = 64     # vocabulary size (small, synthetic)
EMB = 320           # char_embbedding_size (fixed by the module)
HID = 128           # hidden_size (small TPU-friendly choice; module default 512)
SQUEEZE = 320       # output_sqeeze_size (fixed by the module)

_HI = jax.lax.Precision.HIGHEST   # used by the wrapper precompute + reference


def _pick_tt(t, cap=32):
    """Largest divisor of t that is <= cap (time-block length for the LSTM)."""
    best = 1
    for k in range(1, min(t, cap) + 1):
        if t % k == 0:
            best = k
    return best


# --------------------------------------------------------------------------
# Fused kernel: one-hot embed+proj  ->  2-layer LSTM recurrence  ->  head.
#   grid = (T // TT,), sequential ("arbitrary"); h/c carries live in VMEM
#   scratch across grid steps; h_n/c_n are constant-index output blocks that
#   are only written at the last grid step (they stay resident across the
#   whole sequential grid axis).
# --------------------------------------------------------------------------
def _text_rnn_kernel(chars_ref, ptab_ref, b0_ref,
                     whh0_ref, wih1_ref, whh1_ref, b1_ref,
                     ws_ref, bs_ref, wo_ref, bo_ref,
                     logp_ref, hn_ref, cn_ref,
                     gin_s, hbuf_s, h0_s, c0_s, h1_s, c1_s,
                     *, hidden, bp, tt):
    tb = pl.program_id(0)

    @pl.when(tb == 0)
    def _():
        h0_s[...] = jnp.zeros_like(h0_s)
        c0_s[...] = jnp.zeros_like(c0_s)
        h1_s[...] = jnp.zeros_like(h1_s)
        c1_s[...] = jnp.zeros_like(c1_s)

    # ---- fused embedding gather + layer-0 input projection for this block --
    rows = chars_ref.shape[0]
    cv = ptab_ref.shape[0]
    chars = chars_ref[...]                                           # (rows,1)
    lane = jax.lax.broadcasted_iota(jnp.int32, (rows, cv), 1)
    onehot = (chars == lane).astype(jnp.bfloat16)                    # (rows,CV)
    gin_s[...] = jnp.dot(onehot, ptab_ref[...],
                         preferred_element_type=jnp.float32) + b0_ref[...]

    whh0 = whh0_ref[...]
    wih1 = wih1_ref[...]
    whh1 = whh1_ref[...]
    b1 = b1_ref[...]

    def gates_to_hc(gates, c_prev):
        i = jax.nn.sigmoid(gates[:, 0 * hidden:1 * hidden])
        f = jax.nn.sigmoid(gates[:, 1 * hidden:2 * hidden])
        g = jnp.tanh(gates[:, 2 * hidden:3 * hidden])
        o = jax.nn.sigmoid(gates[:, 3 * hidden:4 * hidden])
        c_new = f * c_prev + i * g
        h_new = o * jnp.tanh(c_new)
        return h_new, c_new

    # ---- recurrence over TT steps ------------------------------------------
    # TODO(synk): per-step weight-stationary MXU pushes (pltpu.matmul_push_rhs
    # once per grid step + matmul_acc_lhs per time step) would remove the
    # dominant per-step RHS streaming cost at M=bp=8; kept as jnp.dot for
    # portability across v5e/v6e/v7x.
    def step(i, carry):
        h0, c0, h1, c1 = carry
        row = pl.multiple_of(i * bp, bp)
        # layer-1 h-term first: independent of this step's layer-0 output, so
        # it overlaps with layer-0's sigmoid/tanh on the EUP.
        g1_part = jnp.dot(h1.astype(jnp.bfloat16), whh1,
                          preferred_element_type=jnp.float32) + b1
        g0 = gin_s[pl.ds(row, bp), :] + jnp.dot(
            h0.astype(jnp.bfloat16), whh0, preferred_element_type=jnp.float32)
        h0n, c0n = gates_to_hc(g0, c0)
        g1 = g1_part + jnp.dot(h0n.astype(jnp.bfloat16), wih1,
                               preferred_element_type=jnp.float32)
        h1n, c1n = gates_to_hc(g1, c1)
        hbuf_s[pl.ds(row, bp), :] = h1n
        return (h0n, c0n, h1n, c1n)

    carry0 = (h0_s[...], c0_s[...], h1_s[...], c1_s[...])
    h0, c0, h1, c1 = jax.lax.fori_loop(0, tt, step, carry0, unroll=True)

    h0_s[...] = h0
    c0_s[...] = c0
    h1_s[...] = h1
    c1_s[...] = c1

    # ---- head epilogue over the whole time block (M = tt*bp rows) ----------
    x = hbuf_s[...].astype(jnp.bfloat16)                             # (rows,H)
    s = jnp.tanh(
        jnp.dot(x, ws_ref[...], preferred_element_type=jnp.float32)
        + bs_ref[...])                                               # (rows,SP)
    logits = jnp.dot(s.astype(jnp.bfloat16), wo_ref[...],
                     preferred_element_type=jnp.float32) + bo_ref[...]
    m = jnp.max(logits, axis=-1, keepdims=True)
    z = logits - m
    lse = jnp.log(jnp.sum(jnp.exp(z), axis=-1, keepdims=True))
    logp_ref[...] = z - lse

    @pl.when(tb == pl.num_programs(0) - 1)
    def _():
        hn_ref[0] = h0
        hn_ref[1] = h1
        cn_ref[0] = c0
        cn_ref[1] = c1


def text_rnn_fused_pallas(chars_flat, ptab, b0, whh0_t, wih1_t, whh1_t, b1,
                          ws_t, bs, wo_t, bo, *, bp, t_steps, hidden):
    n = chars_flat.shape[0]
    cv, g4 = ptab.shape
    sp = ws_t.shape[1]
    cp = wo_t.shape[1]
    tt = _pick_tt(t_steps, 32)
    rows = tt * bp
    kernel = functools.partial(_text_rnn_kernel, hidden=hidden, bp=bp, tt=tt)

    out_shapes = (
        jax.ShapeDtypeStruct((n, cp), jnp.float32),          # log-probs (flat)
        jax.ShapeDtypeStruct((2, bp, hidden), jnp.float32),  # h_n
        jax.ShapeDtypeStruct((2, bp, hidden), jnp.float32),  # c_n
    )
    grid_spec = pltpu.PrefetchScalarGridSpec(
        num_scalar_prefetch=0,
        grid=(t_steps // tt,),
        in_specs=[
            pl.BlockSpec((rows, 1), lambda tb: (tb, 0)),         # char ids
            pl.BlockSpec((cv, g4), lambda tb: (0, 0)),           # proj table
            pl.BlockSpec((1, g4), lambda tb: (0, 0)),            # b0
            pl.BlockSpec((hidden, g4), lambda tb: (0, 0)),       # W_hh0^T
            pl.BlockSpec((hidden, g4), lambda tb: (0, 0)),       # W_ih1^T
            pl.BlockSpec((hidden, g4), lambda tb: (0, 0)),       # W_hh1^T
            pl.BlockSpec((1, g4), lambda tb: (0, 0)),            # b1
            pl.BlockSpec((hidden, sp), lambda tb: (0, 0)),       # W_sq^T (pad)
            pl.BlockSpec((1, sp), lambda tb: (0, 0)),            # b_sq (pad)
            pl.BlockSpec((sp, cp), lambda tb: (0, 0)),           # W_out^T (pad)
            pl.BlockSpec((1, cp), lambda tb: (0, 0)),            # b_out (pad)
        ],
        out_specs=(
            pl.BlockSpec((rows, cp), lambda tb: (tb, 0)),
            pl.BlockSpec((2, bp, hidden), lambda tb: (0, 0, 0)),
            pl.BlockSpec((2, bp, hidden), lambda tb: (0, 0, 0)),
        ),
        scratch_shapes=[
            pltpu.VMEM((rows, g4), jnp.float32),      # per-block gate inputs
            pltpu.VMEM((rows, hidden), jnp.float32),  # per-block layer-1 h seq
            pltpu.VMEM((bp, hidden), jnp.float32),    # h0 carry
            pltpu.VMEM((bp, hidden), jnp.float32),    # c0 carry
            pltpu.VMEM((bp, hidden), jnp.float32),    # h1 carry
            pltpu.VMEM((bp, hidden), jnp.float32),    # c1 carry
        ],
    )
    # TODO(synk): at the module default H=512, add pipeline_mode=pl.Buffered(1)
    # on the constant-index weight blocks and set vmem_limit_bytes explicitly
    # (matters on v7x's 64 MiB VMEM); negligible at H=128 so left default.
    # TODO(synk): for BP >= 16 on v7x, add a leading size-2 "parallel" batch
    # grid axis so both TensorCores share the recurrence.
    return pl.pallas_call(
        kernel,
        out_shape=out_shapes,
        grid_spec=grid_spec,
        compiler_params=pltpu.CompilerParams(
            dimension_semantics=("arbitrary",)),
    )(chars_flat, ptab, b0, whh0_t, wih1_t, whh1_t, b1, ws_t, bs, wo_t, bo)


# --------------------------------------------------------------------------
# Parameter init (deterministic, synthetic) and full forward.
# --------------------------------------------------------------------------
def init_params(key, char_count=CHAR_COUNT, hidden=HID):
    ks = jax.random.split(key, 13)
    u = lambda k, shape, s=0.08: jax.random.uniform(k, shape, jnp.float32, -s, s)
    return dict(
        embed=u(ks[0], (char_count, EMB)),
        w_ih_l0=u(ks[1], (4 * hidden, EMB)),
        w_hh_l0=u(ks[2], (4 * hidden, hidden)),
        b_ih_l0=u(ks[3], (4 * hidden,)),
        b_hh_l0=u(ks[4], (4 * hidden,)),
        w_ih_l1=u(ks[5], (4 * hidden, hidden)),
        w_hh_l1=u(ks[6], (4 * hidden, hidden)),
        b_ih_l1=u(ks[7], (4 * hidden,)),
        b_hh_l1=u(ks[8], (4 * hidden,)),
        w_sq=u(ks[9], (SQUEEZE, hidden)),
        b_sq=u(ks[10], (SQUEEZE,)),
        w_out=u(ks[11], (char_count, SQUEEZE)),
        b_out=u(ks[12], (char_count,)),
    )


def text_rnn_forward(params, input_chars):
    """Pallas implementation of Text_RNN.forward with state=None."""
    B, T = input_chars.shape
    H = params["w_hh_l0"].shape[1]
    C = params["embed"].shape[0]
    S = params["w_sq"].shape[0]
    BP = ((B + 7) // 8) * 8              # pad batch to a full sublane group
    N = T * BP

    # tiny integer glue: time-major, batch-padded char ids (T*BP int32s).
    chars_tb = jnp.transpose(input_chars).astype(jnp.int32)        # (T, B)
    if BP > B:
        chars_tb = jnp.pad(chars_tb, ((0, 0), (0, BP - B)))
    chars_flat = chars_tb.reshape(N, 1)

    # parameter repack: fused embed+input-projection table, bf16 MXU weights,
    # fused biases, lane-dense / zero-exact paddings.
    bf = jnp.bfloat16
    CV = ((C + 127) // 128) * 128
    proj = jnp.dot(params["embed"], params["w_ih_l0"].T, precision=_HI)     # (C, 4H)
    ptab = jnp.pad(proj, ((0, CV - C), (0, 0))).astype(bf)                  # (CV, 4H)
    b0 = (params["b_ih_l0"] + params["b_hh_l0"]).reshape(1, -1)             # (1, 4H)
    whh0_t = params["w_hh_l0"].T.astype(bf)                                 # (H, 4H)
    wih1_t = params["w_ih_l1"].T.astype(bf)                                 # (H, 4H)
    whh1_t = params["w_hh_l1"].T.astype(bf)                                 # (H, 4H)
    b1 = (params["b_ih_l1"] + params["b_hh_l1"]).reshape(1, -1)             # (1, 4H)

    SP = ((S + 127) // 128) * 128        # 320 -> 384, zero pad is exact
    ws_t = jnp.pad(params["w_sq"].T, ((0, 0), (0, SP - S))).astype(bf)      # (H, SP)
    bs = jnp.pad(params["b_sq"], (0, SP - S)).reshape(1, -1)                # (1, SP)
    CP = ((C + 127) // 128) * 128
    wo_t = jnp.pad(params["w_out"].T,
                   ((0, SP - S), (0, CP - C))).astype(bf)                   # (SP, CP)
    bo = jnp.concatenate(
        [params["b_out"].reshape(1, -1),
         jnp.full((1, CP - C), -1e30, jnp.float32)], axis=1)                # (1, CP)

    # single fused kernel.
    logp_p, h_n, c_n = text_rnn_fused_pallas(
        chars_flat, ptab, b0, whh0_t, wih1_t, whh1_t, b1,
        ws_t, bs, wo_t, bo, bp=BP, t_steps=T, hidden=H)

    # tiny output glue: drop batch/class padding, restore batch_first layout.
    log_probs = jnp.transpose(
        logp_p[:, :C].reshape(T, BP, C)[:, :B, :], (1, 0, 2))      # (B, T, C)
    return log_probs, (h_n[:, :B, :], c_n[:, :B, :])


# --------------------------------------------------------------------------
# Pure-JAX reference (mirrors PyTorch LSTM semantics) for a sanity check.
# --------------------------------------------------------------------------
def reference_forward(params, input_chars):
    B, T = input_chars.shape
    H = params["w_hh_l0"].shape[1]
    emb = jnp.take(params["embed"], input_chars, axis=0)

    def cell(x, h, c, wih, whh, bih, bhh):
        gates = (jnp.dot(x, wih.T, precision=_HI) + bih
                 + jnp.dot(h, whh.T, precision=_HI) + bhh)
        i, f, g, o = jnp.split(gates, 4, axis=-1)
        c_new = jax.nn.sigmoid(f) * c + jax.nn.sigmoid(i) * jnp.tanh(g)
        h_new = jax.nn.sigmoid(o) * jnp.tanh(c_new)
        return h_new, c_new

    h0 = jnp.zeros((B, H), jnp.float32); c0 = jnp.zeros((B, H), jnp.float32)
    h1 = jnp.zeros((B, H), jnp.float32); c1 = jnp.zeros((B, H), jnp.float32)
    outs = []
    for t in range(T):
        x = emb[:, t, :]
        h0, c0 = cell(x, h0, c0, params["w_ih_l0"], params["w_hh_l0"],
                      params["b_ih_l0"], params["b_hh_l0"])
        h1, c1 = cell(h0, h1, c1, params["w_ih_l1"], params["w_hh_l1"],
                      params["b_ih_l1"], params["b_hh_l1"])
        outs.append(h1)
    out = jnp.stack(outs, axis=1)                                   # (B, T, H)
    s = jnp.tanh(jnp.dot(out, params["w_sq"].T, precision=_HI) + params["b_sq"])
    logits = jnp.dot(s, params["w_out"].T, precision=_HI) + params["b_out"]
    log_probs = jax.nn.log_softmax(logits, axis=-1)
    return log_probs, (jnp.stack([h0, h1]), jnp.stack([c0, c1]))


if __name__ == "__main__":
    key = jax.random.PRNGKey(0)
    pkey, dkey = jax.random.split(key)
    params = init_params(pkey)

    B, T = 2, 8
    input_chars = jax.random.randint(dkey, (B, T), 0, CHAR_COUNT, dtype=jnp.int32)

    log_probs, (h_n, c_n) = text_rnn_forward(params, input_chars)
    jax.block_until_ready((log_probs, h_n, c_n))

    ref_lp, (ref_h, ref_c) = reference_forward(params, input_chars)
    assert log_probs.shape == (B, T, CHAR_COUNT)
    assert h_n.shape == (2, B, HID) and c_n.shape == (2, B, HID)
    # Kernel uses single-pass bf16 MXU matmuls (f32 accumulate); reference is
    # f32 HIGHEST, so allow a slightly looser tolerance.
    assert float(jnp.max(jnp.abs(log_probs - ref_lp))) < 1e-2
    assert float(jnp.max(jnp.abs(h_n - ref_h))) < 1e-2
    assert float(jnp.max(jnp.abs(c_n - ref_c))) < 1e-2

    print("KERNEL_OK")
</pallas_src>

<mosaic_0001>
module attributes {stable_mosaic.version = 11 : i64} {
  func.func @_text_rnn_kernel(%arg0: i32, %arg1: memref<64x1xi32, #tpu.memory_space<vmem>>, %arg2: memref<128x512xbf16, #tpu.memory_space<vmem>>, %arg3: memref<1x512xf32, #tpu.memory_space<vmem>>, %arg4: memref<128x512xbf16, #tpu.memory_space<vmem>>, %arg5: memref<128x512xbf16, #tpu.memory_space<vmem>>, %arg6: memref<128x512xbf16, #tpu.memory_space<vmem>>, %arg7: memref<1x512xf32, #tpu.memory_space<vmem>>, %arg8: memref<128x384xbf16, #tpu.memory_space<vmem>>, %arg9: memref<1x384xf32, #tpu.memory_space<vmem>>, %arg10: memref<384x128xbf16, #tpu.memory_space<vmem>>, %arg11: memref<1x128xf32, #tpu.memory_space<vmem>>, %arg12: memref<64x128xf32, #tpu.memory_space<vmem>>, %arg13: memref<2x8x128xf32, #tpu.memory_space<vmem>>, %arg14: memref<2x8x128xf32, #tpu.memory_space<vmem>>, %arg15: memref<64x512xf32, #tpu.memory_space<vmem>>, %arg16: memref<64x128xf32, #tpu.memory_space<vmem>>, %arg17: memref<8x128xf32, #tpu.memory_space<vmem>>, %arg18: memref<8x128xf32, #tpu.memory_space<vmem>>, %arg19: memref<8x128xf32, #tpu.memory_space<vmem>>, %arg20: memref<8x128xf32, #tpu.memory_space<vmem>>) attributes {dimension_semantics = [#tpu.dimension_semantics<arbitrary>], iteration_bounds = array<i64: 1>, scalar_prefetch = 0 : i64, scratch_operands = 6 : i64, tpu.core_type = #tpu.core_type<tc>, window_params = [{transform_indices = @transform_0, window_bounds = array<i64: 64, 1>}, {pipeline_mode = #tpu.pipeline_mode<synchronous>, transform_indices = @transform_1, window_bounds = array<i64: 128, 512>}, {pipeline_mode = #tpu.pipeline_mode<synchronous>, transform_indices = @transform_2, window_bounds = array<i64: 1, 512>}, {pipeline_mode = #tpu.pipeline_mode<synchronous>, transform_indices = @transform_3, window_bounds = array<i64: 128, 512>}, {pipeline_mode = #tpu.pipeline_mode<synchronous>, transform_indices = @transform_4, window_bounds = array<i64: 128, 512>}, {pipeline_mode = #tpu.pipeline_mode<synchronous>, transform_indices = @transform_5, window_bounds = array<i64: 128, 512>}, {pipeline_mode = #tpu.pipeline_mode<synchronous>, transform_indices = @transform_6, window_bounds = array<i64: 1, 512>}, {pipeline_mode = #tpu.pipeline_mode<synchronous>, transform_indices = @transform_7, window_bounds = array<i64: 128, 384>}, {pipeline_mode = #tpu.pipeline_mode<synchronous>, transform_indices = @transform_8, window_bounds = array<i64: 1, 384>}, {pipeline_mode = #tpu.pipeline_mode<synchronous>, transform_indices = @transform_9, window_bounds = array<i64: 384, 128>}, {pipeline_mode = #tpu.pipeline_mode<synchronous>, transform_indices = @transform_10, window_bounds = array<i64: 1, 128>}, {transform_indices = @transform_11, window_bounds = array<i64: 64, 128>}, {pipeline_mode = #tpu.pipeline_mode<synchronous>, transform_indices = @transform_12, window_bounds = array<i64: 2, 8, 128>}, {pipeline_mode = #tpu.pipeline_mode<synchronous>, transform_indices = @transform_13, window_bounds = array<i64: 2, 8, 128>}]} {
    %c0_i32 = arith.constant 0 : i32
    %0 = arith.cmpi eq, %arg0, %c0_i32 : i32
    %1 = arith.extui %0 : i1 to i32
    %c0_i32_0 = arith.constant 0 : i32
    %2 = arith.cmpi ne, %1, %c0_i32_0 : i32
    scf.if %2 {
      %cst_147 = arith.constant 0.000000e+00 : f32
      %584 = vector.broadcast %cst_147 : f32 to vector<8x128xf32>
      %c0_148 = arith.constant 0 : index
      %c0_149 = arith.constant 0 : index
      %585 = vector.load %arg17[%c0_148, %c0_149] : memref<8x128xf32, #tpu.memory_space<vmem>>, vector<8x128xf32>
      tpu.vector_store %arg17[%c0_148, %c0_149], %584 {strides = array<i32>} : memref<8x128xf32, #tpu.memory_space<vmem>>, vector<8x128xf32>,
      %cst_150 = arith.constant 0.000000e+00 : f32
      %586 = vector.broadcast %cst_150 : f32 to vector<8x128xf32>
      %c0_151 = arith.constant 0 : index
      %c0_152 = arith.constant 0 : index
      %587 = vector.load %arg18[%c0_151, %c0_152] : memref<8x128xf32, #tpu.memory_space<vmem>>, vector<8x128xf32>
      tpu.vector_store %arg18[%c0_151, %c0_152], %586 {strides = array<i32>} : memref<8x128xf32, #tpu.memory_space<vmem>>, vector<8x128xf32>,
      %cst_153 = arith.constant 0.000000e+00 : f32
      %588 = vector.broadcast %cst_153 : f32 to vector<8x128xf32>
      %c0_154 = arith.constant 0 : index
      %c0_155 = arith.constant 0 : index
      %589 = vector.load %arg19[%c0_154, %c0_155] : memref<8x128xf32, #tpu.memory_space<vmem>>, vector<8x128xf32>
      tpu.vector_store %arg19[%c0_154, %c0_155], %588 {strides = array<i32>} : memref<8x128xf32, #tpu.memory_space<vmem>>, vector<8x128xf32>,
      %cst_156 = arith.constant 0.000000e+00 : f32
      %590 = vector.broadcast %cst_156 : f32 to vector<8x128xf32>
      %c0_157 = arith.constant 0 : index
      %c0_158 = arith.constant 0 : index
      %591 = vector.load %arg20[%c0_157, %c0_158] : memref<8x128xf32, #tpu.memory_space<vmem>>, vector<8x128xf32>
      tpu.vector_store %arg20[%c0_157, %c0_158], %590 {strides = array<i32>} : memref<8x128xf32, #tpu.memory_space<vmem>>, vector<8x128xf32>,
    } else {
    }
    %c0 = arith.constant 0 : index
    %c0_1 = arith.constant 0 : index
    %3 = vector.load %arg1[%c0, %c0_1] : memref<64x1xi32, #tpu.memory_space<vmem>>, vector<64x1xi32>
    %4 = tpu.iota {dimensions = array<i32: 1>} : vector<64x128xi32>
    %5 = vector.broadcast %3 : vector<64x1xi32> to vector<64x128xi32>
    %6 = arith.cmpi eq, %5, %4 : vector<64x128xi32>
    %7 = arith.extui %6 : vector<64x128xi1> to vector<64x128xi32>
    %8 = arith.sitofp %7 : vector<64x128xi32> to vector<64x128xf32>
    %9 = arith.truncf %8 : vector<64x128xf32> to vector<64x128xbf16>
    %c0_2 = arith.constant 0 : index
    %c0_3 = arith.constant 0 : index
    %10 = vector.load %arg2[%c0_2, %c0_3] : memref<128x512xbf16, #tpu.memory_space<vmem>>, vector<128x512xbf16>
    %cst = arith.constant dense<0.000000e+00> : vector<64x512xf32>
    %11 = tpu.matmul %9, %10, %cst {dimension_numbers = #tpu.dot_dimension_numbers<[1], [0], [0], [1], [0, 0, 1, 1], [], []>} : vector<64x128xbf16>, vector<128x512xbf16>, vector<64x512xf32> -> vector<64x512xf32>
    %c0_4 = arith.constant 0 : index
    %c0_5 = arith.constant 0 : index
    %12 = vector.load %arg3[%c0_4, %c0_5] : memref<1x512xf32, #tpu.memory_space<vmem>>, vector<1x512xf32>
    %13 = vector.broadcast %12 : vector<1x512xf32> to vector<64x512xf32>
    %14 = arith.addf %11, %13 : vector<64x512xf32>
    %c0_6 = arith.constant 0 : index
    %c0_7 = arith.constant 0 : index
    %15 = vector.load %arg15[%c0_6, %c0_7] : memref<64x512xf32, #tpu.memory_space<vmem>>, vector<64x512xf32>
    tpu.vector_store %arg15[%c0_6, %c0_7], %14 {strides = array<i32>} : memref<64x512xf32, #tpu.memory_space<vmem>>, vector<64x512xf32>,
    %c0_8 = arith.constant 0 : index
    %c0_9 = arith.constant 0 : index
    %16 = vector.load %arg4[%c0_8, %c0_9] : memref<128x512xbf16, #tpu.memory_space<vmem>>, vector<128x512xbf16>
    %c0_10 = arith.constant 0 : index
    %c0_11 = arith.constant 0 : index
    %17 = vector.load %arg5[%c0_10, %c0_11] : memref<128x512xbf16, #tpu.memory_space<vmem>>, vector<128x512xbf16>
    %c0_12 = arith.constant 0 : index
    %c0_13 = arith.constant 0 : index
    %18 = vector.load %arg6[%c0_12, %c0_13] : memref<128x512xbf16, #tpu.memory_space<vmem>>, vector<128x512xbf16>
    %c0_14 = arith.constant 0 : index
    %c0_15 = arith.constant 0 : index
    %19 = vector.load %arg7[%c0_14, %c0_15] : memref<1x512xf32, #tpu.memory_space<vmem>>, vector<1x512xf32>
    %c0_16 = arith.constant 0 : index
    %c0_17 = arith.constant 0 : index
    %20 = vector.load %arg17[%c0_16, %c0_17] : memref<8x128xf32, #tpu.memory_space<vmem>>, vector<8x128xf32>
    %c0_18 = arith.constant 0 : index
    %c0_19 = arith.constant 0 : index
    %21 = vector.load %arg18[%c0_18, %c0_19] : memref<8x128xf32, #tpu.memory_space<vmem>>, vector<8x128xf32>
    %c0_20 = arith.constant 0 : index
    %c0_21 = arith.constant 0 : index
    %22 = vector.load %arg19[%c0_20, %c0_21] : memref<8x128xf32, #tpu.memory_space<vmem>>, vector<8x128xf32>
    %c0_22 = arith.constant 0 : index
    %c0_23 = arith.constant 0 : index
    %23 = vector.load %arg20[%c0_22, %c0_23] : memref<8x128xf32, #tpu.memory_space<vmem>>, vector<8x128xf32>
    %c0_i32_24 = arith.constant 0 : i32
    %c8_i32 = arith.constant 8 : i32
    %24 = arith.muli %c0_i32_24, %c8_i32 : i32
    %25 = tpu.assume_multiple %24, 8 : i32
    %26 = arith.truncf %22 : vector<8x128xf32> to vector<8x128xbf16>
    %cst_25 = arith.constant dense<0.000000e+00> : vector<8x512xf32>
    %27 = tpu.matmul %26, %18, %cst_25 {dimension_numbers = #tpu.dot_dimension_numbers<[1], [0], [0], [1], [0, 0, 1, 1], [], []>} : vector<8x128xbf16>, vector<128x512xbf16>, vector<8x512xf32> -> vector<8x512xf32>
    %28 = vector.broadcast %19 : vector<1x512xf32> to vector<8x512xf32>
    %29 = arith.addf %27, %28 : vector<8x512xf32>
    %30 = arith.index_cast %25 : i32 to index
    %c0_26 = arith.constant 0 : index
    %31 = vector.load %arg15[%30, %c0_26] : memref<64x512xf32, #tpu.memory_space<vmem>>, vector<8x512xf32>
    %32 = arith.truncf %20 : vector<8x128xf32> to vector<8x128xbf16>
    %cst_27 = arith.constant dense<0.000000e+00> : vector<8x512xf32>
    %33 = tpu.matmul %32, %16, %cst_27 {dimension_numbers = #tpu.dot_dimension_numbers<[1], [0], [0], [1], [0, 0, 1, 1], [], []>} : vector<8x128xbf16>, vector<128x512xbf16>, vector<8x512xf32> -> vector<8x512xf32>
    %34 = arith.addf %31, %33 : vector<8x512xf32>
    %35 = vector.extract_strided_slice %34 {offsets = [0, 0], sizes = [8, 128], strides = [1, 1]} : vector<8x512xf32> to vector<8x128xf32>
    %36 = arith.negf %35 : vector<8x128xf32>
    %37 = math.exp %36 : vector<8x128xf32>
    %cst_28 = arith.constant 1.000000e+00 : f32
    %38 = vector.broadcast %cst_28 : f32 to vector<8x128xf32>
    %39 = arith.addf %38, %37 : vector<8x128xf32>
    %40 = arith.divf %38, %39 : vector<8x128xf32>
    %41 = vector.extract_strided_slice %34 {offsets = [0, 128], sizes = [8, 128], strides = [1, 1]} : vector<8x512xf32> to vector<8x128xf32>
    %42 = arith.negf %41 : vector<8x128xf32>
    %43 = math.exp %42 : vector<8x128xf32>
    %cst_29 = arith.constant 1.000000e+00 : f32
    %44 = vector.broadcast %cst_29 : f32 to vector<8x128xf32>
    %45 = arith.addf %44, %43 : vector<8x128xf32>
    %46 = arith.divf %44, %45 : vector<8x128xf32>
    %47 = vector.extract_strided_slice %34 {offsets = [0, 256], sizes = [8, 128], strides = [1, 1]} : vector<8x512xf32> to vector<8x128xf32>
    %48 = math.tanh %47 : vector<8x128xf32>
    %49 = vector.extract_strided_slice %34 {offsets = [0, 384], sizes = [8, 128], strides = [1, 1]} : vector<8x512xf32> to vector<8x128xf32>
    %50 = arith.negf %49 : vector<8x128xf32>
    %51 = math.exp %50 : vector<8x128xf32>
    %cst_30 = arith.constant 1.000000e+00 : f32
    %52 = vector.broadcast %cst_30 : f32 to vector<8x128xf32>
    %53 = arith.addf %52, %51 : vector<8x128xf32>
    %54 = arith.divf %52, %53 : vector<8x128xf32>
    %55 = arith.mulf %46, %21 : vector<8x128xf32>
    %56 = arith.mulf %40, %48 : vector<8x128xf32>
    %57 = arith.addf %55, %56 : vector<8x128xf32>
    %58 = math.tanh %57 : vector<8x128xf32>
    %59 = arith.mulf %54, %58 : vector<8x128xf32>
    %60 = arith.truncf %59 : vector<8x128xf32> to vector<8x128xbf16>
    %cst_31 = arith.constant dense<0.000000e+00> : vector<8x512xf32>
    %61 = tpu.matmul %60, %17, %cst_31 {dimension_numbers = #tpu.dot_dimension_numbers<[1], [0], [0], [1], [0, 0, 1, 1], [], []>} : vector<8x128xbf16>, vector<128x512xbf16>, vector<8x512xf32> -> vector<8x512xf32>
    %62 = arith.addf %29, %61 : vector<8x512xf32>
    %63 = vector.extract_strided_slice %62 {offsets = [0, 0], sizes = [8, 128], strides = [1, 1]} : vector<8x512xf32> to vector<8x128xf32>
    %64 = arith.negf %63 : vector<8x128xf32>
    %65 = math.exp %64 : vector<8x128xf32>
    %cst_32 = arith.constant 1.000000e+00 : f32
    %66 = vector.broadcast %cst_32 : f32 to vector<8x128xf32>
    %67 = arith.addf %66, %65 : vector<8x128xf32>
    %68 = arith.divf %66, %67 : vector<8x128xf32>
    %69 = vector.extract_strided_slice %62 {offsets = [0, 128], sizes = [8, 128], strides = [1, 1]} : vector<8x512xf32> to vector<8x128xf32>
    %70 = arith.negf %69 : vector<8x128xf32>
    %71 = math.exp %70 : vector<8x128xf32>
    %cst_33 = arith.constant 1.000000e+00 : f32
    %72 = vector.broadcast %cst_33 : f32 to vector<8x128xf32>
    %73 = arith.addf %72, %71 : vector<8x128xf32>
    %74 = arith.divf %72, %73 : vector<8x128xf32>
    %75 = vector.extract_strided_slice %62 {offsets = [0, 256], sizes = [8, 128], strides = [1, 1]} : vector<8x512xf32> to vector<8x128xf32>
    %76 = math.tanh %75 : vector<8x128xf32>
    %77 = vector.extract_strided_slice %62 {offsets = [0, 384], sizes = [8, 128], strides = [1, 1]} : vector<8x512xf32> to vector<8x128xf32>
    %78 = arith.negf %77 : vector<8x128xf32>
    %79 = math.exp %78 : vector<8x128xf32>
    %cst_34 = arith.constant 1.000000e+00 : f32
    %80 = vector.broadcast %cst_34 : f32 to vector<8x128xf32>
    %81 = arith.addf %80, %79 : vector<8x128xf32>
    %82 = arith.divf %80, %81 : vector<8x128xf32>
    %83 = arith.mulf %74, %23 : vector<8x128xf32>
    %84 = arith.mulf %68, %76 : vector<8x128xf32>
    %85 = arith.addf %83, %84 : vector<8x128xf32>
    %86 = math.tanh %85 : vector<8x128xf32>
    %87 = arith.mulf %82, %86 : vector<8x128xf32>
    %88 = arith.index_cast %25 : i32 to index
    %c0_35 = arith.constant 0 : index
    %89 = vector.load %arg16[%88, %c0_35] : memref<64x128xf32, #tpu.memory_space<vmem>>, vector<8x128xf32>
    tpu.vector_store %arg16[%88, %c0_35], %87 {strides = array<i32>} : memref<64x128xf32, #tpu.memory_space<vmem>>, vector<8x128xf32>,
    %c1_i32 = arith.constant 1 : i32
    %c8_i32_36 = arith.constant 8 : i32
    %90 = arith.muli %c1_i32, %c8_i32_36 : i32
    %91 = tpu.assume_multiple %90, 8 : i32
    %92 = arith.truncf %87 : vector<8x128xf32> to vector<8x128xbf16>
    %cst_37 = arith.constant dense<0.000000e+00> : vector<8x512xf32>
    %93 = tpu.matmul %92, %18, %cst_37 {dimension_numbers = #tpu.dot_dimension_numbers<[1], [0], [0], [1], [0, 0, 1, 1], [], []>} : vector<8x128xbf16>, vector<128x512xbf16>, vector<8x512xf32> -> vector<8x512xf32>
    %94 = vector.broadcast %19 : vector<1x512xf32> to vector<8x512xf32>
    %95 = arith.addf %93, %94 : vector<8x512xf32>
    %96 = arith.index_cast %91 : i32 to index
    %c0_38 = arith.constant 0 : index
    %97 = vector.load %arg15[%96, %c0_38] : memref<64x512xf32, #tpu.memory_space<vmem>>, vector<8x512xf32>
    %98 = arith.truncf %59 : vector<8x128xf32> to vector<8x128xbf16>
    %cst_39 = arith.constant dense<0.000000e+00> : vector<8x512xf32>
    %99 = tpu.matmul %98, %16, %cst_39 {dimension_numbers = #tpu.dot_dimension_numbers<[1], [0], [0], [1], [0, 0, 1, 1], [], []>} : vector<8x128xbf16>, vector<128x512xbf16>, vector<8x512xf32> -> vector<8x512xf32>
    %100 = arith.addf %97, %99 : vector<8x512xf32>
    %101 = vector.extract_strided_slice %100 {offsets = [0, 0], sizes = [8, 128], strides = [1, 1]} : vector<8x512xf32> to vector<8x128xf32>
    %102 = arith.negf %101 : vector<8x128xf32>
    %103 = math.exp %102 : vector<8x128xf32>
    %cst_40 = arith.constant 1.000000e+00 : f32
    %104 = vector.broadcast %cst_40 : f32 to vector<8x128xf32>
    %105 = arith.addf %104, %103 : vector<8x128xf32>
    %106 = arith.divf %104, %105 : vector<8x128xf32>
    %107 = vector.extract_strided_slice %100 {offsets = [0, 128], sizes = [8, 128], strides = [1, 1]} : vector<8x512xf32> to vector<8x128xf32>
    %108 = arith.negf %107 : vector<8x128xf32>
    %109 = math.exp %108 : vector<8x128xf32>
    %cst_41 = arith.constant 1.000000e+00 : f32
    %110 = vector.broadcast %cst_41 : f32 to vector<8x128xf32>
    %111 = arith.addf %110, %109 : vector<8x128xf32>
    %112 = arith.divf %110, %111 : vector<8x128xf32>
    %113 = vector.extract_strided_slice %100 {offsets = [0, 256], sizes = [8, 128], strides = [1, 1]} : vector<8x512xf32> to vector<8x128xf32>
    %114 = math.tanh %113 : vector<8x128xf32>
    %115 = vector.extract_strided_slice %100 {offsets = [0, 384], sizes = [8, 128], strides = [1, 1]} : vector<8x512xf32> to vector<8x128xf32>
    %116 = arith.negf %115 : vector<8x128xf32>
    %117 = math.exp %116 : vector<8x128xf32>
    %cst_42 = arith.constant 1.000000e+00 : f32
    %118 = vector.broadcast %cst_42 : f32 to vector<8x128xf32>
    %119 = arith.addf %118, %117 : vector<8x128xf32>
    %120 = arith.divf %118, %119 : vector<8x128xf32>
    %121 = arith.mulf %112, %57 : vector<8x128xf32>
    %122 = arith.mulf %106, %114 : vector<8x128xf32>
    %123 = arith.addf %121, %122 : vector<8x128xf32>
    %124 = math.tanh %123 : vector<8x128xf32>
    %125 = arith.mulf %120, %124 : vector<8x128xf32>
    %126 = arith.truncf %125 : vector<8x128xf32> to vector<8x128xbf16>
    %cst_43 = arith.constant dense<0.000000e+00> : vector<8x512xf32>
    %127 = tpu.matmul %126, %17, %cst_43 {dimension_numbers = #tpu.dot_dimension_numbers<[1], [0], [0], [1], [0, 0, 1, 1], [], []>} : vector<8x128xbf16>, vector<128x512xbf16>, vector<8x512xf32> -> vector<8x512xf32>
    %128 = arith.addf %95, %127 : vector<8x512xf32>
    %129 = vector.extract_strided_slice %128 {offsets = [0, 0], sizes = [8, 128], strides = [1, 1]} : vector<8x512xf32> to vector<8x128xf32>
    %130 = arith.negf %129 : vector<8x128xf32>
    %131 = math.exp %130 : vector<8x128xf32>
    %cst_44 = arith.constant 1.000000e+00 : f32
    %132 = vector.broadcast %cst_44 : f32 to vector<8x128xf32>
    %133 = arith.addf %132, %131 : vector<8x128xf32>
    %134 = arith.divf %132, %133 : vector<8x128xf32>
    %135 = vector.extract_strided_slice %128 {offsets = [0, 128], sizes = [8, 128], strides = [1, 1]} : vector<8x512xf32> to vector<8x128xf32>
    %136 = arith.negf %135 : vector<8x128xf32>
    %137 = math.exp %136 : vector<8x128xf32>
    %cst_45 = arith.constant 1.000000e+00 : f32
    %138 = vector.broadcast %cst_45 : f32 to vector<8x128xf32>
    %139 = arith.addf %138, %137 : vector<8x128xf32>
    %140 = arith.divf %138, %139 : vector<8x128xf32>
    %141 = vector.extract_strided_slice %128 {offsets = [0, 256], sizes = [8, 128], strides = [1, 1]} : vector<8x512xf32> to vector<8x128xf32>
    %142 = math.tanh %141 : vector<8x128xf32>
    %143 = vector.extract_strided_slice %128 {offsets = [0, 384], sizes = [8, 128], strides = [1, 1]} : vector<8x512xf32> to vector<8x128xf32>
    %144 = arith.negf %143 : vector<8x128xf32>
    %145 = math.exp %144 : vector<8x128xf32>
    %cst_46 = arith.constant 1.000000e+00 : f32
    %146 = vector.broadcast %cst_46 : f32 to vector<8x128xf32>
    %147 = arith.addf %146, %145 : vector<8x128xf32>
    %148 = arith.divf %146, %147 : vector<8x128xf32>
    %149 = arith.mulf %140, %85 : vector<8x128xf32>
    %150 = arith.mulf %134, %142 : vector<8x128xf32>
    %151 = arith.addf %149, %150 : vector<8x128xf32>
    %152 = math.tanh %151 : vector<8x128xf32>
    %153 = arith.mulf %148, %152 : vector<8x128xf32>
    %154 = arith.index_cast %91 : i32 to index
    %c0_47 = arith.constant 0 : index
    %155 = vector.load %arg16[%154, %c0_47] : memref<64x128xf32, #tpu.memory_space<vmem>>, vector<8x128xf32>
    tpu.vector_store %arg16[%154, %c0_47], %153 {strides = array<i32>} : memref<64x128xf32, #tpu.memory_space<vmem>>, vector<8x128xf32>,
    %c2_i32 = arith.constant 2 : i32
    %c8_i32_48 = arith.constant 8 : i32
    %156 = arith.muli %c2_i32, %c8_i32_48 : i32
    %157 = tpu.assume_multiple %156, 8 : i32
    %158 = arith.truncf %153 : vector<8x128xf32> to vector<8x128xbf16>
    %cst_49 = arith.constant dense<0.000000e+00> : vector<8x512xf32>
    %159 = tpu.matmul %158, %18, %cst_49 {dimension_numbers = #tpu.dot_dimension_numbers<[1], [0], [0], [1], [0, 0, 1, 1], [], []>} : vector<8x128xbf16>, vector<128x512xbf16>, vector<8x512xf32> -> vector<8x512xf32>
    %160 = vector.broadcast %19 : vector<1x512xf32> to vector<8x512xf32>
    %161 = arith.addf %159, %160 : vector<8x512xf32>
    %162 = arith.index_cast %157 : i32 to index
    %c0_50 = arith.constant 0 : index
    %163 = vector.load %arg15[%162, %c0_50] : memref<64x512xf32, #tpu.memory_space<vmem>>, vector<8x512xf32>
    %164 = arith.truncf %125 : vector<8x128xf32> to vector<8x128xbf16>
    %cst_51 = arith.constant dense<0.000000e+00> : vector<8x512xf32>
    %165 = tpu.matmul %164, %16, %cst_51 {dimension_numbers = #tpu.dot_dimension_numbers<[1], [0], [0], [1], [0, 0, 1, 1], [], []>} : vector<8x128xbf16>, vector<128x512xbf16>, vector<8x512xf32> -> vector<8x512xf32>
    %166 = arith.addf %163, %165 : vector<8x512xf32>
    %167 = vector.extract_strided_slice %166 {offsets = [0, 0], sizes = [8, 128], strides = [1, 1]} : vector<8x512xf32> to vector<8x128xf32>
    %168 = arith.negf %167 : vector<8x128xf32>
    %169 = math.exp %168 : vector<8x128xf32>
    %cst_52 = arith.constant 1.000000e+00 : f32
    %170 = vector.broadcast %cst_52 : f32 to vector<8x128xf32>
    %171 = arith.addf %170, %169 : vector<8x128xf32>
    %172 = arith.divf %170, %171 : vector<8x128xf32>
    %173 = vector.extract_strided_slice %166 {offsets = [0, 128], sizes = [8, 128], strides = [1, 1]} : vector<8x512xf32> to vector<8x128xf32>
    %174 = arith.negf %173 : vector<8x128xf32>
    %175 = math.exp %174 : vector<8x128xf32>
    %cst_53 = arith.constant 1.000000e+00 : f32
    %176 = vector.broadcast %cst_53 : f32 to vector<8x128xf32>
    %177 = arith.addf %176, %175 : vector<8x128xf32>
    %178 = arith.divf %176, %177 : vector<8x128xf32>
    %179 = vector.extract_strided_slice %166 {offsets = [0, 256], sizes = [8, 128], strides = [1, 1]} : vector<8x512xf32> to vector<8x128xf32>
    %180 = math.tanh %179 : vector<8x128xf32>
    %181 = vector.extract_strided_slice %166 {offsets = [0, 384], sizes = [8, 128], strides = [1, 1]} : vector<8x512xf32> to vector<8x128xf32>
    %182 = arith.negf %181 : vector<8x128xf32>
    %183 = math.exp %182 : vector<8x128xf32>
    %cst_54 = arith.constant 1.000000e+00 : f32
    %184 = vector.broadcast %cst_54 : f32 to vector<8x128xf32>
    %185 = arith.addf %184, %183 : vector<8x128xf32>
    %186 = arith.divf %184, %185 : vector<8x128xf32>
    %187 = arith.mulf %178, %123 : vector<8x128xf32>
    %188 = arith.mulf %172, %180 : vector<8x128xf32>
    %189 = arith.addf %187, %188 : vector<8x128xf32>
    %190 = math.tanh %189 : vector<8x128xf32>
    %191 = arith.mulf %186, %190 : vector<8x128xf32>
    %192 = arith.truncf %191 : vector<8x128xf32> to vector<8x128xbf16>
    %cst_55 = arith.constant dense<0.000000e+00> : vector<8x512xf32>
    %193 = tpu.matmul %192, %17, %cst_55 {dimension_numbers = #tpu.dot_dimension_numbers<[1], [0], [0], [1], [0, 0, 1, 1], [], []>} : vector<8x128xbf16>, vector<128x512xbf16>, vector<8x512xf32> -> vector<8x512xf32>
    %194 = arith.addf %161, %193 : vector<8x512xf32>
    %195 = vector.extract_strided_slice %194 {offsets = [0, 0], sizes = [8, 128], strides = [1, 1]} : vector<8x512xf32> to vector<8x128xf32>
    %196 = arith.negf %195 : vector<8x128xf32>
    %197 = math.exp %196 : vector<8x128xf32>
    %cst_56 = arith.constant 1.000000e+00 : f32
    %198 = vector.broadcast %cst_56 : f32 to vector<8x128xf32>
    %199 = arith.addf %198, %197 : vector<8x128xf32>
    %200 = arith.divf %198, %199 : vector<8x128xf32>
    %201 = vector.extract_strided_slice %194 {offsets = [0, 128], sizes = [8, 128], strides = [1, 1]} : vector<8x512xf32> to vector<8x128xf32>
    %202 = arith.negf %201 : vector<8x128xf32>
    %203 = math.exp %202 : vector<8x128xf32>
    %cst_57 = arith.constant 1.000000e+00 : f32
    %204 = vector.broadcast %cst_57 : f32 to vector<8x128xf32>
    %205 = arith.addf %204, %203 : vector<8x128xf32>
    %206 = arith.divf %204, %205 : vector<8x128xf32>
    %207 = vector.extract_strided_slice %194 {offsets = [0, 256], sizes = [8, 128], strides = [1, 1]} : vector<8x512xf32> to vector<8x128xf32>
    %208 = math.tanh %207 : vector<8x128xf32>
    %209 = vector.extract_strided_slice %194 {offsets = [0, 384], sizes = [8, 128], strides = [1, 1]} : vector<8x512xf32> to vector<8x128xf32>
    %210 = arith.negf %209 : vector<8x128xf32>
    %211 = math.exp %210 : vector<8x128xf32>
    %cst_58 = arith.constant 1.000000e+00 : f32
    %212 = vector.broadcast %cst_58 : f32 to vector<8x128xf32>
    %213 = arith.addf %212, %211 : vector<8x128xf32>
    %214 = arith.divf %212, %213 : vector<8x128xf32>
    %215 = arith.mulf %206, %151 : vector<8x128xf32>
    %216 = arith.mulf %200, %208 : vector<8x128xf32>
    %217 = arith.addf %215, %216 : vector<8x128xf32>
    %218 = math.tanh %217 : vector<8x128xf32>
    %219 = arith.mulf %214, %218 : vector<8x128xf32>
    %220 = arith.index_cast %157 : i32 to index
    %c0_59 = arith.constant 0 : index
    %221 = vector.load %arg16[%220, %c0_59] : memref<64x128xf32, #tpu.memory_space<vmem>>, vector<8x128xf32>
    tpu.vector_store %arg16[%220, %c0_59], %219 {strides = array<i32>} : memref<64x128xf32, #tpu.memory_space<vmem>>, vector<8x128xf32>,
    %c3_i32 = arith.constant 3 : i32
    %c8_i32_60 = arith.constant 8 : i32
    %222 = arith.muli %c3_i32, %c8_i32_60 : i32
    %223 = tpu.assume_multiple %222, 8 : i32
    %224 = arith.truncf %219 : vector<8x128xf32> to vector<8x128xbf16>
    %cst_61 = arith.constant dense<0.000000e+00> : vector<8x512xf32>
    %225 = tpu.matmul %224, %18, %cst_61 {dimension_numbers = #tpu.dot_dimension_numbers<[1], [0], [0], [1], [0, 0, 1, 1], [], []>} : vector<8x128xbf16>, vector<128x512xbf16>, vector<8x512xf32> -> vector<8x512xf32>
    %226 = vector.broadcast %19 : vector<1x512xf32> to vector<8x512xf32>
    %227 = arith.addf %225, %226 : vector<8x512xf32>
    %228 = arith.index_cast %223 : i32 to index
    %c0_62 = arith.constant 0 : index
    %229 = vector.load %arg15[%228, %c0_62] : memref<64x512xf32, #tpu.memory_space<vmem>>, vector<8x512xf32>
    %230 = arith.truncf %191 : vector<8x128xf32> to vector<8x128xbf16>
    %cst_63 = arith.constant dense<0.000000e+00> : vector<8x512xf32>
    %231 = tpu.matmul %230, %16, %cst_63 {dimension_numbers = #tpu.dot_dimension_numbers<[1], [0], [0], [1], [0, 0, 1, 1], [], []>} : vector<8x128xbf16>, vector<128x512xbf16>, vector<8x512xf32> -> vector<8x512xf32>
    %232 = arith.addf %229, %231 : vector<8x512xf32>
    %233 = vector.extract_strided_slice %232 {offsets = [0, 0], sizes = [8, 128], strides = [1, 1]} : vector<8x512xf32> to vector<8x128xf32>
    %234 = arith.negf %233 : vector<8x128xf32>
    %235 = math.exp %234 : vector<8x128xf32>
    %cst_64 = arith.constant 1.000000e+00 : f32
    %236 = vector.broadcast %cst_64 : f32 to vector<8x128xf32>
    %237 = arith.addf %236, %235 : vector<8x128xf32>
    %238 = arith.divf %236, %237 : vector<8x128xf32>
    %239 = vector.extract_strided_slice %232 {offsets = [0, 128], sizes = [8, 128], strides = [1, 1]} : vector<8x512xf32> to vector<8x128xf32>
    %240 = arith.negf %239 : vector<8x128xf32>
    %241 = math.exp %240 : vector<8x128xf32>
    %cst_65 = arith.constant 1.000000e+00 : f32
    %242 = vector.broadcast %cst_65 : f32 to vector<8x128xf32>
    %243 = arith.addf %242, %241 : vector<8x128xf32>
    %244 = arith.divf %242, %243 : vector<8x128xf32>
    %245 = vector.extract_strided_slice %232 {offsets = [0, 256], sizes = [8, 128], strides = [1, 1]} : vector<8x512xf32> to vector<8x128xf32>
    %246 = math.tanh %245 : vector<8x128xf32>
    %247 = vector.extract_strided_slice %232 {offsets = [0, 384], sizes = [8, 128], strides = [1, 1]} : vector<8x512xf32> to vector<8x128xf32>
    %248 = arith.negf %247 : vector<8x128xf32>
    %249 = math.exp %248 : vector<8x128xf32>
    %cst_66 = arith.constant 1.000000e+00 : f32
    %250 = vector.broadcast %cst_66 : f32 to vector<8x128xf32>
    %251 = arith.addf %250, %249 : vector<8x128xf32>
    %252 = arith.divf %250, %251 : vector<8x128xf32>
    %253 = arith.mulf %244, %189 : vector<8x128xf32>
    %254 = arith.mulf %238, %246 : vector<8x128xf32>
    %255 = arith.addf %253, %254 : vector<8x128xf32>
    %256 = math.tanh %255 : vector<8x128xf32>
    %257 = arith.mulf %252, %256 : vector<8x128xf32>
    %258 = arith.truncf %257 : vector<8x128xf32> to vector<8x128xbf16>
    %cst_67 = arith.constant dense<0.000000e+00> : vector<8x512xf32>
    %259 = tpu.matmul %258, %17, %cst_67 {dimension_numbers = #tpu.dot_dimension_numbers<[1], [0], [0], [1], [0, 0, 1, 1], [], []>} : vector<8x128xbf16>, vector<128x512xbf16>, vector<8x512xf32> -> vector<8x512xf32>
    %260 = arith.addf %227, %259 : vector<8x512xf32>
    %261 = vector.extract_strided_slice %260 {offsets = [0, 0], sizes = [8, 128], strides = [1, 1]} : vector<8x512xf32> to vector<8x128xf32>
    %262 = arith.negf %261 : vector<8x128xf32>
    %263 = math.exp %262 : vector<8x128xf32>
    %cst_68 = arith.constant 1.000000e+00 : f32
    %264 = vector.broadcast %cst_68 : f32 to vector<8x128xf32>
    %265 = arith.addf %264, %263 : vector<8x128xf32>
    %266 = arith.divf %264, %265 : vector<8x128xf32>
    %267 = vector.extract_strided_slice %260 {offsets = [0, 128], sizes = [8, 128], strides = [1, 1]} : vector<8x512xf32> to vector<8x128xf32>
    %268 = arith.negf %267 : vector<8x128xf32>
    %269 = math.exp %268 : vector<8x128xf32>
    %cst_69 = arith.constant 1.000000e+00 : f32
    %270 = vector.broadcast %cst_69 : f32 to vector<8x128xf32>
    %271 = arith.addf %270, %269 : vector<8x128xf32>
    %272 = arith.divf %270, %271 : vector<8x128xf32>
    %273 = vector.extract_strided_slice %260 {offsets = [0, 256], sizes = [8, 128], strides = [1, 1]} : vector<8x512xf32> to vector<8x128xf32>
    %274 = math.tanh %273 : vector<8x128xf32>
    %275 = vector.extract_strided_slice %260 {offsets = [0, 384], sizes = [8, 128], strides = [1, 1]} : vector<8x512xf32> to vector<8x128xf32>
    %276 = arith.negf %275 : vector<8x128xf32>
    %277 = math.exp %276 : vector<8x128xf32>
    %cst_70 = arith.constant 1.000000e+00 : f32
    %278 = vector.broadcast %cst_70 : f32 to vector<8x128xf32>
    %279 = arith.addf %278, %277 : vector<8x128xf32>
    %280 = arith.divf %278, %279 : vector<8x128xf32>
    %281 = arith.mulf %272, %217 : vector<8x128xf32>
    %282 = arith.mulf %266, %274 : vector<8x128xf32>
    %283 = arith.addf %281, %282 : vector<8x128xf32>
    %284 = math.tanh %283 : vector<8x128xf32>
    %285 = arith.mulf %280, %284 : vector<8x128xf32>
    %286 = arith.index_cast %223 : i32 to index
    %c0_71 = arith.constant 0 : index
    %287 = vector.load %arg16[%286, %c0_71] : memref<64x128xf32, #tpu.memory_space<vmem>>, vector<8x128xf32>
    tpu.vector_store %arg16[%286, %c0_71], %285 {strides = array<i32>} : memref<64x128xf32, #tpu.memory_space<vmem>>, vector<8x128xf32>,
    %c4_i32 = arith.constant 4 : i32
    %c8_i32_72 = arith.constant 8 : i32
    %288 = arith.muli %c4_i32, %c8_i32_72 : i32
    %289 = tpu.assume_multiple %288, 8 : i32
    %290 = arith.truncf %285 : vector<8x128xf32> to vector<8x128xbf16>
    %cst_73 = arith.constant dense<0.000000e+00> : vector<8x512xf32>
    %291 = tpu.matmul %290, %18, %cst_73 {dimension_numbers = #tpu.dot_dimension_numbers<[1], [0], [0], [1], [0, 0, 1, 1], [], []>} : vector<8x128xbf16>, vector<128x512xbf16>, vector<8x512xf32> -> vector<8x512xf32>
    %292 = vector.broadcast %19 : vector<1x512xf32> to vector<8x512xf32>
    %293 = arith.addf %291, %292 : vector<8x512xf32>
    %294 = arith.index_cast %289 : i32 to index
    %c0_74 = arith.constant 0 : index
    %295 = vector.load %arg15[%294, %c0_74] : memref<64x512xf32, #tpu.memory_space<vmem>>, vector<8x512xf32>
    %296 = arith.truncf %257 : vector<8x128xf32> to vector<8x128xbf16>
    %cst_75 = arith.constant dense<0.000000e+00> : vector<8x512xf32>
    %297 = tpu.matmul %296, %16, %cst_75 {dimension_numbers = #tpu.dot_dimension_numbers<[1], [0], [0], [1], [0, 0, 1, 1], [], []>} : vector<8x128xbf16>, vector<128x512xbf16>, vector<8x512xf32> -> vector<8x512xf32>
    %298 = arith.addf %295, %297 : vector<8x512xf32>
    %299 = vector.extract_strided_slice %298 {offsets = [0, 0], sizes = [8, 128], strides = [1, 1]} : vector<8x512xf32> to vector<8x128xf32>
    %300 = arith.negf %299 : vector<8x128xf32>
    %301 = math.exp %300 : vector<8x128xf32>
    %cst_76 = arith.constant 1.000000e+00 : f32
    %302 = vector.broadcast %cst_76 : f32 to vector<8x128xf32>
    %303 = arith.addf %302, %301 : vector<8x128xf32>
    %304 = arith.divf %302, %303 : vector<8x128xf32>
    %305 = vector.extract_strided_slice %298 {offsets = [0, 128], sizes = [8, 128], strides = [1, 1]} : vector<8x512xf32> to vector<8x128xf32>
    %306 = arith.negf %305 : vector<8x128xf32>
    %307 = math.exp %306 : vector<8x128xf32>
    %cst_77 = arith.constant 1.000000e+00 : f32
    %308 = vector.broadcast %cst_77 : f32 to vector<8x128xf32>
    %309 = arith.addf %308, %307 : vector<8x128xf32>
    %310 = arith.divf %308, %309 : vector<8x128xf32>
    %311 = vector.extract_strided_slice %298 {offsets = [0, 256], sizes = [8, 128], strides = [1, 1]} : vector<8x512xf32> to vector<8x128xf32>
    %312 = math.tanh %311 : vector<8x128xf32>
    %313 = vector.extract_strided_slice %298 {offsets = [0, 384], sizes = [8, 128], strides = [1, 1]} : vector<8x512xf32> to vector<8x128xf32>
    %314 = arith.negf %313 : vector<8x128xf32>
    %315 = math.exp %314 : vector<8x128xf32>
    %cst_78 = arith.constant 1.000000e+00 : f32
    %316 = vector.broadcast %cst_78 : f32 to vector<8x128xf32>
    %317 = arith.addf %316, %315 : vector<8x128xf32>
    %318 = arith.divf %316, %317 : vector<8x128xf32>
    %319 = arith.mulf %310, %255 : vector<8x128xf32>
    %320 = arith.mulf %304, %312 : vector<8x128xf32>
    %321 = arith.addf %319, %320 : vector<8x128xf32>
    %322 = math.tanh %321 : vector<8x128xf32>
    %323 = arith.mulf %318, %322 : vector<8x128xf32>
    %324 = arith.truncf %323 : vector<8x128xf32> to vector<8x128xbf16>
    %cst_79 = arith.constant dense<0.000000e+00> : vector<8x512xf32>
    %325 = tpu.matmul %324, %17, %cst_79 {dimension_numbers = #tpu.dot_dimension_numbers<[1], [0], [0], [1], [0, 0, 1, 1], [], []>} : vector<8x128xbf16>, vector<128x512xbf16>, vector<8x512xf32> -> vector<8x512xf32>
    %326 = arith.addf %293, %325 : vector<8x512xf32>
    %327 = vector.extract_strided_slice %326 {offsets = [0, 0], sizes = [8, 128], strides = [1, 1]} : vector<8x512xf32> to vector<8x128xf32>
    %328 = arith.negf %327 : vector<8x128xf32>
    %329 = math.exp %328 : vector<8x128xf32>
    %cst_80 = arith.constant 1.000000e+00 : f32
    %330 = vector.broadcast %cst_80 : f32 to vector<8x128xf32>
    %331 = arith.addf %330, %329 : vector<8x128xf32>
    %332 = arith.divf %330, %331 : vector<8x128xf32>
    %333 = vector.extract_strided_slice %326 {offsets = [0, 128], sizes = [8, 128], strides = [1, 1]} : vector<8x512xf32> to vector<8x128xf32>
    %334 = arith.negf %333 : vector<8x128xf32>
    %335 = math.exp %334 : vector<8x128xf32>
    %cst_81 = arith.constant 1.000000e+00 : f32
    %336 = vector.broadcast %cst_81 : f32 to vector<8x128xf32>
    %337 = arith.addf %336, %335 : vector<8x128xf32>
    %338 = arith.divf %336, %337 : vector<8x128xf32>
    %339 = vector.extract_strided_slice %326 {offsets = [0, 256], sizes = [8, 128], strides = [1, 1]} : vector<8x512xf32> to vector<8x128xf32>
    %340 = math.tanh %339 : vector<8x128xf32>
    %341 = vector.extract_strided_slice %326 {offsets = [0, 384], sizes = [8, 128], strides = [1, 1]} : vector<8x512xf32> to vector<8x128xf32>
    %342 = arith.negf %341 : vector<8x128xf32>
    %343 = math.exp %342 : vector<8x128xf32>
    %cst_82 = arith.constant 1.000000e+00 : f32
    %344 = vector.broadcast %cst_82 : f32 to vector<8x128xf32>
    %345 = arith.addf %344, %343 : vector<8x128xf32>
    %346 = arith.divf %344, %345 : vector<8x128xf32>
    %347 = arith.mulf %338, %283 : vector<8x128xf32>
    %348 = arith.mulf %332, %340 : vector<8x128xf32>
    %349 = arith.addf %347, %348 : vector<8x128xf32>
    %350 = math.tanh %349 : vector<8x128xf32>
    %351 = arith.mulf %346, %350 : vector<8x128xf32>
    %352 = arith.index_cast %289 : i32 to index
    %c0_83 = arith.constant 0 : index
    %353 = vector.load %arg16[%352, %c0_83] : memref<64x128xf32, #tpu.memory_space<vmem>>, vector<8x128xf32>
    tpu.vector_store %arg16[%352, %c0_83], %351 {strides = array<i32>} : memref<64x128xf32, #tpu.memory_space<vmem>>, vector<8x128xf32>,
    %c5_i32 = arith.constant 5 : i32
    %c8_i32_84 = arith.constant 8 : i32
    %354 = arith.muli %c5_i32, %c8_i32_84 : i32
    %355 = tpu.assume_multiple %354, 8 : i32
    %356 = arith.truncf %351 : vector<8x128xf32> to vector<8x128xbf16>
    %cst_85 = arith.constant dense<0.000000e+00> : vector<8x512xf32>
    %357 = tpu.matmul %356, %18, %cst_85 {dimension_numbers = #tpu.dot_dimension_numbers<[1], [0], [0], [1], [0, 0, 1, 1], [], []>} : vector<8x128xbf16>, vector<128x512xbf16>, vector<8x512xf32> -> vector<8x512xf32>
    %358 = vector.broadcast %19 : vector<1x512xf32> to vector<8x512xf32>
    %359 = arith.addf %357, %358 : vector<8x512xf32>
    %360 = arith.index_cast %355 : i32 to index
    %c0_86 = arith.constant 0 : index
    %361 = vector.load %arg15[%360, %c0_86] : memref<64x512xf32, #tpu.memory_space<vmem>>, vector<8x512xf32>
    %362 = arith.truncf %323 : vector<8x128xf32> to vector<8x128xbf16>
    %cst_87 = arith.constant dense<0.000000e+00> : vector<8x512xf32>
    %363 = tpu.matmul %362, %16, %cst_87 {dimension_numbers = #tpu.dot_dimension_numbers<[1], [0], [0], [1], [0, 0, 1, 1], [], []>} : vector<8x128xbf16>, vector<128x512xbf16>, vector<8x512xf32> -> vector<8x512xf32>
    %364 = arith.addf %361, %363 : vector<8x512xf32>
    %365 = vector.extract_strided_slice %364 {offsets = [0, 0], sizes = [8, 128], strides = [1, 1]} : vector<8x512xf32> to vector<8x128xf32>
    %366 = arith.negf %365 : vector<8x128xf32>
    %367 = math.exp %366 : vector<8x128xf32>
    %cst_88 = arith.constant 1.000000e+00 : f32
    %368 = vector.broadcast %cst_88 : f32 to vector<8x128xf32>
    %369 = arith.addf %368, %367 : vector<8x128xf32>
    %370 = arith.divf %368, %369 : vector<8x128xf32>
    %371 = vector.extract_strided_slice %364 {offsets = [0, 128], sizes = [8, 128], strides = [1, 1]} : vector<8x512xf32> to vector<8x128xf32>
    %372 = arith.negf %371 : vector<8x128xf32>
    %373 = math.exp %372 : vector<8x128xf32>
    %cst_89 = arith.constant 1.000000e+00 : f32
    %374 = vector.broadcast %cst_89 : f32 to vector<8x128xf32>
    %375 = arith.addf %374, %373 : vector<8x128xf32>
    %376 = arith.divf %374, %375 : vector<8x128xf32>
    %377 = vector.extract_strided_slice %364 {offsets = [0, 256], sizes = [8, 128], strides = [1, 1]} : vector<8x512xf32> to vector<8x128xf32>
    %378 = math.tanh %377 : vector<8x128xf32>
    %379 = vector.extract_strided_slice %364 {offsets = [0, 384], sizes = [8, 128], strides = [1, 1]} : vector<8x512xf32> to vector<8x128xf32>
    %380 = arith.negf %379 : vector<8x128xf32>
    %381 = math.exp %380 : vector<8x128xf32>
    %cst_90 = arith.constant 1.000000e+00 : f32
    %382 = vector.broadcast %cst_90 : f32 to vector<8x128xf32>
    %383 = arith.addf %382, %381 : vector<8x128xf32>
    %384 = arith.divf %382, %383 : vector<8x128xf32>
    %385 = arith.mulf %376, %321 : vector<8x128xf32>
    %386 = arith.mulf %370, %378 : vector<8x128xf32>
    %387 = arith.addf %385, %386 : vector<8x128xf32>
    %388 = math.tanh %387 : vector<8x128xf32>
    %389 = arith.mulf %384, %388 : vector<8x128xf32>
    %390 = arith.truncf %389 : vector<8x128xf32> to vector<8x128xbf16>
    %cst_91 = arith.constant dense<0.000000e+00> : vector<8x512xf32>
    %391 = tpu.matmul %390, %17, %cst_91 {dimension_numbers = #tpu.dot_dimension_numbers<[1], [0], [0], [1], [0, 0, 1, 1], [], []>} : vector<8x128xbf16>, vector<128x512xbf16>, vector<8x512xf32> -> vector<8x512xf32>
    %392 = arith.addf %359, %391 : vector<8x512xf32>
    %393 = vector.extract_strided_slice %392 {offsets = [0, 0], sizes = [8, 128], strides = [1, 1]} : vector<8x512xf32> to vector<8x128xf32>
    %394 = arith.negf %393 : vector<8x128xf32>
    %395 = math.exp %394 : vector<8x128xf32>
    %cst_92 = arith.constant 1.000000e+00 : f32
    %396 = vector.broadcast %cst_92 : f32 to vector<8x128xf32>
    %397 = arith.addf %396, %395 : vector<8x128xf32>
    %398 = arith.divf %396, %397 : vector<8x128xf32>
    %399 = vector.extract_strided_slice %392 {offsets = [0, 128], sizes = [8, 128], strides = [1, 1]} : vector<8x512xf32> to vector<8x128xf32>
    %400 = arith.negf %399 : vector<8x128xf32>
    %401 = math.exp %400 : vector<8x128xf32>
    %cst_93 = arith.constant 1.000000e+00 : f32
    %402 = vector.broadcast %cst_93 : f32 to vector<8x128xf32>
    %403 = arith.addf %402, %401 : vector<8x128xf32>
    %404 = arith.divf %402, %403 : vector<8x128xf32>
    %405 = vector.extract_strided_slice %392 {offsets = [0, 256], sizes = [8, 128], strides = [1, 1]} : vector<8x512xf32> to vector<8x128xf32>
    %406 = math.tanh %405 : vector<8x128xf32>
    %407 = vector.extract_strided_slice %392 {offsets = [0, 384], sizes = [8, 128], strides = [1, 1]} : vector<8x512xf32> to vector<8x128xf32>
    %408 = arith.negf %407 : vector<8x128xf32>
    %409 = math.exp %408 : vector<8x128xf32>
    %cst_94 = arith.constant 1.000000e+00 : f32
    %410 = vector.broadcast %cst_94 : f32 to vector<8x128xf32>
    %411 = arith.addf %410, %409 : vector<8x128xf32>
    %412 = arith.divf %410, %411 : vector<8x128xf32>
    %413 = arith.mulf %404, %349 : vector<8x128xf32>
    %414 = arith.mulf %398, %406 : vector<8x128xf32>
    %415 = arith.addf %413, %414 : vector<8x128xf32>
    %416 = math.tanh %415 : vector<8x128xf32>
    %417 = arith.mulf %412, %416 : vector<8x128xf32>
    %418 = arith.index_cast %355 : i32 to index
    %c0_95 = arith.constant 0 : index
    %419 = vector.load %arg16[%418, %c0_95] : memref<64x128xf32, #tpu.memory_space<vmem>>, vector<8x128xf32>
    tpu.vector_store %arg16[%418, %c0_95], %417 {strides = array<i32>} : memref<64x128xf32, #tpu.memory_space<vmem>>, vector<8x128xf32>,
    %c6_i32 = arith.constant 6 : i32
    %c8_i32_96 = arith.constant 8 : i32
    %420 = arith.muli %c6_i32, %c8_i32_96 : i32
    %421 = tpu.assume_multiple %420, 8 : i32
    %422 = arith.truncf %417 : vector<8x128xf32> to vector<8x128xbf16>
    %cst_97 = arith.constant dense<0.000000e+00> : vector<8x512xf32>
    %423 = tpu.matmul %422, %18, %cst_97 {dimension_numbers = #tpu.dot_dimension_numbers<[1], [0], [0], [1], [0, 0, 1, 1], [], []>} : vector<8x128xbf16>, vector<128x512xbf16>, vector<8x512xf32> -> vector<8x512xf32>
    %424 = vector.broadcast %19 : vector<1x512xf32> to vector<8x512xf32>
    %425 = arith.addf %423, %424 : vector<8x512xf32>
    %426 = arith.index_cast %421 : i32 to index
    %c0_98 = arith.constant 0 : index
    %427 = vector.load %arg15[%426, %c0_98] : memref<64x512xf32, #tpu.memory_space<vmem>>, vector<8x512xf32>
    %428 = arith.truncf %389 : vector<8x128xf32> to vector<8x128xbf16>
    %cst_99 = arith.constant dense<0.000000e+00> : vector<8x512xf32>
    %429 = tpu.matmul %428, %16, %cst_99 {dimension_numbers = #tpu.dot_dimension_numbers<[1], [0], [0], [1], [0, 0, 1, 1], [], []>} : vector<8x128xbf16>, vector<128x512xbf16>, vector<8x512xf32> -> vector<8x512xf32>
    %430 = arith.addf %427, %429 : vector<8x512xf32>
    %431 = vector.extract_strided_slice %430 {offsets = [0, 0], sizes = [8, 128], strides = [1, 1]} : vector<8x512xf32> to vector<8x128xf32>
    %432 = arith.negf %431 : vector<8x128xf32>
    %433 = math.exp %432 : vector<8x128xf32>
    %cst_100 = arith.constant 1.000000e+00 : f32
    %434 = vector.broadcast %cst_100 : f32 to vector<8x128xf32>
    %435 = arith.addf %434, %433 : vector<8x128xf32>
    %436 = arith.divf %434, %435 : vector<8x128xf32>
    %437 = vector.extract_strided_slice %430 {offsets = [0, 128], sizes = [8, 128], strides = [1, 1]} : vector<8x512xf32> to vector<8x128xf32>
    %438 = arith.negf %437 : vector<8x128xf32>
    %439 = math.exp %438 : vector<8x128xf32>
    %cst_101 = arith.constant 1.000000e+00 : f32
    %440 = vector.broadcast %cst_101 : f32 to vector<8x128xf32>
    %441 = arith.addf %440, %439 : vector<8x128xf32>
    %442 = arith.divf %440, %441 : vector<8x128xf32>
    %443 = vector.extract_strided_slice %430 {offsets = [0, 256], sizes = [8, 128], strides = [1, 1]} : vector<8x512xf32> to vector<8x128xf32>
    %444 = math.tanh %443 : vector<8x128xf32>
    %445 = vector.extract_strided_slice %430 {offsets = [0, 384], sizes = [8, 128], strides = [1, 1]} : vector<8x512xf32> to vector<8x128xf32>
    %446 = arith.negf %445 : vector<8x128xf32>
    %447 = math.exp %446 : vector<8x128xf32>
    %cst_102 = arith.constant 1.000000e+00 : f32
    %448 = vector.broadcast %cst_102 : f32 to vector<8x128xf32>
    %449 = arith.addf %448, %447 : vector<8x128xf32>
    %450 = arith.divf %448, %449 : vector<8x128xf32>
    %451 = arith.mulf %442, %387 : vector<8x128xf32>
    %452 = arith.mulf %436, %444 : vector<8x128xf32>
    %453 = arith.addf %451, %452 : vector<8x128xf32>
    %454 = math.tanh %453 : vector<8x128xf32>
    %455 = arith.mulf %450, %454 : vector<8x128xf32>
    %456 = arith.truncf %455 : vector<8x128xf32> to vector<8x128xbf16>
    %cst_103 = arith.constant dense<0.000000e+00> : vector<8x512xf32>
    %457 = tpu.matmul %456, %17, %cst_103 {dimension_numbers = #tpu.dot_dimension_numbers<[1], [0], [0], [1], [0, 0, 1, 1], [], []>} : vector<8x128xbf16>, vector<128x512xbf16>, vector<8x512xf32> -> vector<8x512xf32>
    %458 = arith.addf %425, %457 : vector<8x512xf32>
    %459 = vector.extract_strided_slice %458 {offsets = [0, 0], sizes = [8, 128], strides = [1, 1]} : vector<8x512xf32> to vector<8x128xf32>
    %460 = arith.negf %459 : vector<8x128xf32>
    %461 = math.exp %460 : vector<8x128xf32>
    %cst_104 = arith.constant 1.000000e+00 : f32
    %462 = vector.broadcast %cst_104 : f32 to vector<8x128xf32>
    %463 = arith.addf %462, %461 : vector<8x128xf32>
    %464 = arith.divf %462, %463 : vector<8x128xf32>
    %465 = vector.extract_strided_slice %458 {offsets = [0, 128], sizes = [8, 128], strides = [1, 1]} : vector<8x512xf32> to vector<8x128xf32>
    %466 = arith.negf %465 : vector<8x128xf32>
    %467 = math.exp %466 : vector<8x128xf32>
    %cst_105 = arith.constant 1.000000e+00 : f32
    %468 = vector.broadcast %cst_105 : f32 to vector<8x128xf32>
    %469 = arith.addf %468, %467 : vector<8x128xf32>
    %470 = arith.divf %468, %469 : vector<8x128xf32>
    %471 = vector.extract_strided_slice %458 {offsets = [0, 256], sizes = [8, 128], strides = [1, 1]} : vector<8x512xf32> to vector<8x128xf32>
    %472 = math.tanh %471 : vector<8x128xf32>
    %473 = vector.extract_strided_slice %458 {offsets = [0, 384], sizes = [8, 128], strides = [1, 1]} : vector<8x512xf32> to vector<8x128xf32>
    %474 = arith.negf %473 : vector<8x128xf32>
    %475 = math.exp %474 : vector<8x128xf32>
    %cst_106 = arith.constant 1.000000e+00 : f32
    %476 = vector.broadcast %cst_106 : f32 to vector<8x128xf32>
    %477 = arith.addf %476, %475 : vector<8x128xf32>
    %478 = arith.divf %476, %477 : vector<8x128xf32>
    %479 = arith.mulf %470, %415 : vector<8x128xf32>
    %480 = arith.mulf %464, %472 : vector<8x128xf32>
    %481 = arith.addf %479, %480 : vector<8x128xf32>
    %482 = math.tanh %481 : vector<8x128xf32>
    %483 = arith.mulf %478, %482 : vector<8x128xf32>
    %484 = arith.index_cast %421 : i32 to index
    %c0_107 = arith.constant 0 : index
    %485 = vector.load %arg16[%484, %c0_107] : memref<64x128xf32, #tpu.memory_space<vmem>>, vector<8x128xf32>
    tpu.vector_store %arg16[%484, %c0_107], %483 {strides = array<i32>} : memref<64x128xf32, #tpu.memory_space<vmem>>, vector<8x128xf32>,
    %c7_i32 = arith.constant 7 : i32
    %c8_i32_108 = arith.constant 8 : i32
    %486 = arith.muli %c7_i32, %c8_i32_108 : i32
    %487 = tpu.assume_multiple %486, 8 : i32
    %488 = arith.truncf %483 : vector<8x128xf32> to vector<8x128xbf16>
    %cst_109 = arith.constant dense<0.000000e+00> : vector<8x512xf32>
    %489 = tpu.matmul %488, %18, %cst_109 {dimension_numbers = #tpu.dot_dimension_numbers<[1], [0], [0], [1], [0, 0, 1, 1], [], []>} : vector<8x128xbf16>, vector<128x512xbf16>, vector<8x512xf32> -> vector<8x512xf32>
    %490 = vector.broadcast %19 : vector<1x512xf32> to vector<8x512xf32>
    %491 = arith.addf %489, %490 : vector<8x512xf32>
    %492 = arith.index_cast %487 : i32 to index
    %c0_110 = arith.constant 0 : index
    %493 = vector.load %arg15[%492, %c0_110] : memref<64x512xf32, #tpu.memory_space<vmem>>, vector<8x512xf32>
    %494 = arith.truncf %455 : vector<8x128xf32> to vector<8x128xbf16>
    %cst_111 = arith.constant dense<0.000000e+00> : vector<8x512xf32>
    %495 = tpu.matmul %494, %16, %cst_111 {dimension_numbers = #tpu.dot_dimension_numbers<[1], [0], [0], [1], [0, 0, 1, 1], [], []>} : vector<8x128xbf16>, vector<128x512xbf16>, vector<8x512xf32> -> vector<8x512xf32>
    %496 = arith.addf %493, %495 : vector<8x512xf32>
    %497 = vector.extract_strided_slice %496 {offsets = [0, 0], sizes = [8, 128], strides = [1, 1]} : vector<8x512xf32> to vector<8x128xf32>
    %498 = arith.negf %497 : vector<8x128xf32>
    %499 = math.exp %498 : vector<8x128xf32>
    %cst_112 = arith.constant 1.000000e+00 : f32
    %500 = vector.broadcast %cst_112 : f32 to vector<8x128xf32>
    %501 = arith.addf %500, %499 : vector<8x128xf32>
    %502 = arith.divf %500, %501 : vector<8x128xf32>
    %503 = vector.extract_strided_slice %496 {offsets = [0, 128], sizes = [8, 128], strides = [1, 1]} : vector<8x512xf32> to vector<8x128xf32>
    %504 = arith.negf %503 : vector<8x128xf32>
    %505 = math.exp %504 : vector<8x128xf32>
    %cst_113 = arith.constant 1.000000e+00 : f32
    %506 = vector.broadcast %cst_113 : f32 to vector<8x128xf32>
    %507 = arith.addf %506, %505 : vector<8x128xf32>
    %508 = arith.divf %506, %507 : vector<8x128xf32>
    %509 = vector.extract_strided_slice %496 {offsets = [0, 256], sizes = [8, 128], strides = [1, 1]} : vector<8x512xf32> to vector<8x128xf32>
    %510 = math.tanh %509 : vector<8x128xf32>
    %511 = vector.extract_strided_slice %496 {offsets = [0, 384], sizes = [8, 128], strides = [1, 1]} : vector<8x512xf32> to vector<8x128xf32>
    %512 = arith.negf %511 : vector<8x128xf32>
    %513 = math.exp %512 : vector<8x128xf32>
    %cst_114 = arith.constant 1.000000e+00 : f32
    %514 = vector.broadcast %cst_114 : f32 to vector<8x128xf32>
    %515 = arith.addf %514, %513 : vector<8x128xf32>
    %516 = arith.divf %514, %515 : vector<8x128xf32>
    %517 = arith.mulf %508, %453 : vector<8x128xf32>
    %518 = arith.mulf %502, %510 : vector<8x128xf32>
    %519 = arith.addf %517, %518 : vector<8x128xf32>
    %520 = math.tanh %519 : vector<8x128xf32>
    %521 = arith.mulf %516, %520 : vector<8x128xf32>
    %522 = arith.truncf %521 : vector<8x128xf32> to vector<8x128xbf16>
    %cst_115 = arith.constant dense<0.000000e+00> : vector<8x512xf32>
    %523 = tpu.matmul %522, %17, %cst_115 {dimension_numbers = #tpu.dot_dimension_numbers<[1], [0], [0], [1], [0, 0, 1, 1], [], []>} : vector<8x128xbf16>, vector<128x512xbf16>, vector<8x512xf32> -> vector<8x512xf32>
    %524 = arith.addf %491, %523 : vector<8x512xf32>
    %525 = vector.extract_strided_slice %524 {offsets = [0, 0], sizes = [8, 128], strides = [1, 1]} : vector<8x512xf32> to vector<8x128xf32>
    %526 = arith.negf %525 : vector<8x128xf32>
    %527 = math.exp %526 : vector<8x128xf32>
    %cst_116 = arith.constant 1.000000e+00 : f32
    %528 = vector.broadcast %cst_116 : f32 to vector<8x128xf32>
    %529 = arith.addf %528, %527 : vector<8x128xf32>
    %530 = arith.divf %528, %529 : vector<8x128xf32>
    %531 = vector.extract_strided_slice %524 {offsets = [0, 128], sizes = [8, 128], strides = [1, 1]} : vector<8x512xf32> to vector<8x128xf32>
    %532 = arith.negf %531 : vector<8x128xf32>
    %533 = math.exp %532 : vector<8x128xf32>
    %cst_117 = arith.constant 1.000000e+00 : f32
    %534 = vector.broadcast %cst_117 : f32 to vector<8x128xf32>
    %535 = arith.addf %534, %533 : vector<8x128xf32>
    %536 = arith.divf %534, %535 : vector<8x128xf32>
    %537 = vector.extract_strided_slice %524 {offsets = [0, 256], sizes = [8, 128], strides = [1, 1]} : vector<8x512xf32> to vector<8x128xf32>
    %538 = math.tanh %537 : vector<8x128xf32>
    %539 = vector.extract_strided_slice %524 {offsets = [0, 384], sizes = [8, 128], strides = [1, 1]} : vector<8x512xf32> to vector<8x128xf32>
    %540 = arith.negf %539 : vector<8x128xf32>
    %541 = math.exp %540 : vector<8x128xf32>
    %cst_118 = arith.constant 1.000000e+00 : f32
    %542 = vector.broadcast %cst_118 : f32 to vector<8x128xf32>
    %543 = arith.addf %542, %541 : vector<8x128xf32>
    %544 = arith.divf %542, %543 : vector<8x128xf32>
    %545 = arith.mulf %536, %481 : vector<8x128xf32>
    %546 = arith.mulf %530, %538 : vector<8x128xf32>
    %547 = arith.addf %545, %546 : vector<8x128xf32>
    %548 = math.tanh %547 : vector<8x128xf32>
    %549 = arith.mulf %544, %548 : vector<8x128xf32>
    %550 = arith.index_cast %487 : i32 to index
    %c0_119 = arith.constant 0 : index
    %551 = vector.load %arg16[%550, %c0_119] : memref<64x128xf32, #tpu.memory_space<vmem>>, vector<8x128xf32>
    tpu.vector_store %arg16[%550, %c0_119], %549 {strides = array<i32>} : memref<64x128xf32, #tpu.memory_space<vmem>>, vector<8x128xf32>,
    %c8_i32_120 = arith.constant 8 : i32
    %c0_121 = arith.constant 0 : index
    %c0_122 = arith.constant 0 : index
    %552 = vector.load %arg17[%c0_121, %c0_122] : memref<8x128xf32, #tpu.memory_space<vmem>>, vector<8x128xf32>
    tpu.vector_store %arg17[%c0_121, %c0_122], %521 {strides = array<i32>} : memref<8x128xf32, #tpu.memory_space<vmem>>, vector<8x128xf32>,
    %c0_123 = arith.constant 0 : index
    %c0_124 = arith.constant 0 : index
    %553 = vector.load %arg18[%c0_123, %c0_124] : memref<8x128xf32, #tpu.memory_space<vmem>>, vector<8x128xf32>
    tpu.vector_store %arg18[%c0_123, %c0_124], %519 {strides = array<i32>} : memref<8x128xf32, #tpu.memory_space<vmem>>, vector<8x128xf32>,
    %c0_125 = arith.constant 0 : index
    %c0_126 = arith.constant 0 : index
    %554 = vector.load %arg19[%c0_125, %c0_126] : memref<8x128xf32, #tpu.memory_space<vmem>>, vector<8x128xf32>
    tpu.vector_store %arg19[%c0_125, %c0_126], %549 {strides = array<i32>} : memref<8x128xf32, #tpu.memory_space<vmem>>, vector<8x128xf32>,
    %c0_127 = arith.constant 0 : index
    %c0_128 = arith.constant 0 : index
    %555 = vector.load %arg20[%c0_127, %c0_128] : memref<8x128xf32, #tpu.memory_space<vmem>>, vector<8x128xf32>
    tpu.vector_store %arg20[%c0_127, %c0_128], %547 {strides = array<i32>} : memref<8x128xf32, #tpu.memory_space<vmem>>, vector<8x128xf32>,
    %c0_129 = arith.constant 0 : index
    %c0_130 = arith.constant 0 : index
    %556 = vector.load %arg16[%c0_129, %c0_130] : memref<64x128xf32, #tpu.memory_space<vmem>>, vector<64x128xf32>
    %557 = arith.truncf %556 : vector<64x128xf32> to vector<64x128xbf16>
    %c0_131 = arith.constant 0 : index
    %c0_132 = arith.constant 0 : index
    %558 = vector.load %arg8[%c0_131, %c0_132] : memref<128x384xbf16, #tpu.memory_space<vmem>>, vector<128x384xbf16>
    %cst_133 = arith.constant dense<0.000000e+00> : vector<64x384xf32>
    %559 = tpu.matmul %557, %558, %cst_133 {dimension_numbers = #tpu.dot_dimension_numbers<[1], [0], [0], [1], [0, 0, 1, 1], [], []>} : vector<64x128xbf16>, vector<128x384xbf16>, vector<64x384xf32> -> vector<64x384xf32>
    %c0_134 = arith.constant 0 : index
    %c0_135 = arith.constant 0 : index
    %560 = vector.load %arg9[%c0_134, %c0_135] : memref<1x384xf32, #tpu.memory_space<vmem>>, vector<1x384xf32>
    %561 = vector.broadcast %560 : vector<1x384xf32> to vector<64x384xf32>
    %562 = arith.addf %559, %561 : vector<64x384xf32>
    %563 = math.tanh %562 : vector<64x384xf32>
    %564 = arith.truncf %563 : vector<64x384xf32> to vector<64x384xbf16>
    %c0_136 = arith.constant 0 : index
    %c0_137 = arith.constant 0 : index
    %565 = vector.load %arg10[%c0_136, %c0_137] : memref<384x128xbf16, #tpu.memory_space<vmem>>, vector<384x128xbf16>
    %cst_138 = arith.constant dense<0.000000e+00> : vector<64x128xf32>
    %566 = tpu.matmul %564, %565, %cst_138 {dimension_numbers = #tpu.dot_dimension_numbers<[1], [0], [0], [1], [0, 0, 1, 1], [], []>} : vector<64x384xbf16>, vector<384x128xbf16>, vector<64x128xf32> -> vector<64x128xf32>
    %c0_139 = arith.constant 0 : index
    %c0_140 = arith.constant 0 : index
    %567 = vector.load %arg11[%c0_139, %c0_140] : memref<1x128xf32, #tpu.memory_space<vmem>>, vector<1x128xf32>
    %568 = vector.broadcast %567 : vector<1x128xf32> to vector<64x128xf32>
    %569 = arith.addf %566, %568 : vector<64x128xf32>
    %cst_141 = arith.constant dense<0xFF800000> : vector<64xf32>
    %570 = vector.multi_reduction <maximumf>, %569, %cst_141 [1] : vector<64x128xf32> to vector<64xf32>
    %571 = vector.shape_cast %570 : vector<64xf32> to vector<64x1xf32>
    %572 = vector.broadcast %571 : vector<64x1xf32> to vector<64x128xf32>
    %573 = arith.subf %569, %572 : vector<64x128xf32>
    %574 = math.exp %573 : vector<64x128xf32>
    %cst_142 = arith.constant dense<0.000000e+00> : vector<64xf32>
    %575 = vector.multi_reduction <add>, %574, %cst_142 [1] : vector<64x128xf32> to vector<64xf32>
    %576 = vector.shape_cast %575 : vector<64xf32> to vector<64x1xf32>
    %577 = math.log %576 : vector<64x1xf32>
    %578 = vector.broadcast %577 : vector<64x1xf32> to vector<64x128xf32>
    %579 = arith.subf %573, %578 : vector<64x128xf32>
    %c0_143 = arith.constant 0 : index
    %c0_144 = arith.constant 0 : index
    %580 = vector.load %arg12[%c0_143, %c0_144] : memref<64x128xf32, #tpu.memory_space<vmem>>, vector<64x128xf32>
    tpu.vector_store %arg12[%c0_143, %c0_144], %579 {strides = array<i32>} : memref<64x128xf32, #tpu.memory_space<vmem>>, vector<64x128xf32>,
    %c0_i32_145 = arith.constant 0 : i32
    %581 = arith.cmpi eq, %arg0, %c0_i32_145 : i32
    %582 = arith.extui %581 : i1 to i32
    %c0_i32_146 = arith.constant 0 : i32
    %583 = arith.cmpi ne, %582, %c0_i32_146 : i32
    scf.if %583 {
      %c0_147 = arith.constant 0 : index
      %c0_148 = arith.constant 0 : index
      %c0_149 = arith.constant 0 : index
      %584 = vector.load %arg13[%c0_147, %c0_148, %c0_149] : memref<2x8x128xf32, #tpu.memory_space<vmem>>, vector<1x8x128xf32>
      %585 = vector.shape_cast %584 : vector<1x8x128xf32> to vector<8x128xf32>
      %586 = vector.shape_cast %521 : vector<8x128xf32> to vector<1x8x128xf32>
      tpu.vector_store %arg13[%c0_147, %c0_148, %c0_149], %586 {strides = array<i32>} : memref<2x8x128xf32, #tpu.memory_space<vmem>>, vector<1x8x128xf32>,
      %c1 = arith.constant 1 : index
      %c0_150 = arith.constant 0 : index
      %c0_151 = arith.constant 0 : index
      %587 = vector.load %arg13[%c1, %c0_150, %c0_151] : memref<2x8x128xf32, #tpu.memory_space<vmem>>, vector<1x8x128xf32>
      %588 = vector.shape_cast %587 : vector<1x8x128xf32> to vector<8x128xf32>
      %589 = vector.shape_cast %549 : vector<8x128xf32> to vector<1x8x128xf32>
      tpu.vector_store %arg13[%c1, %c0_150, %c0_151], %589 {strides = array<i32>} : memref<2x8x128xf32, #tpu.memory_space<vmem>>, vector<1x8x128xf32>,
      %c0_152 = arith.constant 0 : index
      %c0_153 = arith.constant 0 : index
      %c0_154 = arith.constant 0 : index
      %590 = vector.load %arg14[%c0_152, %c0_153, %c0_154] : memref<2x8x128xf32, #tpu.memory_space<vmem>>, vector<1x8x128xf32>
      %591 = vector.shape_cast %590 : vector<1x8x128xf32> to vector<8x128xf32>
      %592 = vector.shape_cast %519 : vector<8x128xf32> to vector<1x8x128xf32>
      tpu.vector_store %arg14[%c0_152, %c0_153, %c0_154], %592 {strides = array<i32>} : memref<2x8x128xf32, #tpu.memory_space<vmem>>, vector<1x8x128xf32>,
      %c1_155 = arith.constant 1 : index
      %c0_156 = arith.constant 0 : index
      %c0_157 = arith.constant 0 : index
      %593 = vector.load %arg14[%c1_155, %c0_156, %c0_157] : memref<2x8x128xf32, #tpu.memory_space<vmem>>, vector<1x8x128xf32>
      %594 = vector.shape_cast %593 : vector<1x8x128xf32> to vector<8x128xf32>
      %595 = vector.shape_cast %547 : vector<8x128xf32> to vector<1x8x128xf32>
      tpu.vector_store %arg14[%c1_155, %c0_156, %c0_157], %595 {strides = array<i32>} : memref<2x8x128xf32, #tpu.memory_space<vmem>>, vector<1x8x128xf32>,
    } else {
    }
    return
  }
  func.func @transform_0(%arg0: i32) -> (i32, i32) {
    %c0_i32 = arith.constant 0 : i32
    %c0_i32_0 = arith.constant 0 : i32
    return %arg0, %c0_i32 : i32, i32
  }
  func.func @transform_1(%arg0: i32) -> (i32, i32) {
    %c0_i32 = arith.constant 0 : i32
    %c0_i32_0 = arith.constant 0 : i32
    %c0_i32_1 = arith.constant 0 : i32
    return %c0_i32, %c0_i32_0 : i32, i32
  }
  func.func @transform_2(%arg0: i32) -> (i32, i32) {
    %c0_i32 = arith.constant 0 : i32
    %c0_i32_0 = arith.constant 0 : i32
    %c0_i32_1 = arith.constant 0 : i32
    return %c0_i32, %c0_i32_0 : i32, i32
  }
  func.func @transform_3(%arg0: i32) -> (i32, i32) {
    %c0_i32 = arith.constant 0 : i32
    %c0_i32_0 = arith.constant 0 : i32
    %c0_i32_1 = arith.constant 0 : i32
    return %c0_i32, %c0_i32_0 : i32, i32
  }
  func.func @transform_4(%arg0: i32) -> (i32, i32) {
    %c0_i32 = arith.constant 0 : i32
    %c0_i32_0 = arith.constant 0 : i32
    %c0_i32_1 = arith.constant 0 : i32
    return %c0_i32, %c0_i32_0 : i32, i32
  }
  func.func @transform_5(%arg0: i32) -> (i32, i32) {
    %c0_i32 = arith.constant 0 : i32
    %c0_i32_0 = arith.constant 0 : i32
    %c0_i32_1 = arith.constant 0 : i32
    return %c0_i32, %c0_i32_0 : i32, i32
  }
  func.func @transform_6(%arg0: i32) -> (i32, i32) {
    %c0_i32 = arith.constant 0 : i32
    %c0_i32_0 = arith.constant 0 : i32
    %c0_i32_1 = arith.constant 0 : i32
    return %c0_i32, %c0_i32_0 : i32, i32
  }
  func.func @transform_7(%arg0: i32) -> (i32, i32) {
    %c0_i32 = arith.constant 0 : i32
    %c0_i32_0 = arith.constant 0 : i32
    %c0_i32_1 = arith.constant 0 : i32
    return %c0_i32, %c0_i32_0 : i32, i32
  }
  func.func @transform_8(%arg0: i32) -> (i32, i32) {
    %c0_i32 = arith.constant 0 : i32
    %c0_i32_0 = arith.constant 0 : i32
    %c0_i32_1 = arith.constant 0 : i32
    return %c0_i32, %c0_i32_0 : i32, i32
  }
  func.func @transform_9(%arg0: i32) -> (i32, i32) {
    %c0_i32 = arith.constant 0 : i32
    %c0_i32_0 = arith.constant 0 : i32
    %c0_i32_1 = arith.constant 0 : i32
    return %c0_i32, %c0_i32_0 : i32, i32
  }
  func.func @transform_10(%arg0: i32) -> (i32, i32) {
    %c0_i32 = arith.constant 0 : i32
    %c0_i32_0 = arith.constant 0 : i32
    %c0_i32_1 = arith.constant 0 : i32
    return %c0_i32, %c0_i32_0 : i32, i32
  }
  func.func @transform_11(%arg0: i32) -> (i32, i32) {
    %c0_i32 = arith.constant 0 : i32
    %c0_i32_0 = arith.constant 0 : i32
    return %arg0, %c0_i32 : i32, i32
  }
  func.func @transform_12(%arg0: i32) -> (i32, i32, i32) {
    %c0_i32 = arith.constant 0 : i32
    %c0_i32_0 = arith.constant 0 : i32
    %c0_i32_1 = arith.constant 0 : i32
    %c0_i32_2 = arith.constant 0 : i32
    return %c0_i32, %c0_i32_0, %c0_i32_1 : i32, i32, i32
  }
  func.func @transform_13(%arg0: i32) -> (i32, i32, i32) {
    %c0_i32 = arith.constant 0 : i32
    %c0_i32_0 = arith.constant 0 : i32
    %c0_i32_1 = arith.constant 0 : i32
    %c0_i32_2 = arith.constant 0 : i32
    return %c0_i32, %c0_i32_0, %c0_i32_1 : i32, i32, i32
  }
}

</mosaic_0001>

<llo_original>
// kernel: tpu_custom_call.1
$region0: #{tpu_custom_call.1}
  #allocation0 [shape = 'u32[]', space=smem, size = 0x4, offset = 0x4, fixed_abs, tag = 'smem constant byte address 0x4 - core index']
  #allocation1 [shape = 'u32[144,128]{1,0:T(1,128)}', space=vmem, size = 0x12000, scoped, tag = 'internal scratch']
  #allocation2 [shape = 'f32[64,512]{1,0:T(8,128)}', space=vmem, size = 0x20000, scoped, tag = 'scratch operand']
  #allocation3 [shape = 'f32[64,128]{1,0:T(8,128)}', space=vmem, size = 0x8000, scoped, tag = 'scratch operand']
  #allocation4 [shape = 'f32[8,128]{1,0:T(8,128)}', space=vmem, size = 0x1000, scoped, tag = 'scratch operand']
  #allocation5 [shape = 'f32[8,128]{1,0:T(8,128)}', space=vmem, size = 0x1000, scoped, tag = 'scratch operand']
  #allocation6 [shape = 'f32[8,128]{1,0:T(8,128)}', space=vmem, size = 0x1000, scoped, tag = 'scratch operand']
  #allocation7 [shape = 'f32[8,128]{1,0:T(8,128)}', space=vmem, size = 0x1000, scoped, tag = 'scratch operand']
  %s0 = inlined_call_operand.vmem [shape: s32[64,1], index: 0, kind: input, shape index: {}]
  %s1 = inlined_call_operand.hbm [shape: bf16[128,512], index: 1, kind: input, shape index: {}]
  %s2 = inlined_call_operand.vmem [shape: f32[1,512], index: 2, kind: input, shape index: {}]
  %s3 = inlined_call_operand.hbm [shape: bf16[128,512], index: 3, kind: input, shape index: {}]
  %s4 = inlined_call_operand.hbm [shape: bf16[128,512], index: 4, kind: input, shape index: {}]
  %s5 = inlined_call_operand.hbm [shape: bf16[128,512], index: 5, kind: input, shape index: {}]
  %s6 = inlined_call_operand.vmem [shape: f32[1,512], index: 6, kind: input, shape index: {}]
  %s7 = inlined_call_operand.hbm [shape: bf16[128,384], index: 7, kind: input, shape index: {}]
  %s8 = inlined_call_operand.vmem [shape: f32[1,384], index: 8, kind: input, shape index: {}]
  %s9 = inlined_call_operand.hbm [shape: bf16[384,128], index: 9, kind: input, shape index: {}]
  %s10 = inlined_call_operand.vmem [shape: f32[1,128], index: 10, kind: input, shape index: {}]
  %s11 = inlined_call_operand.hbm [shape: f32[64,128], index: 11, kind: output, shape index: {0}]
  %s12 = inlined_call_operand.hbm [shape: f32[2,8,128], index: 12, kind: output, shape index: {1}]
  %s13 = inlined_call_operand.hbm [shape: f32[2,8,128], index: 13, kind: output, shape index: {2}]
  %14 = xla_tuple %s11, %s12, %s13
  %s15 = sld [smem:[#allocation0]]
  $region102: #{tpu_custom_call.1} parent=0
    _
  %s17 = ssub.s32 1, %s15
  %s18 = scalar_select 0, %s17, %s15
  $region1: #{tpu_custom_call.1} parent=0
    #allocation8 [shape = 'u8[131072]{0}', space=vmem, size = 0x20000, scoped, tag = 'input window, operand 1, single buffered']
    #allocation9 [shape = 's32[1]{0}', space=sflag, size = 0x4, scoped, tag = 'scoped memory for tpu_custom_call.1']
    #allocation10 [shape = 's32[1]{0}', space=sflag, size = 0x4, scoped, tag = 'scoped memory for tpu_custom_call.1']
    #allocation11 [shape = 'u8[131072]{0}', space=vmem, size = 0x20000, scoped, tag = 'input window, operand 3, single buffered']
    #allocation12 [shape = 's32[1]{0}', space=sflag, size = 0x4, scoped, tag = 'scoped memory for tpu_custom_call.1']
    #allocation13 [shape = 'u8[131072]{0}', space=vmem, size = 0x20000, scoped, tag = 'input window, operand 4, single buffered']
    #allocation14 [shape = 'u8[131072]{0}', space=vmem, size = 0x20000, scoped, tag = 'input window, operand 5, single buffered']
    #allocation15 [shape = 's32[1]{0}', space=sflag, size = 0x4, scoped, tag = 'scoped memory for tpu_custom_call.1']
    #allocation16 [shape = 'u8[98304]{0}', space=vmem, size = 0x18000, scoped, tag = 'input window, operand 7, single buffered']
    #allocation17 [shape = 'u8[98304]{0}', space=vmem, size = 0x18000, scoped, tag = 'input window, operand 9, single buffered']
    #allocation18 [shape = 's32[1]{0}', space=sflag, size = 0x4, scoped, tag = 'scoped memory for tpu_custom_call.1']
    #allocation19 [shape = 'u8[32768]{0}', space=vmem, size = 0x8000, scoped, tag = 'output window, operand 0, single buffered']
    #allocation20 [shape = 'u8[8192]{0}', space=vmem, size = 0x2000, scoped, tag = 'output window, operand 1, single buffered']
    #allocation21 [shape = 's32[1]{0}', space=sflag, size = 0x4, scoped, tag = 'scoped memory for tpu_custom_call.1']
    #allocation22 [shape = 'u8[8192]{0}', space=vmem, size = 0x2000, scoped, tag = 'output window, operand 2, single buffered']
    %19 = vsyncpa [#allocation9], 0
    %20 = vsyncpa [#allocation12], 0
    %21 = vsyncpa [#allocation15], 0
    %22 = vsyncpa [#allocation18], 0
    %23 = vsyncpa [#allocation10], 0
    %24 = vsyncpa [#allocation21], 0
    // Predicated region
    $region2: #{tpu_custom_call.1} parent=1 // pred_check
      _
    $region3: #{tpu_custom_call.1} parent=1 // pred_check_branch
      %26 = sbr.rel (0) target = $region5
    $region4: #{tpu_custom_call.1} parent=1 // pred_region
      _
    $region5: #{tpu_custom_call.1} parent=1 // pred_fallthru
      _
    // Predicated region
    $region6: #{tpu_custom_call.1} parent=1 // pred_check
      _
    $region7: #{tpu_custom_call.1} parent=1 // pred_check_branch
      %28 = sbr.rel (0) target = $region9
    $region8: #{tpu_custom_call.1} parent=1 // pred_region
      %s30 = ssub.s32 4096, 4096
      %31 = vsyncadd [#allocation9], %s30
      %s32 = sshll.u32 [#allocation8], 4
      %s33 = int_to_ptr.vmem [resolvable:$true] %s32
      %38 = dma.hbm_to_vmem [thread:$0]  %s1, 4096, %s33, [#allocation9], 256, 256, 16
    $region9: #{tpu_custom_call.1} parent=1 // pred_fallthru
      _
    // Predicated region
    $region10: #{tpu_custom_call.1} parent=1 // pred_check
      _
    $region11: #{tpu_custom_call.1} parent=1 // pred_check_branch
      %40 = sbr.rel (0) target = $region13
    $region12: #{tpu_custom_call.1} parent=1 // pred_region
      _
    $region13: #{tpu_custom_call.1} parent=1 // pred_fallthru
      _
    // Predicated region
    $region14: #{tpu_custom_call.1} parent=1 // pred_check
      _
    $region15: #{tpu_custom_call.1} parent=1 // pred_check_branch
      %42 = sbr.rel (0) target = $region17
    $region16: #{tpu_custom_call.1} parent=1 // pred_region
      %s44 = ssub.s32 4096, 4096
      %45 = vsyncadd [#allocation12], %s44
      %s46 = sshll.u32 [#allocation11], 4
      %s47 = int_to_ptr.vmem [resolvable:$true] %s46
      %52 = dma.hbm_to_vmem [thread:$0]  %s3, 4096, %s47, [#allocation12], 256, 256, 16
    $region17: #{tpu_custom_call.1} parent=1 // pred_fallthru
      _
    // Predicated region
    $region18: #{tpu_custom_call.1} parent=1 // pred_check
      _
    $region19: #{tpu_custom_call.1} parent=1 // pred_check_branch
      %54 = sbr.rel (0) target = $region21
    $region20: #{tpu_custom_call.1} parent=1 // pred_region
      %s56 = ssub.s32 4096, 4096
      %57 = vsyncadd [#allocation12], %s56
      %s58 = sshll.u32 [#allocation13], 4
      %s59 = int_to_ptr.vmem [resolvable:$true] %s58
      %64 = dma.hbm_to_vmem [thread:$0]  %s4, 4096, %s59, [#allocation12], 256, 256, 16
    $region21: #{tpu_custom_call.1} parent=1 // pred_fallthru
      _
    // Predicated region
    $region22: #{tpu_custom_call.1} parent=1 // pred_check
      _
    $region23: #{tpu_custom_call.1} parent=1 // pred_check_branch
      %66 = sbr.rel (0) target = $region25
    $region24: #{tpu_custom_call.1} parent=1 // pred_region
      %s68 = ssub.s32 4096, 4096
      %69 = vsyncadd [#allocation15], %s68
      %s70 = sshll.u32 [#allocation14], 4
      %s71 = int_to_ptr.vmem [resolvable:$true] %s70
      %76 = dma.hbm_to_vmem [thread:$0]  %s5, 4096, %s71, [#allocation15], 256, 256, 16
    $region25: #{tpu_custom_call.1} parent=1 // pred_fallthru
      _
    // Predicated region
    $region26: #{tpu_custom_call.1} parent=1 // pred_check
      _
    $region27: #{tpu_custom_call.1} parent=1 // pred_check_branch
      %78 = sbr.rel (0) target = $region29
    $region28: #{tpu_custom_call.1} parent=1 // pred_region
      _
    $region29: #{tpu_custom_call.1} parent=1 // pred_fallthru
      _
    // Predicated region
    $region30: #{tpu_custom_call.1} parent=1 // pred_check
      _
    $region31: #{tpu_custom_call.1} parent=1 // pred_check_branch
      %80 = sbr.rel (0) target = $region33
    $region32: #{tpu_custom_call.1} parent=1 // pred_region
      %s82 = ssub.s32 3072, 3072
      %83 = vsyncadd [#allocation15], %s82
      %s84 = sshll.u32 [#allocation16], 4
      %s85 = int_to_ptr.vmem [resolvable:$true] %s84
      %90 = dma.hbm_to_vmem [thread:$0]  %s7, 3072, %s85, [#allocation15], 192, 192, 12
    $region33: #{tpu_custom_call.1} parent=1 // pred_fallthru
      _
    // Predicated region
    $region34: #{tpu_custom_call.1} parent=1 // pred_check
      _
    $region35: #{tpu_custom_call.1} parent=1 // pred_check_branch
      %92 = sbr.rel (0) target = $region37
    $region36: #{tpu_custom_call.1} parent=1 // pred_region
      _
    $region37: #{tpu_custom_call.1} parent=1 // pred_fallthru
      _
    // Predicated region
    $region38: #{tpu_custom_call.1} parent=1 // pred_check
      _
    $region39: #{tpu_custom_call.1} parent=1 // pred_check_branch
      %94 = sbr.rel (0) target = $region41
    $region40: #{tpu_custom_call.1} parent=1 // pred_region
      %s96 = ssub.s32 3072, 3072
      %97 = vsyncadd [#allocation18], %s96
      %s98 = sshll.u32 [#allocation17], 4
      %s99 = int_to_ptr.vmem [resolvable:$true] %s98
      %104 = dma.hbm_to_vmem [thread:$0]  %s9, 3072, %s99, [#allocation18], 64, 64, 4
    $region41: #{tpu_custom_call.1} parent=1 // pred_fallthru
      _
    // Predicated region
    $region42: #{tpu_custom_call.1} parent=1 // pred_check
      _
    $region43: #{tpu_custom_call.1} parent=1 // pred_check_branch
      %106 = sbr.rel (0) target = $region45
    $region44: #{tpu_custom_call.1} parent=1 // pred_region
      _
    $region45: #{tpu_custom_call.1} parent=1 // pred_fallthru
      _
    // Predicated region
    $region46: #{tpu_custom_call.1} parent=1 // pred_check
      _
    $region47: #{tpu_custom_call.1} parent=1 // pred_check_branch
      %108 = sbr.rel (0) target = $region49
    $region48: #{tpu_custom_call.1} parent=1 // pred_region
      %109 = dma.done [#allocation9], 4096
    $region49: #{tpu_custom_call.1} parent=1 // pred_fallthru
      _
    // Predicated region
    $region50: #{tpu_custom_call.1} parent=1 // pred_check
      _
    $region51: #{tpu_custom_call.1} parent=1 // pred_check_branch
      %111 = sbr.rel (0) target = $region53
    $region52: #{tpu_custom_call.1} parent=1 // pred_region
      %112 = dma.done [#allocation12], 4096
    $region53: #{tpu_custom_call.1} parent=1 // pred_fallthru
      _
    // Predicated region
    $region54: #{tpu_custom_call.1} parent=1 // pred_check
      _
    $region55: #{tpu_custom_call.1} parent=1 // pred_check_branch
      %114 = sbr.rel (0) target = $region57
    $region56: #{tpu_custom_call.1} parent=1 // pred_region
      %115 = dma.done [#allocation12], 4096
    $region57: #{tpu_custom_call.1} parent=1 // pred_fallthru
      _
    // Predicated region
    $region58: #{tpu_custom_call.1} parent=1 // pred_check
      _
    $region59: #{tpu_custom_call.1} parent=1 // pred_check_branch
      %117 = sbr.rel (0) target = $region61
    $region60: #{tpu_custom_call.1} parent=1 // pred_region
      %118 = dma.done [#allocation15], 4096
    $region61: #{tpu_custom_call.1} parent=1 // pred_fallthru
      _
    // Predicated region
    $region62: #{tpu_custom_call.1} parent=1 // pred_check
      _
    $region63: #{tpu_custom_call.1} parent=1 // pred_check_branch
      %120 = sbr.rel (0) target = $region65
    $region64: #{tpu_custom_call.1} parent=1 // pred_region
      %121 = dma.done [#allocation15], 3072
    $region65: #{tpu_custom_call.1} parent=1 // pred_fallthru
      _
    // Predicated region
    $region66: #{tpu_custom_call.1} parent=1 // pred_check
      _
    $region67: #{tpu_custom_call.1} parent=1 // pred_check_branch
      %123 = sbr.rel (0) target = $region69
    $region68: #{tpu_custom_call.1} parent=1 // pred_region
      %124 = dma.done [#allocation18], 3072
    $region69: #{tpu_custom_call.1} parent=1 // pred_fallthru
      _
    %p126 = scmp.eq.s32.totalorder 0, 0
    // Predicated region
    $region70: #{tpu_custom_call.1} parent=1 // pred_check
      %p127 = pneg %p126
    $region71: #{tpu_custom_call.1} parent=1 // pred_check_branch
      %129 = sbr.rel (%p127) target = $region73
    $region72: #{tpu_custom_call.1} parent=1 // pred_region
      %130 = vst [vmem:[#allocation4] sm:$0xff] 0.0
      %131 = vst [vmem:[#allocation5] sm:$0xff] 0.0
      %132 = vst [vmem:[#allocation6] sm:$0xff] 0.0
      %133 = vst [vmem:[#allocation7] sm:$0xff] 0.0
    $region73: #{tpu_custom_call.1} parent=1 // pred_fallthru
      _
    %v134 = vld [vmem:[%s0] sm:$0xff]
    %v135 = vld [vmem:[%s0 + $0x8] sm:$0xff]
    %v136 = vld [vmem:[%s0 + $0x10] sm:$0xff]
    %v137 = vld [vmem:[%s0 + $0x18] sm:$0xff]
    %v138 = vld [vmem:[%s0 + $0x20] sm:$0xff]
    %v139 = vld [vmem:[%s0 + $0x28] sm:$0xff]
    %v140 = vld [vmem:[%s0 + $0x30] sm:$0xff]
    %v141 = vld [vmem:[%s0 + $0x38] sm:$0xff]
    %v142 = vlaneseq
    %v143 = vand.u32 %v142, 127
    %144 = vset.pattern.permute.xlu0 0
    %145 = vperm.xlu0 %144, %v134
    %v146 = vpop.permute.xlu0 %145
    %147 = vset.pattern.permute.xlu0 0
    %148 = vperm.xlu0 %147, %v135
    %v149 = vpop.permute.xlu0 %148
    %150 = vset.pattern.permute.xlu0 0
    %151 = vperm.xlu0 %150, %v136
    %v152 = vpop.permute.xlu0 %151
    %153 = vset.pattern.permute.xlu0 0
    %154 = vperm.xlu0 %153, %v137
    %v155 = vpop.permute.xlu0 %154
    %156 = vset.pattern.permute.xlu0 0
    %157 = vperm.xlu0 %156, %v138
    %v158 = vpop.permute.xlu0 %157
    %159 = vset.pattern.permute.xlu0 0
    %160 = vperm.xlu0 %159, %v139
    %v161 = vpop.permute.xlu0 %160
    %162 = vset.pattern.permute.xlu0 0
    %163 = vperm.xlu0 %162, %v140
    %v164 = vpop.permute.xlu0 %163
    %165 = vset.pattern.permute.xlu0 0
    %166 = vperm.xlu0 %165, %v141
    %v167 = vpop.permute.xlu0 %166
    %vm168 = vcmp.eq.s32.totalorder %v146, %v143
    %vm169 = vcmp.eq.s32.totalorder %v149, %v143
    %vm170 = vcmp.eq.s32.totalorder %v152, %v143
    %vm171 = vcmp.eq.s32.totalorder %v155, %v143
    %vm172 = vcmp.eq.s32.totalorder %v158, %v143
    %vm173 = vcmp.eq.s32.totalorder %v161, %v143
    %vm174 = vcmp.eq.s32.totalorder %v164, %v143
    %vm175 = vcmp.eq.s32.totalorder %v167, %v143
    %v176 = vsel %vm168, 1, 0
    %v177 = vsel %vm169, 1, 0
    %v178 = vsel %vm170, 1, 0
    %v179 = vsel %vm171, 1, 0
    %v180 = vsel %vm172, 1, 0
    %v181 = vsel %vm173, 1, 0
    %v182 = vsel %vm174, 1, 0
    %v183 = vsel %vm175, 1, 0
    %v184 = vcvt.s32.f32 %v176
    %v185 = vcvt.s32.f32 %v177
    %v186 = vcvt.s32.f32 %v178
    %v187 = vcvt.s32.f32 %v179
    %v188 = vcvt.s32.f32 %v180
    %v189 = vcvt.s32.f32 %v181
    %v190 = vcvt.s32.f32 %v182
    %v191 = vcvt.s32.f32 %v183
    %v192 = vpack.c.bf16 %v185, %v184
    %v193 = vpack.c.bf16 %v187, %v186
    %v194 = vpack.c.bf16 %v189, %v188
    %v195 = vpack.c.bf16 %v191, %v190
    %v196 = vld [vmem:[#allocation8] sm:$0xff]
    %v197 = vld [vmem:[#allocation8 + $0x8] sm:$0xff]
    %v198 = vld [vmem:[#allocation8 + $0x10] sm:$0xff]
    %v199 = vld [vmem:[#allocation8 + $0x18] sm:$0xff]
    %v200 = vld [vmem:[#allocation8 + $0x20] sm:$0xff]
    %v201 = vld [vmem:[#allocation8 + $0x28] sm:$0xff]
    %v202 = vld [vmem:[#allocation8 + $0x30] sm:$0xff]
    %v203 = vld [vmem:[#allocation8 + $0x38] sm:$0xff]
    %v204 = vld [vmem:[#allocation8 + $0x40] sm:$0xff]
    %v205 = vld [vmem:[#allocation8 + $0x48] sm:$0xff]
    %v206 = vld [vmem:[#allocation8 + $0x50] sm:$0xff]
    %v207 = vld [vmem:[#allocation8 + $0x58] sm:$0xff]
    %v208 = vld [vmem:[#allocation8 + $0x60] sm:$0xff]
    %v209 = vld [vmem:[#allocation8 + $0x68] sm:$0xff]
    %v210 = vld [vmem:[#allocation8 + $0x70] sm:$0xff]
    %v211 = vld [vmem:[#allocation8 + $0x78] sm:$0xff]
    %v212 = vld [vmem:[#allocation8 + $0x80] sm:$0xff]
    %v213 = vld [vmem:[#allocation8 + $0x88] sm:$0xff]
    %v214 = vld [vmem:[#allocation8 + $0x90] sm:$0xff]
    %v215 = vld [vmem:[#allocation8 + $0x98] sm:$0xff]
    %v216 = vld [vmem:[#allocation8 + $0xa0] sm:$0xff]
    %v217 = vld [vmem:[#allocation8 + $0xa8] sm:$0xff]
    %v218 = vld [vmem:[#allocation8 + $0xb0] sm:$0xff]
    %v219 = vld [vmem:[#allocation8 + $0xb8] sm:$0xff]
    %v220 = vld [vmem:[#allocation8 + $0xc0] sm:$0xff]
    %v221 = vld [vmem:[#allocation8 + $0xc8] sm:$0xff]
    %v222 = vld [vmem:[#allocation8 + $0xd0] sm:$0xff]
    %v223 = vld [vmem:[#allocation8 + $0xd8] sm:$0xff]
    %v224 = vld [vmem:[#allocation8 + $0xe0] sm:$0xff]
    %v225 = vld [vmem:[#allocation8 + $0xe8] sm:$0xff]
    %v226 = vld [vmem:[#allocation8 + $0xf0] sm:$0xff]
    %v227 = vld [vmem:[#allocation8 + $0xf8] sm:$0xff]
    %v228 = vld [vmem:[%s2] sm:$0xf]
    %v230 = vlaneseq
    %v231 = vshrl.u32 %v230, 7
    %v232 = vsub.s32 0, %v231
    %v233 = vrot.slane %v228, %v232
    %v234 = vlaneseq
    %v235 = vshrl.u32 %v234, 7
    %v236 = vsub.s32 1, %v235
    %v237 = vrot.slane %v228, %v236
    %v238 = vlaneseq
    %v239 = vshrl.u32 %v238, 7
    %v240 = vsub.s32 2, %v239
    %v241 = vrot.slane %v228, %v240
    %v242 = vlaneseq
    %v243 = vshrl.u32 %v242, 7
    %v244 = vsub.s32 3, %v243
    %v245 = vrot.slane %v228, %v244
    %v282 = vunpack.c.l.b16 %v196
    %v283 = vunpack.c.h.b16 %v196
    %v284 = vunpack.c.l.b16 %v197
    %v285 = vunpack.c.h.b16 %v197
    %v286 = vunpack.c.l.b16 %v198
    %v287 = vunpack.c.h.b16 %v198
    %v288 = vunpack.c.l.b16 %v199
    %v289 = vunpack.c.h.b16 %v199
    %v290 = vunpack.c.l.b16 %v200
    %v291 = vunpack.c.h.b16 %v200
    %v292 = vunpack.c.l.b16 %v201
    %v293 = vunpack.c.h.b16 %v201
    %v294 = vunpack.c.l.b16 %v202
    %v295 = vunpack.c.h.b16 %v202
    %v296 = vunpack.c.l.b16 %v203
    %v297 = vunpack.c.h.b16 %v203
    %v298 = vunpack.c.l.b16 %v204
    %v299 = vunpack.c.h.b16 %v204
    %v300 = vunpack.c.l.b16 %v205
    %v301 = vunpack.c.h.b16 %v205
    %v302 = vunpack.c.l.b16 %v206
    %v303 = vunpack.c.h.b16 %v206
    %v304 = vunpack.c.l.b16 %v207
    %v305 = vunpack.c.h.b16 %v207
    %v306 = vunpack.c.l.b16 %v208
    %v307 = vunpack.c.h.b16 %v208
    %v308 = vunpack.c.l.b16 %v209
    %v309 = vunpack.c.h.b16 %v209
    %v310 = vunpack.c.l.b16 %v210
    %v311 = vunpack.c.h.b16 %v210
    %v312 = vunpack.c.l.b16 %v211
    %v313 = vunpack.c.h.b16 %v211
    %v314 = vunpack.c.l.b16 %v212
    %v315 = vunpack.c.h.b16 %v212
    %v316 = vunpack.c.l.b16 %v213
    %v317 = vunpack.c.h.b16 %v213
    %v318 = vunpack.c.l.b16 %v214
    %v319 = vunpack.c.h.b16 %v214
    %v320 = vunpack.c.l.b16 %v215
    %v321 = vunpack.c.h.b16 %v215
    %v322 = vunpack.c.l.b16 %v216
    %v323 = vunpack.c.h.b16 %v216
    %v324 = vunpack.c.l.b16 %v217
    %v325 = vunpack.c.h.b16 %v217
    %v326 = vunpack.c.l.b16 %v218
    %v327 = vunpack.c.h.b16 %v218
    %v328 = vunpack.c.l.b16 %v219
    %v329 = vunpack.c.h.b16 %v219
    %v330 = vunpack.c.l.b16 %v220
    %v331 = vunpack.c.h.b16 %v220
    %v332 = vunpack.c.l.b16 %v221
    %v333 = vunpack.c.h.b16 %v221
    %v334 = vunpack.c.l.b16 %v222
    %v335 = vunpack.c.h.b16 %v222
    %v336 = vunpack.c.l.b16 %v223
    %v337 = vunpack.c.h.b16 %v223
    %v338 = vunpack.c.l.b16 %v224
    %v339 = vunpack.c.h.b16 %v224
    %v340 = vunpack.c.l.b16 %v225
    %v341 = vunpack.c.h.b16 %v225
    %v342 = vunpack.c.l.b16 %v226
    %v343 = vunpack.c.h.b16 %v226
    %v344 = vunpack.c.l.b16 %v227
    %v345 = vunpack.c.h.b16 %v227
    %v346 = vpack.c.b16 %v286, %v282
    %v347 = vpack.c.b16 %v287, %v283
    %v348 = vpack.c.b16 %v288, %v284
    %v349 = vpack.c.b16 %v289, %v285
    %v350 = vpack.c.b16 %v294, %v290
    %v351 = vpack.c.b16 %v295, %v291
    %v352 = vpack.c.b16 %v296, %v292
    %v353 = vpack.c.b16 %v297, %v293
    %v354 = vpack.c.b16 %v302, %v298
    %v355 = vpack.c.b16 %v303, %v299
    %v356 = vpack.c.b16 %v304, %v300
    %v357 = vpack.c.b16 %v305, %v301
    %v358 = vpack.c.b16 %v310, %v306
    %v359 = vpack.c.b16 %v311, %v307
    %v360 = vpack.c.b16 %v312, %v308
    %v361 = vpack.c.b16 %v313, %v309
    %v362 = vpack.c.b16 %v318, %v314
    %v363 = vpack.c.b16 %v319, %v315
    %v364 = vpack.c.b16 %v320, %v316
    %v365 = vpack.c.b16 %v321, %v317
    %v366 = vpack.c.b16 %v326, %v322
    %v367 = vpack.c.b16 %v327, %v323
    %v368 = vpack.c.b16 %v328, %v324
    %v369 = vpack.c.b16 %v329, %v325
    %v370 = vpack.c.b16 %v334, %v330
    %v371 = vpack.c.b16 %v335, %v331
    %v372 = vpack.c.b16 %v336, %v332
    %v373 = vpack.c.b16 %v337, %v333
    %v374 = vpack.c.b16 %v342, %v338
    %v375 = vpack.c.b16 %v343, %v339
    %v376 = vpack.c.b16 %v344, %v340
    %v377 = vpack.c.b16 %v345, %v341
    %410 = vmatprep.subr.bf16.mxu0 %v375
    %411 = vmatpush1.bf16.msra.mxu0 %v374
    %412 = vmatprep.subr.bf16.mxu0 %v371
    %413 = vmatpush1.bf16.msra.mxu0 %v370
    %414 = vmatprep.subr.bf16.mxu0 %v367
    %415 = vmatpush1.bf16.msra.mxu0 %v366
    %416 = vmatprep.subr.bf16.mxu0 %v363
    %417 = vmatpush1.bf16.msra.mxu0 %v362
    %418 = vmatprep.subr.bf16.mxu0 %v359
    %419 = vmatpush1.bf16.msra.mxu0 %v358
    %420 = vmatprep.subr.bf16.mxu0 %v355
    %421 = vmatpush1.bf16.msra.mxu0 %v354
    %422 = vmatprep.subr.bf16.mxu0 %v351
    %423 = vmatpush1.bf16.msra.mxu0 %v350
    %424 = vmatprep.subr.bf16.mxu0 %v347
    %425 = vmatpush1.bf16.msra.mxu0 %v346
    %426 = vmatprep.subr.bf16.mxu0 0
    %427 = vmatpush2.bf16.msra.mxu0 0
    %428 = vmatprep.subr.bf16.mxu0 0
    %429 = vmatpush2.bf16.msra.mxu0 0
    %430 = vmatprep.subr.bf16.mxu0 0
    %431 = vmatpush2.bf16.msra.mxu0 0
    %432 = vmatprep.subr.bf16.mxu0 0
    %433 = vmatpush2.bf16.msra.mxu0 0
    %434 = vmatprep.subr.bf16.mxu0 0
    %435 = vmatpush2.bf16.msra.mxu0 0
    %436 = vmatprep.subr.bf16.mxu0 0
    %437 = vmatpush2.bf16.msra.mxu0 0
    %438 = vmatprep.subr.bf16.mxu0 0
    %439 = vmatpush2.bf16.msra.mxu0 0
    %440 = vmatprep.subr.bf16.mxu0 0
    %441 = vmatpush2.bf16.msra.mxu0 0
    %442 = vmatprep.mubr.bf16.mxu0 0
    %443 = vmatmul.mubr.bf16.gmra.mxu0 %v192
    %v444 = vpop.f32.mrf.mxu0
    %v445 = vadd.f32 %v233, %v444
    %v446 = vpop.f32.mrf.mxu0
    %v447 = vadd.f32 %v237, %v446
    %v448 = vpop.f32.mrf.mxu0
    %v449 = vadd.f32 %v233, %v448
    %v450 = vpop.f32.mrf.mxu0
    %v451 = vadd.f32 %v237, %v450
    %452 = vmatprep.mubr.bf16.mxu0 0
    %453 = vmatmul.mubr.bf16.gmra.mxu0 %v193
    %v454 = vpop.f32.mrf.mxu0
    %v455 = vadd.f32 %v233, %v454
    %v456 = vpop.f32.mrf.mxu0
    %v457 = vadd.f32 %v237, %v456
    %v458 = vpop.f32.mrf.mxu0
    %v459 = vadd.f32 %v233, %v458
    %v460 = vpop.f32.mrf.mxu0
    %v461 = vadd.f32 %v237, %v460
    %462 = vmatprep.mubr.bf16.mxu0 0
    %463 = vmatmul.mubr.bf16.gmra.mxu0 %v194
    %v464 = vpop.f32.mrf.mxu0
    %v465 = vadd.f32 %v233, %v464
    %v466 = vpop.f32.mrf.mxu0
    %v467 = vadd.f32 %v237, %v466
    %v468 = vpop.f32.mrf.mxu0
    %v469 = vadd.f32 %v233, %v468
    %v470 = vpop.f32.mrf.mxu0
    %v471 = vadd.f32 %v237, %v470
    %472 = vmatprep.mubr.bf16.mxu0 0
    %473 = vmatmul.mubr.bf16.gmra.mxu0 %v195
    %v474 = vpop.f32.mrf.mxu0
    %v475 = vadd.f32 %v233, %v474
    %v476 = vpop.f32.mrf.mxu0
    %v477 = vadd.f32 %v237, %v476
    %v478 = vpop.f32.mrf.mxu0
    %v479 = vadd.f32 %v233, %v478
    %v480 = vpop.f32.mrf.mxu0
    %v481 = vadd.f32 %v237, %v480
    %482 = vdwg.mxu0
    %483 = vmatprep.subr.bf16.mxu0 %v377
    %484 = vmatpush1.bf16.msra.mxu0 %v376
    %485 = vmatprep.subr.bf16.mxu0 %v373
    %486 = vmatpush1.bf16.msra.mxu0 %v372
    %487 = vmatprep.subr.bf16.mxu0 %v369
    %488 = vmatpush1.bf16.msra.mxu0 %v368
    %489 = vmatprep.subr.bf16.mxu0 %v365
    %490 = vmatpush1.bf16.msra.mxu0 %v364
    %491 = vmatprep.subr.bf16.mxu0 %v361
    %492 = vmatpush1.bf16.msra.mxu0 %v360
    %493 = vmatprep.subr.bf16.mxu0 %v357
    %494 = vmatpush1.bf16.msra.mxu0 %v356
    %495 = vmatprep.subr.bf16.mxu0 %v353
    %496 = vmatpush1.bf16.msra.mxu0 %v352
    %497 = vmatprep.subr.bf16.mxu0 %v349
    %498 = vmatpush1.bf16.msra.mxu0 %v348
    %499 = vmatprep.subr.bf16.mxu0 0
    %500 = vmatpush2.bf16.msra.mxu0 0
    %501 = vmatprep.subr.bf16.mxu0 0
    %502 = vmatpush2.bf16.msra.mxu0 0
    %503 = vmatprep.subr.bf16.mxu0 0
    %504 = vmatpush2.bf16.msra.mxu0 0
    %505 = vmatprep.subr.bf16.mxu0 0
    %506 = vmatpush2.bf16.msra.mxu0 0
    %507 = vmatprep.subr.bf16.mxu0 0
    %508 = vmatpush2.bf16.msra.mxu0 0
    %509 = vmatprep.subr.bf16.mxu0 0
    %510 = vmatpush2.bf16.msra.mxu0 0
    %511 = vmatprep.subr.bf16.mxu0 0
    %512 = vmatpush2.bf16.msra.mxu0 0
    %513 = vmatprep.subr.bf16.mxu0 0
    %514 = vmatpush2.bf16.msra.mxu0 0
    %515 = vmatprep.mubr.bf16.mxu0 0
    %516 = vmatmul.mubr.bf16.gmra.mxu0 %v192
    %v517 = vpop.f32.mrf.mxu0
    %v518 = vadd.f32 %v241, %v517
    %v519 = vpop.f32.mrf.mxu0
    %v520 = vadd.f32 %v245, %v519
    %v521 = vpop.f32.mrf.mxu0
    %v522 = vadd.f32 %v241, %v521
    %v523 = vpop.f32.mrf.mxu0
    %v524 = vadd.f32 %v245, %v523
    %525 = vmatprep.mubr.bf16.mxu0 0
    %526 = vmatmul.mubr.bf16.gmra.mxu0 %v193
    %v527 = vpop.f32.mrf.mxu0
    %v528 = vadd.f32 %v241, %v527
    %v529 = vpop.f32.mrf.mxu0
    %v530 = vadd.f32 %v245, %v529
    %v531 = vpop.f32.mrf.mxu0
    %v532 = vadd.f32 %v241, %v531
    %v533 = vpop.f32.mrf.mxu0
    %v534 = vadd.f32 %v245, %v533
    %535 = vmatprep.mubr.bf16.mxu0 0
    %536 = vmatmul.mubr.bf16.gmra.mxu0 %v194
    %v537 = vpop.f32.mrf.mxu0
    %v538 = vadd.f32 %v241, %v537
    %v539 = vpop.f32.mrf.mxu0
    %v540 = vadd.f32 %v245, %v539
    %v541 = vpop.f32.mrf.mxu0
    %v542 = vadd.f32 %v241, %v541
    %v543 = vpop.f32.mrf.mxu0
    %v544 = vadd.f32 %v245, %v543
    %545 = vmatprep.mubr.bf16.mxu0 0
    %546 = vmatmul.mubr.bf16.gmra.mxu0 %v195
    %v547 = vpop.f32.mrf.mxu0
    %v548 = vadd.f32 %v241, %v547
    %v549 = vpop.f32.mrf.mxu0
    %v550 = vadd.f32 %v245, %v549
    %v551 = vpop.f32.mrf.mxu0
    %v552 = vadd.f32 %v241, %v551
    %v553 = vpop.f32.mrf.mxu0
    %v554 = vadd.f32 %v245, %v553
    %555 = vdwg.mxu0
    %556 = vst [vmem:[#allocation2] sm:$0xff] %v445
    %557 = vst [vmem:[#allocation2 + $0x8] sm:$0xff] %v447
    %558 = vst [vmem:[#allocation2 + $0x10] sm:$0xff] %v518
    %559 = vst [vmem:[#allocation2 + $0x18] sm:$0xff] %v520
    %560 = vst [vmem:[#allocation2 + $0x20] sm:$0xff] %v449
    %561 = vst [vmem:[#allocation2 + $0x28] sm:$0xff] %v451
    %562 = vst [vmem:[#allocation2 + $0x30] sm:$0xff] %v522
    %563 = vst [vmem:[#allocation2 + $0x38] sm:$0xff] %v524
    %564 = vst [vmem:[#allocation2 + $0x40] sm:$0xff] %v455
    %565 = vst [vmem:[#allocation2 + $0x48] sm:$0xff] %v457
    %566 = vst [vmem:[#allocation2 + $0x50] sm:$0xff] %v528
    %567 = vst [vmem:[#allocation2 + $0x58] sm:$0xff] %v530
    %568 = vst [vmem:[#allocation2 + $0x60] sm:$0xff] %v459
    %569 = vst [vmem:[#allocation2 + $0x68] sm:$0xff] %v461
    %570 = vst [vmem:[#allocation2 + $0x70] sm:$0xff] %v532
    %571 = vst [vmem:[#allocation2 + $0x78] sm:$0xff] %v534
    %572 = vst [vmem:[#allocation2 + $0x80] sm:$0xff] %v465
    %573 = vst [vmem:[#allocation2 + $0x88] sm:$0xff] %v467
    %574 = vst [vmem:[#allocation2 + $0x90] sm:$0xff] %v538
    %575 = vst [vmem:[#allocation2 + $0x98] sm:$0xff] %v540
    %576 = vst [vmem:[#allocation2 + $0xa0] sm:$0xff] %v469
    %577 = vst [vmem:[#allocation2 + $0xa8] sm:$0xff] %v471
    %578 = vst [vmem:[#allocation2 + $0xb0] sm:$0xff] %v542
    %579 = vst [vmem:[#allocation2 + $0xb8] sm:$0xff] %v544
    %580 = vst [vmem:[#allocation2 + $0xc0] sm:$0xff] %v475
    %581 = vst [vmem:[#allocation2 + $0xc8] sm:$0xff] %v477
    %582 = vst [vmem:[#allocation2 + $0xd0] sm:$0xff] %v548
    %583 = vst [vmem:[#allocation2 + $0xd8] sm:$0xff] %v550
    %584 = vst [vmem:[#allocation2 + $0xe0] sm:$0xff] %v479
    %585 = vst [vmem:[#allocation2 + $0xe8] sm:$0xff] %v481
    %586 = vst [vmem:[#allocation2 + $0xf0] sm:$0xff] %v552
    %587 = vst [vmem:[#allocation2 + $0xf8] sm:$0xff] %v554
    %v588 = vld [vmem:[#allocation11] sm:$0xff]
    %v589 = vld [vmem:[#allocation11 + $0x8] sm:$0xff]
    %v590 = vld [vmem:[#allocation11 + $0x10] sm:$0xff]
    %v591 = vld [vmem:[#allocation11 + $0x18] sm:$0xff]
    %v592 = vld [vmem:[#allocation11 + $0x20] sm:$0xff]
    %v593 = vld [vmem:[#allocation11 + $0x28] sm:$0xff]
    %v594 = vld [vmem:[#allocation11 + $0x30] sm:$0xff]
    %v595 = vld [vmem:[#allocation11 + $0x38] sm:$0xff]
    %v596 = vld [vmem:[#allocation11 + $0x40] sm:$0xff]
    %v597 = vld [vmem:[#allocation11 + $0x48] sm:$0xff]
    %v598 = vld [vmem:[#allocation11 + $0x50] sm:$0xff]
    %v599 = vld [vmem:[#allocation11 + $0x58] sm:$0xff]
    %v600 = vld [vmem:[#allocation11 + $0x60] sm:$0xff]
    %v601 = vld [vmem:[#allocation11 + $0x68] sm:$0xff]
    %v602 = vld [vmem:[#allocation11 + $0x70] sm:$0xff]
    %v603 = vld [vmem:[#allocation11 + $0x78] sm:$0xff]
    %v604 = vld [vmem:[#allocation11 + $0x80] sm:$0xff]
    %v605 = vld [vmem:[#allocation11 + $0x88] sm:$0xff]
    %v606 = vld [vmem:[#allocation11 + $0x90] sm:$0xff]
    %v607 = vld [vmem:[#allocation11 + $0x98] sm:$0xff]
    %v608 = vld [vmem:[#allocation11 + $0xa0] sm:$0xff]
    %v609 = vld [vmem:[#allocation11 + $0xa8] sm:$0xff]
    %v610 = vld [vmem:[#allocation11 + $0xb0] sm:$0xff]
    %v611 = vld [vmem:[#allocation11 + $0xb8] sm:$0xff]
    %v612 = vld [vmem:[#allocation11 + $0xc0] sm:$0xff]
    %v613 = vld [vmem:[#allocation11 + $0xc8] sm:$0xff]
    %v614 = vld [vmem:[#allocation11 + $0xd0] sm:$0xff]
    %v615 = vld [vmem:[#allocation11 + $0xd8] sm:$0xff]
    %v616 = vld [vmem:[#allocation11 + $0xe0] sm:$0xff]
    %v617 = vld [vmem:[#allocation11 + $0xe8] sm:$0xff]
    %v618 = vld [vmem:[#allocation11 + $0xf0] sm:$0xff]
    %v619 = vld [vmem:[#allocation11 + $0xf8] sm:$0xff]
    %v620 = vld [vmem:[#allocation13] sm:$0xff]
    %v621 = vld [vmem:[#allocation13 + $0x8] sm:$0xff]
    %v622 = vld [vmem:[#allocation13 + $0x10] sm:$0xff]
    %v623 = vld [vmem:[#allocation13 + $0x18] sm:$0xff]
    %v624 = vld [vmem:[#allocation13 + $0x20] sm:$0xff]
    %v625 = vld [vmem:[#allocation13 + $0x28] sm:$0xff]
    %v626 = vld [vmem:[#allocation13 + $0x30] sm:$0xff]
    %v627 = vld [vmem:[#allocation13 + $0x38] sm:$0xff]
    %v628 = vld [vmem:[#allocation13 + $0x40] sm:$0xff]
    %v629 = vld [vmem:[#allocation13 + $0x48] sm:$0xff]
    %v630 = vld [vmem:[#allocation13 + $0x50] sm:$0xff]
    %v631 = vld [vmem:[#allocation13 + $0x58] sm:$0xff]
    %v632 = vld [vmem:[#allocation13 + $0x60] sm:$0xff]
    %v633 = vld [vmem:[#allocation13 + $0x68] sm:$0xff]
    %v634 = vld [vmem:[#allocation13 + $0x70] sm:$0xff]
    %v635 = vld [vmem:[#allocation13 + $0x78] sm:$0xff]
    %v636 = vld [vmem:[#allocation13 + $0x80] sm:$0xff]
    %v637 = vld [vmem:[#allocation13 + $0x88] sm:$0xff]
    %v638 = vld [vmem:[#allocation13 + $0x90] sm:$0xff]
    %v639 = vld [vmem:[#allocation13 + $0x98] sm:$0xff]
    %v640 = vld [vmem:[#allocation13 + $0xa0] sm:$0xff]
    %v641 = vld [vmem:[#allocation13 + $0xa8] sm:$0xff]
    %v642 = vld [vmem:[#allocation13 + $0xb0] sm:$0xff]
    %v643 = vld [vmem:[#allocation13 + $0xb8] sm:$0xff]
    %v644 = vld [vmem:[#allocation13 + $0xc0] sm:$0xff]
    %v645 = vld [vmem:[#allocation13 + $0xc8] sm:$0xff]
    %v646 = vld [vmem:[#allocation13 + $0xd0] sm:$0xff]
    %v647 = vld [vmem:[#allocation13 + $0xd8] sm:$0xff]
    %v648 = vld [vmem:[#allocation13 + $0xe0] sm:$0xff]
    %v649 = vld [vmem:[#allocation13 + $0xe8] sm:$0xff]
    %v650 = vld [vmem:[#allocation13 + $0xf0] sm:$0xff]
    %v651 = vld [vmem:[#allocation13 + $0xf8] sm:$0xff]
    %v652 = vld [vmem:[#allocation14] sm:$0xff]
    %v653 = vld [vmem:[#allocation14 + $0x8] sm:$0xff]
    %v654 = vld [vmem:[#allocation14 + $0x10] sm:$0xff]
    %v655 = vld [vmem:[#allocation14 + $0x18] sm:$0xff]
    %v656 = vld [vmem:[#allocation14 + $0x20] sm:$0xff]
    %v657 = vld [vmem:[#allocation14 + $0x28] sm:$0xff]
    %v658 = vld [vmem:[#allocation14 + $0x30] sm:$0xff]
    %v659 = vld [vmem:[#allocation14 + $0x38] sm:$0xff]
    %v660 = vld [vmem:[#allocation14 + $0x40] sm:$0xff]
    %v661 = vld [vmem:[#allocation14 + $0x48] sm:$0xff]
    %v662 = vld [vmem:[#allocation14 + $0x50] sm:$0xff]
    %v663 = vld [vmem:[#allocation14 + $0x58] sm:$0xff]
    %v664 = vld [vmem:[#allocation14 + $0x60] sm:$0xff]
    %v665 = vld [vmem:[#allocation14 + $0x68] sm:$0xff]
    %v666 = vld [vmem:[#allocation14 + $0x70] sm:$0xff]
    %v667 = vld [vmem:[#allocation14 + $0x78] sm:$0xff]
    %v668 = vld [vmem:[#allocation14 + $0x80] sm:$0xff]
    %v669 = vld [vmem:[#allocation14 + $0x88] sm:$0xff]
    %v670 = vld [vmem:[#allocation14 + $0x90] sm:$0xff]
    %v671 = vld [vmem:[#allocation14 + $0x98] sm:$0xff]
    %v672 = vld [vmem:[#allocation14 + $0xa0] sm:$0xff]
    %v673 = vld [vmem:[#allocation14 + $0xa8] sm:$0xff]
    %v674 = vld [vmem:[#allocation14 + $0xb0] sm:$0xff]
    %v675 = vld [vmem:[#allocation14 + $0xb8] sm:$0xff]
    %v676 = vld [vmem:[#allocation14 + $0xc0] sm:$0xff]
    %v677 = vld [vmem:[#allocation14 + $0xc8] sm:$0xff]
    %v678 = vld [vmem:[#allocation14 + $0xd0] sm:$0xff]
    %v679 = vld [vmem:[#allocation14 + $0xd8] sm:$0xff]
    %v680 = vld [vmem:[#allocation14 + $0xe0] sm:$0xff]
    %v681 = vld [vmem:[#allocation14 + $0xe8] sm:$0xff]
    %v682 = vld [vmem:[#allocation14 + $0xf0] sm:$0xff]
    %v683 = vld [vmem:[#allocation14 + $0xf8] sm:$0xff]
    %v684 = vld [vmem:[%s6] sm:$0xf]
    %v685 = vld [vmem:[#allocation4] sm:$0xff]
    %v686 = vld [vmem:[#allocation5] sm:$0xff]
    %v687 = vld [vmem:[#allocation6] sm:$0xff]
    %v688 = vld [vmem:[#allocation7] sm:$0xff]
    %v689 = vpack.c.bf16 %v687, %v687
    %v691 = vlaneseq
    %v692 = vshrl.u32 %v691, 7
    %v693 = vsub.s32 0, %v692
    %v694 = vrot.slane %v684, %v693
    %v695 = vlaneseq
    %v696 = vshrl.u32 %v695, 7
    %v697 = vsub.s32 1, %v696
    %v698 = vrot.slane %v684, %v697
    %v699 = vlaneseq
    %v700 = vshrl.u32 %v699, 7
    %v701 = vsub.s32 2, %v700
    %v702 = vrot.slane %v684, %v701
    %v703 = vlaneseq
    %v704 = vshrl.u32 %v703, 7
    %v705 = vsub.s32 3, %v704
    %v706 = vrot.slane %v684, %v705
    %v743 = vunpack.c.l.b16 %v652
    %v744 = vunpack.c.h.b16 %v652
    %v745 = vunpack.c.l.b16 %v653
    %v746 = vunpack.c.h.b16 %v653
    %v747 = vunpack.c.l.b16 %v654
    %v748 = vunpack.c.h.b16 %v654
    %v749 = vunpack.c.l.b16 %v655
    %v750 = vunpack.c.h.b16 %v655
    %v751 = vunpack.c.l.b16 %v656
    %v752 = vunpack.c.h.b16 %v656
    %v753 = vunpack.c.l.b16 %v657
    %v754 = vunpack.c.h.b16 %v657
    %v755 = vunpack.c.l.b16 %v658
    %v756 = vunpack.c.h.b16 %v658
    %v757 = vunpack.c.l.b16 %v659
    %v758 = vunpack.c.h.b16 %v659
    %v759 = vunpack.c.l.b16 %v660
    %v760 = vunpack.c.h.b16 %v660
    %v761 = vunpack.c.l.b16 %v661
    %v762 = vunpack.c.h.b16 %v661
    %v763 = vunpack.c.l.b16 %v662
    %v764 = vunpack.c.h.b16 %v662
    %v765 = vunpack.c.l.b16 %v663
    %v766 = vunpack.c.h.b16 %v663
    %v767 = vunpack.c.l.b16 %v664
    %v768 = vunpack.c.h.b16 %v664
    %v769 = vunpack.c.l.b16 %v665
    %v770 = vunpack.c.h.b16 %v665
    %v771 = vunpack.c.l.b16 %v666
    %v772 = vunpack.c.h.b16 %v666
    %v773 = vunpack.c.l.b16 %v667
    %v774 = vunpack.c.h.b16 %v667
    %v775 = vunpack.c.l.b16 %v668
    %v776 = vunpack.c.h.b16 %v668
    %v777 = vunpack.c.l.b16 %v669
    %v778 = vunpack.c.h.b16 %v669
    %v779 = vunpack.c.l.b16 %v670
    %v780 = vunpack.c.h.b16 %v670
    %v781 = vunpack.c.l.b16 %v671
    %v782 = vunpack.c.h.b16 %v671
    %v783 = vunpack.c.l.b16 %v672
    %v784 = vunpack.c.h.b16 %v672
    %v785 = vunpack.c.l.b16 %v673
    %v786 = vunpack.c.h.b16 %v673
    %v787 = vunpack.c.l.b16 %v674
    %v788 = vunpack.c.h.b16 %v674
    %v789 = vunpack.c.l.b16 %v675
    %v790 = vunpack.c.h.b16 %v675
    %v791 = vunpack.c.l.b16 %v676
    %v792 = vunpack.c.h.b16 %v676
    %v793 = vunpack.c.l.b16 %v677
    %v794 = vunpack.c.h.b16 %v677
    %v795 = vunpack.c.l.b16 %v678
    %v796 = vunpack.c.h.b16 %v678
    %v797 = vunpack.c.l.b16 %v679
    %v798 = vunpack.c.h.b16 %v679
    %v799 = vunpack.c.l.b16 %v680
    %v800 = vunpack.c.h.b16 %v680
    %v801 = vunpack.c.l.b16 %v681
    %v802 = vunpack.c.h.b16 %v681
    %v803 = vunpack.c.l.b16 %v682
    %v804 = vunpack.c.h.b16 %v682
    %v805 = vunpack.c.l.b16 %v683
    %v806 = vunpack.c.h.b16 %v683
    %v807 = vpack.c.b16 %v747, %v743
    %v808 = vpack.c.b16 %v748, %v744
    %v809 = vpack.c.b16 %v749, %v745
    %v810 = vpack.c.b16 %v750, %v746
    %v811 = vpack.c.b16 %v755, %v751
    %v812 = vpack.c.b16 %v756, %v752
    %v813 = vpack.c.b16 %v757, %v753
    %v814 = vpack.c.b16 %v758, %v754
    %v815 = vpack.c.b16 %v763, %v759
    %v816 = vpack.c.b16 %v764, %v760
    %v817 = vpack.c.b16 %v765, %v761
    %v818 = vpack.c.b16 %v766, %v762
    %v819 = vpack.c.b16 %v771, %v767
    %v820 = vpack.c.b16 %v772, %v768
    %v821 = vpack.c.b16 %v773, %v769
    %v822 = vpack.c.b16 %v774, %v770
    %v823 = vpack.c.b16 %v779, %v775
    %v824 = vpack.c.b16 %v780, %v776
    %v825 = vpack.c.b16 %v781, %v777
    %v826 = vpack.c.b16 %v782, %v778
    %v827 = vpack.c.b16 %v787, %v783
    %v828 = vpack.c.b16 %v788, %v784
    %v829 = vpack.c.b16 %v789, %v785
    %v830 = vpack.c.b16 %v790, %v786
    %v831 = vpack.c.b16 %v795, %v791
    %v832 = vpack.c.b16 %v796, %v792
    %v833 = vpack.c.b16 %v797, %v793
    %v834 = vpack.c.b16 %v798, %v794
    %v835 = vpack.c.b16 %v803, %v799
    %v836 = vpack.c.b16 %v804, %v800
    %v837 = vpack.c.b16 %v805, %v801
    %v838 = vpack.c.b16 %v806, %v802
    %871 = vmatprep.subr.bf16.mxu0 %v836
    %872 = vmatpush1.bf16.msra.mxu0 %v835
    %873 = vmatprep.subr.bf16.mxu0 %v832
    %874 = vmatpush1.bf16.msra.mxu0 %v831
    %875 = vmatprep.subr.bf16.mxu0 %v828
    %876 = vmatpush1.bf16.msra.mxu0 %v827
    %877 = vmatprep.subr.bf16.mxu0 %v824
    %878 = vmatpush1.bf16.msra.mxu0 %v823
    %879 = vmatprep.subr.bf16.mxu0 %v820
    %880 = vmatpush1.bf16.msra.mxu0 %v819
    %881 = vmatprep.subr.bf16.mxu0 %v816
    %882 = vmatpush1.bf16.msra.mxu0 %v815
    %883 = vmatprep.subr.bf16.mxu0 %v812
    %884 = vmatpush1.bf16.msra.mxu0 %v811
    %885 = vmatprep.subr.bf16.mxu0 %v808
    %886 = vmatpush1.bf16.msra.mxu0 %v807
    %887 = vmatprep.subr.bf16.mxu0 0
    %888 = vmatpush2.bf16.msra.mxu0 0
    %889 = vmatprep.subr.bf16.mxu0 0
    %890 = vmatpush2.bf16.msra.mxu0 0
    %891 = vmatprep.subr.bf16.mxu0 0
    %892 = vmatpush2.bf16.msra.mxu0 0
    %893 = vmatprep.subr.bf16.mxu0 0
    %894 = vmatpush2.bf16.msra.mxu0 0
    %895 = vmatprep.subr.bf16.mxu0 0
    %896 = vmatpush2.bf16.msra.mxu0 0
    %897 = vmatprep.subr.bf16.mxu0 0
    %898 = vmatpush2.bf16.msra.mxu0 0
    %899 = vmatprep.subr.bf16.mxu0 0
    %900 = vmatpush2.bf16.msra.mxu0 0
    %901 = vmatprep.subr.bf16.mxu0 0
    %902 = vmatpush2.bf16.msra.mxu0 0
    %903 = vmatprep.mubr.bf16.mxu0 0
    %904 = vmatmul.mubr.bf16.gmra.mxu0 %v689
    %v905 = vpop.f32.mrf.mxu0
    %v906 = vadd.f32 %v694, %v905
    %v907 = vpop.f32.mrf.mxu0
    %v908 = vadd.f32 %v698, %v907
    %v909 = vpop.f32.mrf.mxu0
    %v910 = vpop.f32.mrf.mxu0
    %911 = vdwg.mxu0
    %912 = vmatprep.subr.bf16.mxu0 %v838
    %913 = vmatpush1.bf16.msra.mxu0 %v837
    %914 = vmatprep.subr.bf16.mxu0 %v834
    %915 = vmatpush1.bf16.msra.mxu0 %v833
    %916 = vmatprep.subr.bf16.mxu0 %v830
    %917 = vmatpush1.bf16.msra.mxu0 %v829
    %918 = vmatprep.subr.bf16.mxu0 %v826
    %919 = vmatpush1.bf16.msra.mxu0 %v825
    %920 = vmatprep.subr.bf16.mxu0 %v822
    %921 = vmatpush1.bf16.msra.mxu0 %v821
    %922 = vmatprep.subr.bf16.mxu0 %v818
    %923 = vmatpush1.bf16.msra.mxu0 %v817
    %924 = vmatprep.subr.bf16.mxu0 %v814
    %925 = vmatpush1.bf16.msra.mxu0 %v813
    %926 = vmatprep.subr.bf16.mxu0 %v810
    %927 = vmatpush1.bf16.msra.mxu0 %v809
    %928 = vmatprep.subr.bf16.mxu0 0
    %929 = vmatpush2.bf16.msra.mxu0 0
    %930 = vmatprep.subr.bf16.mxu0 0
    %931 = vmatpush2.bf16.msra.mxu0 0
    %932 = vmatprep.subr.bf16.mxu0 0
    %933 = vmatpush2.bf16.msra.mxu0 0
    %934 = vmatprep.subr.bf16.mxu0 0
    %935 = vmatpush2.bf16.msra.mxu0 0
    %936 = vmatprep.subr.bf16.mxu0 0
    %937 = vmatpush2.bf16.msra.mxu0 0
    %938 = vmatprep.subr.bf16.mxu0 0
    %939 = vmatpush2.bf16.msra.mxu0 0
    %940 = vmatprep.subr.bf16.mxu0 0
    %941 = vmatpush2.bf16.msra.mxu0 0
    %942 = vmatprep.subr.bf16.mxu0 0
    %943 = vmatpush2.bf16.msra.mxu0 0
    %944 = vmatprep.mubr.bf16.mxu0 0
    %945 = vmatmul.mubr.bf16.gmra.mxu0 %v689
    %v946 = vpop.f32.mrf.mxu0
    %v947 = vadd.f32 %v702, %v946
    %v948 = vpop.f32.mrf.mxu0
    %v949 = vadd.f32 %v706, %v948
    %v950 = vpop.f32.mrf.mxu0
    %v951 = vpop.f32.mrf.mxu0
    %952 = vdwg.mxu0
    %s953 = smul.u32 0, 4
    %s954 = smul.addr %s953, 8
    %s955 = scalar_lea.vmem [#allocation2], %s954
    %v956 = vld [vmem:[%s955] sm:$0xff]
    %v957 = vld [vmem:[%s955 + $0x8] sm:$0xff]
    %v958 = vld [vmem:[%s955 + $0x10] sm:$0xff]
    %v959 = vld [vmem:[%s955 + $0x18] sm:$0xff]
    %v960 = vpack.c.bf16 %v685, %v685
    %v993 = vunpack.c.l.b16 %v588
    %v994 = vunpack.c.h.b16 %v588
    %v995 = vunpack.c.l.b16 %v589
    %v996 = vunpack.c.h.b16 %v589
    %v997 = vunpack.c.l.b16 %v590
    %v998 = vunpack.c.h.b16 %v590
    %v999 = vunpack.c.l.b16 %v591
    %v1000 = vunpack.c.h.b16 %v591
    %v1001 = vunpack.c.l.b16 %v592
    %v1002 = vunpack.c.h.b16 %v592
    %v1003 = vunpack.c.l.b16 %v593
    %v1004 = vunpack.c.h.b16 %v593
    %v1005 = vunpack.c.l.b16 %v594
    %v1006 = vunpack.c.h.b16 %v594
    %v1007 = vunpack.c.l.b16 %v595
    %v1008 = vunpack.c.h.b16 %v595
    %v1009 = vunpack.c.l.b16 %v596
    %v1010 = vunpack.c.h.b16 %v596
    %v1011 = vunpack.c.l.b16 %v597
    %v1012 = vunpack.c.h.b16 %v597
    %v1013 = vunpack.c.l.b16 %v598
    %v1014 = vunpack.c.h.b16 %v598
    %v1015 = vunpack.c.l.b16 %v599
    %v1016 = vunpack.c.h.b16 %v599
    %v1017 = vunpack.c.l.b16 %v600
    %v1018 = vunpack.c.h.b16 %v600
    %v1019 = vunpack.c.l.b16 %v601
    %v1020 = vunpack.c.h.b16 %v601
    %v1021 = vunpack.c.l.b16 %v602
    %v1022 = vunpack.c.h.b16 %v602
    %v1023 = vunpack.c.l.b16 %v603
    %v1024 = vunpack.c.h.b16 %v603
    %v1025 = vunpack.c.l.b16 %v604
    %v1026 = vunpack.c.h.b16 %v604
    %v1027 = vunpack.c.l.b16 %v605
    %v1028 = vunpack.c.h.b16 %v605
    %v1029 = vunpack.c.l.b16 %v606
    %v1030 = vunpack.c.h.b16 %v606
    %v1031 = vunpack.c.l.b16 %v607
    %v1032 = vunpack.c.h.b16 %v607
    %v1033 = vunpack.c.l.b16 %v608
    %v1034 = vunpack.c.h.b16 %v608
    %v1035 = vunpack.c.l.b16 %v609
    %v1036 = vunpack.c.h.b16 %v609
    %v1037 = vunpack.c.l.b16 %v610
    %v1038 = vunpack.c.h.b16 %v610
    %v1039 = vunpack.c.l.b16 %v611
    %v1040 = vunpack.c.h.b16 %v611
    %v1041 = vunpack.c.l.b16 %v612
    %v1042 = vunpack.c.h.b16 %v612
    %v1043 = vunpack.c.l.b16 %v613
    %v1044 = vunpack.c.h.b16 %v613
    %v1045 = vunpack.c.l.b16 %v614
    %v1046 = vunpack.c.h.b16 %v614
    %v1047 = vunpack.c.l.b16 %v615
    %v1048 = vunpack.c.h.b16 %v615
    %v1049 = vunpack.c.l.b16 %v616
    %v1050 = vunpack.c.h.b16 %v616
    %v1051 = vunpack.c.l.b16 %v617
    %v1052 = vunpack.c.h.b16 %v617
    %v1053 = vunpack.c.l.b16 %v618
    %v1054 = vunpack.c.h.b16 %v618
    %v1055 = vunpack.c.l.b16 %v619
    %v1056 = vunpack.c.h.b16 %v619
    %v1057 = vpack.c.b16 %v997, %v993
    %v1058 = vpack.c.b16 %v998, %v994
    %v1059 = vpack.c.b16 %v999, %v995
    %v1060 = vpack.c.b16 %v1000, %v996
    %v1061 = vpack.c.b16 %v1005, %v1001
    %v1062 = vpack.c.b16 %v1006, %v1002
    %v1063 = vpack.c.b16 %v1007, %v1003
    %v1064 = vpack.c.b16 %v1008, %v1004
    %v1065 = vpack.c.b16 %v1013, %v1009
    %v1066 = vpack.c.b16 %v1014, %v1010
    %v1067 = vpack.c.b16 %v1015, %v1011
    %v1068 = vpack.c.b16 %v1016, %v1012
    %v1069 = vpack.c.b16 %v1021, %v1017
    %v1070 = vpack.c.b16 %v1022, %v1018
    %v1071 = vpack.c.b16 %v1023, %v1019
    %v1072 = vpack.c.b16 %v1024, %v1020
    %v1073 = vpack.c.b16 %v1029, %v1025
    %v1074 = vpack.c.b16 %v1030, %v1026
    %v1075 = vpack.c.b16 %v1031, %v1027
    %v1076 = vpack.c.b16 %v1032, %v1028
    %v1077 = vpack.c.b16 %v1037, %v1033
    %v1078 = vpack.c.b16 %v1038, %v1034
    %v1079 = vpack.c.b16 %v1039, %v1035
    %v1080 = vpack.c.b16 %v1040, %v1036
    %v1081 = vpack.c.b16 %v1045, %v1041
    %v1082 = vpack.c.b16 %v1046, %v1042
    %v1083 = vpack.c.b16 %v1047, %v1043
    %v1084 = vpack.c.b16 %v1048, %v1044
    %v1085 = vpack.c.b16 %v1053, %v1049
    %v1086 = vpack.c.b16 %v1054, %v1050
    %v1087 = vpack.c.b16 %v1055, %v1051
    %v1088 = vpack.c.b16 %v1056, %v1052
    %1121 = vmatprep.subr.bf16.mxu0 %v1086
    %1122 = vmatpush1.bf16.msra.mxu0 %v1085
    %1123 = vmatprep.subr.bf16.mxu0 %v1082
    %1124 = vmatpush1.bf16.msra.mxu0 %v1081
    %1125 = vmatprep.subr.bf16.mxu0 %v1078
    %1126 = vmatpush1.bf16.msra.mxu0 %v1077
    %1127 = vmatprep.subr.bf16.mxu0 %v1074
    %1128 = vmatpush1.bf16.msra.mxu0 %v1073
    %1129 = vmatprep.subr.bf16.mxu0 %v1070
    %1130 = vmatpush1.bf16.msra.mxu0 %v1069
    %1131 = vmatprep.subr.bf16.mxu0 %v1066
    %1132 = vmatpush1.bf16.msra.mxu0 %v1065
    %1133 = vmatprep.subr.bf16.mxu0 %v1062
    %1134 = vmatpush1.bf16.msra.mxu0 %v1061
    %1135 = vmatprep.subr.bf16.mxu0 %v1058
    %1136 = vmatpush1.bf16.msra.mxu0 %v1057
    %1137 = vmatprep.subr.bf16.mxu0 0
    %1138 = vmatpush2.bf16.msra.mxu0 0
    %1139 = vmatprep.subr.bf16.mxu0 0
    %1140 = vmatpush2.bf16.msra.mxu0 0
    %1141 = vmatprep.subr.bf16.mxu0 0
    %1142 = vmatpush2.bf16.msra.mxu0 0
    %1143 = vmatprep.subr.bf16.mxu0 0
    %1144 = vmatpush2.bf16.msra.mxu0 0
    %1145 = vmatprep.subr.bf16.mxu0 0
    %1146 = vmatpush2.bf16.msra.mxu0 0
    %1147 = vmatprep.subr.bf16.mxu0 0
    %1148 = vmatpush2.bf16.msra.mxu0 0
    %1149 = vmatprep.subr.bf16.mxu0 0
    %1150 = vmatpush2.bf16.msra.mxu0 0
    %1151 = vmatprep.subr.bf16.mxu0 0
    %1152 = vmatpush2.bf16.msra.mxu0 0
    %1153 = vmatprep.mubr.bf16.mxu0 0
    %1154 = vmatmul.mubr.bf16.gmra.mxu0 %v960
    %v1155 = vpop.f32.mrf.mxu0
    %v1156 = vadd.f32 0.0, %v1155
    %v1157 = vpop.f32.mrf.mxu0
    %v1158 = vadd.f32 0.0, %v1157
    %v1159 = vpop.f32.mrf.mxu0
    %v1160 = vpop.f32.mrf.mxu0
    %1161 = vdwg.mxu0
    %1162 = vmatprep.subr.bf16.mxu0 %v1088
    %1163 = vmatpush1.bf16.msra.mxu0 %v1087
    %1164 = vmatprep.subr.bf16.mxu0 %v1084
    %1165 = vmatpush1.bf16.msra.mxu0 %v1083
    %1166 = vmatprep.subr.bf16.mxu0 %v1080
    %1167 = vmatpush1.bf16.msra.mxu0 %v1079
    %1168 = vmatprep.subr.bf16.mxu0 %v1076
    %1169 = vmatpush1.bf16.msra.mxu0 %v1075
    %1170 = vmatprep.subr.bf16.mxu0 %v1072
    %1171 = vmatpush1.bf16.msra.mxu0 %v1071
    %1172 = vmatprep.subr.bf16.mxu0 %v1068
    %1173 = vmatpush1.bf16.msra.mxu0 %v1067
    %1174 = vmatprep.subr.bf16.mxu0 %v1064
    %1175 = vmatpush1.bf16.msra.mxu0 %v1063
    %1176 = vmatprep.subr.bf16.mxu0 %v1060
    %1177 = vmatpush1.bf16.msra.mxu0 %v1059
    %1178 = vmatprep.subr.bf16.mxu0 0
    %1179 = vmatpush2.bf16.msra.mxu0 0
    %1180 = vmatprep.subr.bf16.mxu0 0
    %1181 = vmatpush2.bf16.msra.mxu0 0
    %1182 = vmatprep.subr.bf16.mxu0 0
    %1183 = vmatpush2.bf16.msra.mxu0 0
    %1184 = vmatprep.subr.bf16.mxu0 0
    %1185 = vmatpush2.bf16.msra.mxu0 0
    %1186 = vmatprep.subr.bf16.mxu0 0
    %1187 = vmatpush2.bf16.msra.mxu0 0
    %1188 = vmatprep.subr.bf16.mxu0 0
    %1189 = vmatpush2.bf16.msra.mxu0 0
    %1190 = vmatprep.subr.bf16.mxu0 0
    %1191 = vmatpush2.bf16.msra.mxu0 0
    %1192 = vmatprep.subr.bf16.mxu0 0
    %1193 = vmatpush2.bf16.msra.mxu0 0
    %1194 = vmatprep.mubr.bf16.mxu0 0
    %1195 = vmatmul.mubr.bf16.gmra.mxu0 %v960
    %v1196 = vpop.f32.mrf.mxu0
    %v1197 = vadd.f32 0.0, %v1196
    %v1198 = vpop.f32.mrf.mxu0
    %v1199 = vadd.f32 0.0, %v1198
    %v1200 = vpop.f32.mrf.mxu0
    %v1201 = vpop.f32.mrf.mxu0
    %1202 = vdwg.mxu0
    %v1203 = vadd.f32 %v956, %v1156
    %v1204 = vadd.f32 %v957, %v1158
    %v1205 = vadd.f32 %v958, %v1197
    %v1206 = vadd.f32 %v959, %v1199
    %v1207 = vxor.u32 %v1203, 2147483648
    %v1208 = vmul.f32 %v1207, 1.442695
    %v1209 = vpow.pop %v1208
    %v1210 = vadd.f32 %v1209, 1.0
    %v1211 = vrcp.pop %v1210
    %v1212 = vmul.f32 1.0, %v1211
    %v1213 = vxor.u32 %v1204, 2147483648
    %v1214 = vmul.f32 %v1213, 1.442695
    %v1215 = vpow.pop %v1214
    %v1216 = vadd.f32 %v1215, 1.0
    %v1217 = vrcp.pop %v1216
    %v1218 = vmul.f32 1.0, %v1217
    %v1219 = vtanh.pop %v1205
    %v1220 = vxor.u32 %v1206, 2147483648
    %v1221 = vmul.f32 %v1220, 1.442695
    %v1222 = vpow.pop %v1221
    %v1223 = vadd.f32 %v1222, 1.0
    %v1224 = vrcp.pop %v1223
    %v1225 = vmul.f32 1.0, %v1224
    %v1226 = vmul.f32 %v1218, %v686
    %v1227 = vmul.f32 %v1212, %v1219
    %v1228 = vadd.f32 %v1226, %v1227
    %v1229 = vtanh.pop %v1228
    %v1230 = vmul.f32 %v1225, %v1229
    %v1231 = vpack.c.bf16 %v1230, %v1230
    %v1264 = vunpack.c.l.b16 %v620
    %v1265 = vunpack.c.h.b16 %v620
    %v1266 = vunpack.c.l.b16 %v621
    %v1267 = vunpack.c.h.b16 %v621
    %v1268 = vunpack.c.l.b16 %v622
    %v1269 = vunpack.c.h.b16 %v622
    %v1270 = vunpack.c.l.b16 %v623
    %v1271 = vunpack.c.h.b16 %v623
    %v1272 = vunpack.c.l.b16 %v624
    %v1273 = vunpack.c.h.b16 %v624
    %v1274 = vunpack.c.l.b16 %v625
    %v1275 = vunpack.c.h.b16 %v625
    %v1276 = vunpack.c.l.b16 %v626
    %v1277 = vunpack.c.h.b16 %v626
    %v1278 = vunpack.c.l.b16 %v627
    %v1279 = vunpack.c.h.b16 %v627
    %v1280 = vunpack.c.l.b16 %v628
    %v1281 = vunpack.c.h.b16 %v628
    %v1282 = vunpack.c.l.b16 %v629
    %v1283 = vunpack.c.h.b16 %v629
    %v1284 = vunpack.c.l.b16 %v630
    %v1285 = vunpack.c.h.b16 %v630
    %v1286 = vunpack.c.l.b16 %v631
    %v1287 = vunpack.c.h.b16 %v631
    %v1288 = vunpack.c.l.b16 %v632
    %v1289 = vunpack.c.h.b16 %v632
    %v1290 = vunpack.c.l.b16 %v633
    %v1291 = vunpack.c.h.b16 %v633
    %v1292 = vunpack.c.l.b16 %v634
    %v1293 = vunpack.c.h.b16 %v634
    %v1294 = vunpack.c.l.b16 %v635
    %v1295 = vunpack.c.h.b16 %v635
    %v1296 = vunpack.c.l.b16 %v636
    %v1297 = vunpack.c.h.b16 %v636
    %v1298 = vunpack.c.l.b16 %v637
    %v1299 = vunpack.c.h.b16 %v637
    %v1300 = vunpack.c.l.b16 %v638
    %v1301 = vunpack.c.h.b16 %v638
    %v1302 = vunpack.c.l.b16 %v639
    %v1303 = vunpack.c.h.b16 %v639
    %v1304 = vunpack.c.l.b16 %v640
    %v1305 = vunpack.c.h.b16 %v640
    %v1306 = vunpack.c.l.b16 %v641
    %v1307 = vunpack.c.h.b16 %v641
    %v1308 = vunpack.c.l.b16 %v642
    %v1309 = vunpack.c.h.b16 %v642
    %v1310 = vunpack.c.l.b16 %v643
    %v1311 = vunpack.c.h.b16 %v643
    %v1312 = vunpack.c.l.b16 %v644
    %v1313 = vunpack.c.h.b16 %v644
    %v1314 = vunpack.c.l.b16 %v645
    %v1315 = vunpack.c.h.b16 %v645
    %v1316 = vunpack.c.l.b16 %v646
    %v1317 = vunpack.c.h.b16 %v646
    %v1318 = vunpack.c.l.b16 %v647
    %v1319 = vunpack.c.h.b16 %v647
    %v1320 = vunpack.c.l.b16 %v648
    %v1321 = vunpack.c.h.b16 %v648
    %v1322 = vunpack.c.l.b16 %v649
    %v1323 = vunpack.c.h.b16 %v649
    %v1324 = vunpack.c.l.b16 %v650
    %v1325 = vunpack.c.h.b16 %v650
    %v1326 = vunpack.c.l.b16 %v651
    %v1327 = vunpack.c.h.b16 %v651
    %v1328 = vpack.c.b16 %v1268, %v1264
    %v1329 = vpack.c.b16 %v1269, %v1265
    %v1330 = vpack.c.b16 %v1270, %v1266
    %v1331 = vpack.c.b16 %v1271, %v1267
    %v1332 = vpack.c.b16 %v1276, %v1272
    %v1333 = vpack.c.b16 %v1277, %v1273
    %v1334 = vpack.c.b16 %v1278, %v1274
    %v1335 = vpack.c.b16 %v1279, %v1275
    %v1336 = vpack.c.b16 %v1284, %v1280
    %v1337 = vpack.c.b16 %v1285, %v1281
    %v1338 = vpack.c.b16 %v1286, %v1282
    %v1339 = vpack.c.b16 %v1287, %v1283
    %v1340 = vpack.c.b16 %v1292, %v1288
    %v1341 = vpack.c.b16 %v1293, %v1289
    %v1342 = vpack.c.b16 %v1294, %v1290
    %v1343 = vpack.c.b16 %v1295, %v1291
    %v1344 = vpack.c.b16 %v1300, %v1296
    %v1345 = vpack.c.b16 %v1301, %v1297
    %v1346 = vpack.c.b16 %v1302, %v1298
    %v1347 = vpack.c.b16 %v1303, %v1299
    %v1348 = vpack.c.b16 %v1308, %v1304
    %v1349 = vpack.c.b16 %v1309, %v1305
    %v1350 = vpack.c.b16 %v1310, %v1306
    %v1351 = vpack.c.b16 %v1311, %v1307
    %v1352 = vpack.c.b16 %v1316, %v1312
    %v1353 = vpack.c.b16 %v1317, %v1313
    %v1354 = vpack.c.b16 %v1318, %v1314
    %v1355 = vpack.c.b16 %v1319, %v1315
    %v1356 = vpack.c.b16 %v1324, %v1320
    %v1357 = vpack.c.b16 %v1325, %v1321
    %v1358 = vpack.c.b16 %v1326, %v1322
    %v1359 = vpack.c.b16 %v1327, %v1323
    %1392 = vmatprep.subr.bf16.mxu0 %v1357
    %1393 = vmatpush1.bf16.msra.mxu0 %v1356
    %1394 = vmatprep.subr.bf16.mxu0 %v1353
    %1395 = vmatpush1.bf16.msra.mxu0 %v1352
    %1396 = vmatprep.subr.bf16.mxu0 %v1349
    %1397 = vmatpush1.bf16.msra.mxu0 %v1348
    %1398 = vmatprep.subr.bf16.mxu0 %v1345
    %1399 = vmatpush1.bf16.msra.mxu0 %v1344
    %1400 = vmatprep.subr.bf16.mxu0 %v1341
    %1401 = vmatpush1.bf16.msra.mxu0 %v1340
    %1402 = vmatprep.subr.bf16.mxu0 %v1337
    %1403 = vmatpush1.bf16.msra.mxu0 %v1336
    %1404 = vmatprep.subr.bf16.mxu0 %v1333
    %1405 = vmatpush1.bf16.msra.mxu0 %v1332
    %1406 = vmatprep.subr.bf16.mxu0 %v1329
    %1407 = vmatpush1.bf16.msra.mxu0 %v1328
    %1408 = vmatprep.subr.bf16.mxu0 0
    %1409 = vmatpush2.bf16.msra.mxu0 0
    %1410 = vmatprep.subr.bf16.mxu0 0
    %1411 = vmatpush2.bf16.msra.mxu0 0
    %1412 = vmatprep.subr.bf16.mxu0 0
    %1413 = vmatpush2.bf16.msra.mxu0 0
    %1414 = vmatprep.subr.bf16.mxu0 0
    %1415 = vmatpush2.bf16.msra.mxu0 0
    %1416 = vmatprep.subr.bf16.mxu0 0
    %1417 = vmatpush2.bf16.msra.mxu0 0
    %1418 = vmatprep.subr.bf16.mxu0 0
    %1419 = vmatpush2.bf16.msra.mxu0 0
    %1420 = vmatprep.subr.bf16.mxu0 0
    %1421 = vmatpush2.bf16.msra.mxu0 0
    %1422 = vmatprep.subr.bf16.mxu0 0
    %1423 = vmatpush2.bf16.msra.mxu0 0
    %1424 = vmatprep.mubr.bf16.mxu0 0
    %1425 = vmatmul.mubr.bf16.gmra.mxu0 %v1231
    %v1426 = vpop.f32.mrf.mxu0
    %v1427 = vadd.f32 0.0, %v1426
    %v1428 = vpop.f32.mrf.mxu0
    %v1429 = vadd.f32 0.0, %v1428
    %v1430 = vpop.f32.mrf.mxu0
    %v1431 = vpop.f32.mrf.mxu0
    %1432 = vdwg.mxu0
    %1433 = vmatprep.subr.bf16.mxu0 %v1359
    %1434 = vmatpush1.bf16.msra.mxu0 %v1358
    %1435 = vmatprep.subr.bf16.mxu0 %v1355
    %1436 = vmatpush1.bf16.msra.mxu0 %v1354
    %1437 = vmatprep.subr.bf16.mxu0 %v1351
    %1438 = vmatpush1.bf16.msra.mxu0 %v1350
    %1439 = vmatprep.subr.bf16.mxu0 %v1347
    %1440 = vmatpush1.bf16.msra.mxu0 %v1346
    %1441 = vmatprep.subr.bf16.mxu0 %v1343
    %1442 = vmatpush1.bf16.msra.mxu0 %v1342
    %1443 = vmatprep.subr.bf16.mxu0 %v1339
    %1444 = vmatpush1.bf16.msra.mxu0 %v1338
    %1445 = vmatprep.subr.bf16.mxu0 %v1335
    %1446 = vmatpush1.bf16.msra.mxu0 %v1334
    %1447 = vmatprep.subr.bf16.mxu0 %v1331
    %1448 = vmatpush1.bf16.msra.mxu0 %v1330
    %1449 = vmatprep.subr.bf16.mxu0 0
    %1450 = vmatpush2.bf16.msra.mxu0 0
    %1451 = vmatprep.subr.bf16.mxu0 0
    %1452 = vmatpush2.bf16.msra.mxu0 0
    %1453 = vmatprep.subr.bf16.mxu0 0
    %1454 = vmatpush2.bf16.msra.mxu0 0
    %1455 = vmatprep.subr.bf16.mxu0 0
    %1456 = vmatpush2.bf16.msra.mxu0 0
    %1457 = vmatprep.subr.bf16.mxu0 0
    %1458 = vmatpush2.bf16.msra.mxu0 0
    %1459 = vmatprep.subr.bf16.mxu0 0
    %1460 = vmatpush2.bf16.msra.mxu0 0
    %1461 = vmatprep.subr.bf16.mxu0 0
    %1462 = vmatpush2.bf16.msra.mxu0 0
    %1463 = vmatprep.subr.bf16.mxu0 0
    %1464 = vmatpush2.bf16.msra.mxu0 0
    %1465 = vmatprep.mubr.bf16.mxu0 0
    %1466 = vmatmul.mubr.bf16.gmra.mxu0 %v1231
    %v1467 = vpop.f32.mrf.mxu0
    %v1468 = vadd.f32 0.0, %v1467
    %v1469 = vpop.f32.mrf.mxu0
    %v1470 = vadd.f32 0.0, %v1469
    %v1471 = vpop.f32.mrf.mxu0
    %v1472 = vpop.f32.mrf.mxu0
    %1473 = vdwg.mxu0
    %v1474 = vadd.f32 %v906, %v1427
    %v1475 = vadd.f32 %v908, %v1429
    %v1476 = vadd.f32 %v947, %v1468
    %v1477 = vadd.f32 %v949, %v1470
    %v1478 = vxor.u32 %v1474, 2147483648
    %v1479 = vmul.f32 %v1478, 1.442695
    %v1480 = vpow.pop %v1479
    %v1481 = vadd.f32 %v1480, 1.0
    %v1482 = vrcp.pop %v1481
    %v1483 = vmul.f32 1.0, %v1482
    %v1484 = vxor.u32 %v1475, 2147483648
    %v1485 = vmul.f32 %v1484, 1.442695
    %v1486 = vpow.pop %v1485
    %v1487 = vadd.f32 %v1486, 1.0
    %v1488 = vrcp.pop %v1487
    %v1489 = vmul.f32 1.0, %v1488
    %v1490 = vtanh.pop %v1476
    %v1491 = vxor.u32 %v1477, 2147483648
    %v1492 = vmul.f32 %v1491, 1.442695
    %v1493 = vpow.pop %v1492
    %v1494 = vadd.f32 %v1493, 1.0
    %v1495 = vrcp.pop %v1494
    %v1496 = vmul.f32 1.0, %v1495
    %v1497 = vmul.f32 %v1489, %v688
    %v1498 = vmul.f32 %v1483, %v1490
    %v1499 = vadd.f32 %v1497, %v1498
    %v1500 = vtanh.pop %v1499
    %v1501 = vmul.f32 %v1496, %v1500
    %1502 = vst [vmem:[#allocation3] sm:$0xff] %v1501
    %v1503 = vpack.c.bf16 %v1501, %v1501
    %1504 = vmatprep.subr.bf16.mxu0 %v836
    %1505 = vmatpush1.bf16.msra.mxu0 %v835
    %1506 = vmatprep.subr.bf16.mxu0 %v832
    %1507 = vmatpush1.bf16.msra.mxu0 %v831
    %1508 = vmatprep.subr.bf16.mxu0 %v828
    %1509 = vmatpush1.bf16.msra.mxu0 %v827
    %1510 = vmatprep.subr.bf16.mxu0 %v824
    %1511 = vmatpush1.bf16.msra.mxu0 %v823
    %1512 = vmatprep.subr.bf16.mxu0 %v820
    %1513 = vmatpush1.bf16.msra.mxu0 %v819
    %1514 = vmatprep.subr.bf16.mxu0 %v816
    %1515 = vmatpush1.bf16.msra.mxu0 %v815
    %1516 = vmatprep.subr.bf16.mxu0 %v812
    %1517 = vmatpush1.bf16.msra.mxu0 %v811
    %1518 = vmatprep.subr.bf16.mxu0 %v808
    %1519 = vmatpush1.bf16.msra.mxu0 %v807
    %1520 = vmatprep.subr.bf16.mxu0 0
    %1521 = vmatpush2.bf16.msra.mxu0 0
    %1522 = vmatprep.subr.bf16.mxu0 0
    %1523 = vmatpush2.bf16.msra.mxu0 0
    %1524 = vmatprep.subr.bf16.mxu0 0
    %1525 = vmatpush2.bf16.msra.mxu0 0
    %1526 = vmatprep.subr.bf16.mxu0 0
    %1527 = vmatpush2.bf16.msra.mxu0 0
    %1528 = vmatprep.subr.bf16.mxu0 0
    %1529 = vmatpush2.bf16.msra.mxu0 0
    %1530 = vmatprep.subr.bf16.mxu0 0
    %1531 = vmatpush2.bf16.msra.mxu0 0
    %1532 = vmatprep.subr.bf16.mxu0 0
    %1533 = vmatpush2.bf16.msra.mxu0 0
    %1534 = vmatprep.subr.bf16.mxu0 0
    %1535 = vmatpush2.bf16.msra.mxu0 0
    %1536 = vmatprep.mubr.bf16.mxu0 0
    %1537 = vmatmul.mubr.bf16.gmra.mxu0 %v1503
    %v1538 = vpop.f32.mrf.mxu0
    %v1539 = vadd.f32 %v694, %v1538
    %v1540 = vpop.f32.mrf.mxu0
    %v1541 = vadd.f32 %v698, %v1540
    %v1542 = vpop.f32.mrf.mxu0
    %v1543 = vpop.f32.mrf.mxu0
    %1544 = vdwg.mxu0
    %1545 = vmatprep.subr.bf16.mxu0 %v838
    %1546 = vmatpush1.bf16.msra.mxu0 %v837
    %1547 = vmatprep.subr.bf16.mxu0 %v834
    %1548 = vmatpush1.bf16.msra.mxu0 %v833
    %1549 = vmatprep.subr.bf16.mxu0 %v830
    %1550 = vmatpush1.bf16.msra.mxu0 %v829
    %1551 = vmatprep.subr.bf16.mxu0 %v826
    %1552 = vmatpush1.bf16.msra.mxu0 %v825
    %1553 = vmatprep.subr.bf16.mxu0 %v822
    %1554 = vmatpush1.bf16.msra.mxu0 %v821
    %1555 = vmatprep.subr.bf16.mxu0 %v818
    %1556 = vmatpush1.bf16.msra.mxu0 %v817
    %1557 = vmatprep.subr.bf16.mxu0 %v814
    %1558 = vmatpush1.bf16.msra.mxu0 %v813
    %1559 = vmatprep.subr.bf16.mxu0 %v810
    %1560 = vmatpush1.bf16.msra.mxu0 %v809
    %1561 = vmatprep.subr.bf16.mxu0 0
    %1562 = vmatpush2.bf16.msra.mxu0 0
    %1563 = vmatprep.subr.bf16.mxu0 0
    %1564 = vmatpush2.bf16.msra.mxu0 0
    %1565 = vmatprep.subr.bf16.mxu0 0
    %1566 = vmatpush2.bf16.msra.mxu0 0
    %1567 = vmatprep.subr.bf16.mxu0 0
    %1568 = vmatpush2.bf16.msra.mxu0 0
    %1569 = vmatprep.subr.bf16.mxu0 0
    %1570 = vmatpush2.bf16.msra.mxu0 0
    %1571 = vmatprep.subr.bf16.mxu0 0
    %1572 = vmatpush2.bf16.msra.mxu0 0
    %1573 = vmatprep.subr.bf16.mxu0 0
    %1574 = vmatpush2.bf16.msra.mxu0 0
    %1575 = vmatprep.subr.bf16.mxu0 0
    %1576 = vmatpush2.bf16.msra.mxu0 0
    %1577 = vmatprep.mubr.bf16.mxu0 0
    %1578 = vmatmul.mubr.bf16.gmra.mxu0 %v1503
    %v1579 = vpop.f32.mrf.mxu0
    %v1580 = vadd.f32 %v702, %v1579
    %v1581 = vpop.f32.mrf.mxu0
    %v1582 = vadd.f32 %v706, %v1581
    %v1583 = vpop.f32.mrf.mxu0
    %v1584 = vpop.f32.mrf.mxu0
    %1585 = vdwg.mxu0
    %s1586 = smul.u32 1, 4
    %s1587 = smul.addr %s1586, 8
    %s1588 = scalar_lea.vmem [#allocation2], %s1587
    %v1589 = vld [vmem:[%s1588] sm:$0xff]
    %v1590 = vld [vmem:[%s1588 + $0x8] sm:$0xff]
    %v1591 = vld [vmem:[%s1588 + $0x10] sm:$0xff]
    %v1592 = vld [vmem:[%s1588 + $0x18] sm:$0xff]
    %1593 = vmatprep.subr.bf16.mxu0 %v1086
    %1594 = vmatpush1.bf16.msra.mxu0 %v1085
    %1595 = vmatprep.subr.bf16.mxu0 %v1082
    %1596 = vmatpush1.bf16.msra.mxu0 %v1081
    %1597 = vmatprep.subr.bf16.mxu0 %v1078
    %1598 = vmatpush1.bf16.msra.mxu0 %v1077
    %1599 = vmatprep.subr.bf16.mxu0 %v1074
    %1600 = vmatpush1.bf16.msra.mxu0 %v1073
    %1601 = vmatprep.subr.bf16.mxu0 %v1070
    %1602 = vmatpush1.bf16.msra.mxu0 %v1069
    %1603 = vmatprep.subr.bf16.mxu0 %v1066
    %1604 = vmatpush1.bf16.msra.mxu0 %v1065
    %1605 = vmatprep.subr.bf16.mxu0 %v1062
    %1606 = vmatpush1.bf16.msra.mxu0 %v1061
    %1607 = vmatprep.subr.bf16.mxu0 %v1058
    %1608 = vmatpush1.bf16.msra.mxu0 %v1057
    %1609 = vmatprep.subr.bf16.mxu0 0
    %1610 = vmatpush2.bf16.msra.mxu0 0
    %1611 = vmatprep.subr.bf16.mxu0 0
    %1612 = vmatpush2.bf16.msra.mxu0 0
    %1613 = vmatprep.subr.bf16.mxu0 0
    %1614 = vmatpush2.bf16.msra.mxu0 0
    %1615 = vmatprep.subr.bf16.mxu0 0
    %1616 = vmatpush2.bf16.msra.mxu0 0
    %1617 = vmatprep.subr.bf16.mxu0 0
    %1618 = vmatpush2.bf16.msra.mxu0 0
    %1619 = vmatprep.subr.bf16.mxu0 0
    %1620 = vmatpush2.bf16.msra.mxu0 0
    %1621 = vmatprep.subr.bf16.mxu0 0
    %1622 = vmatpush2.bf16.msra.mxu0 0
    %1623 = vmatprep.subr.bf16.mxu0 0
    %1624 = vmatpush2.bf16.msra.mxu0 0
    %1625 = vmatprep.mubr.bf16.mxu0 0
    %1626 = vmatmul.mubr.bf16.gmra.mxu0 %v1231
    %v1627 = vpop.f32.mrf.mxu0
    %v1628 = vadd.f32 0.0, %v1627
    %v1629 = vpop.f32.mrf.mxu0
    %v1630 = vadd.f32 0.0, %v1629
    %v1631 = vpop.f32.mrf.mxu0
    %v1632 = vpop.f32.mrf.mxu0
    %1633 = vdwg.mxu0
    %1634 = vmatprep.subr.bf16.mxu0 %v1088
    %1635 = vmatpush1.bf16.msra.mxu0 %v1087
    %1636 = vmatprep.subr.bf16.mxu0 %v1084
    %1637 = vmatpush1.bf16.msra.mxu0 %v1083
    %1638 = vmatprep.subr.bf16.mxu0 %v1080
    %1639 = vmatpush1.bf16.msra.mxu0 %v1079
    %1640 = vmatprep.subr.bf16.mxu0 %v1076
    %1641 = vmatpush1.bf16.msra.mxu0 %v1075
    %1642 = vmatprep.subr.bf16.mxu0 %v1072
    %1643 = vmatpush1.bf16.msra.mxu0 %v1071
    %1644 = vmatprep.subr.bf16.mxu0 %v1068
    %1645 = vmatpush1.bf16.msra.mxu0 %v1067
    %1646 = vmatprep.subr.bf16.mxu0 %v1064
    %1647 = vmatpush1.bf16.msra.mxu0 %v1063
    %1648 = vmatprep.subr.bf16.mxu0 %v1060
    %1649 = vmatpush1.bf16.msra.mxu0 %v1059
    %1650 = vmatprep.subr.bf16.mxu0 0
    %1651 = vmatpush2.bf16.msra.mxu0 0
    %1652 = vmatprep.subr.bf16.mxu0 0
    %1653 = vmatpush2.bf16.msra.mxu0 0
    %1654 = vmatprep.subr.bf16.mxu0 0
    %1655 = vmatpush2.bf16.msra.mxu0 0
    %1656 = vmatprep.subr.bf16.mxu0 0
    %1657 = vmatpush2.bf16.msra.mxu0 0
    %1658 = vmatprep.subr.bf16.mxu0 0
    %1659 = vmatpush2.bf16.msra.mxu0 0
    %1660 = vmatprep.subr.bf16.mxu0 0
    %1661 = vmatpush2.bf16.msra.mxu0 0
    %1662 = vmatprep.subr.bf16.mxu0 0
    %1663 = vmatpush2.bf16.msra.mxu0 0
    %1664 = vmatprep.subr.bf16.mxu0 0
    %1665 = vmatpush2.bf16.msra.mxu0 0
    %1666 = vmatprep.mubr.bf16.mxu0 0
    %1667 = vmatmul.mubr.bf16.gmra.mxu0 %v1231
    %v1668 = vpop.f32.mrf.mxu0
    %v1669 = vadd.f32 0.0, %v1668
    %v1670 = vpop.f32.mrf.mxu0
    %v1671 = vadd.f32 0.0, %v1670
    %v1672 = vpop.f32.mrf.mxu0
    %v1673 = vpop.f32.mrf.mxu0
    %1674 = vdwg.mxu0
    %v1675 = vadd.f32 %v1589, %v1628
    %v1676 = vadd.f32 %v1590, %v1630
    %v1677 = vadd.f32 %v1591, %v1669
    %v1678 = vadd.f32 %v1592, %v1671
    %v1679 = vxor.u32 %v1675, 2147483648
    %v1680 = vmul.f32 %v1679, 1.442695
    %v1681 = vpow.pop %v1680
    %v1682 = vadd.f32 %v1681, 1.0
    %v1683 = vrcp.pop %v1682
    %v1684 = vmul.f32 1.0, %v1683
    %v1685 = vxor.u32 %v1676, 2147483648
    %v1686 = vmul.f32 %v1685, 1.442695
    %v1687 = vpow.pop %v1686
    %v1688 = vadd.f32 %v1687, 1.0
    %v1689 = vrcp.pop %v1688
    %v1690 = vmul.f32 1.0, %v1689
    %v1691 = vtanh.pop %v1677
    %v1692 = vxor.u32 %v1678, 2147483648
    %v1693 = vmul.f32 %v1692, 1.442695
    %v1694 = vpow.pop %v1693
    %v1695 = vadd.f32 %v1694, 1.0
    %v1696 = vrcp.pop %v1695
    %v1697 = vmul.f32 1.0, %v1696
    %v1698 = vmul.f32 %v1690, %v1228
    %v1699 = vmul.f32 %v1684, %v1691
    %v1700 = vadd.f32 %v1698, %v1699
    %v1701 = vtanh.pop %v1700
    %v1702 = vmul.f32 %v1697, %v1701
    %v1703 = vpack.c.bf16 %v1702, %v1702
    %1704 = vmatprep.subr.bf16.mxu0 %v1357
    %1705 = vmatpush1.bf16.msra.mxu0 %v1356
    %1706 = vmatprep.subr.bf16.mxu0 %v1353
    %1707 = vmatpush1.bf16.msra.mxu0 %v1352
    %1708 = vmatprep.subr.bf16.mxu0 %v1349
    %1709 = vmatpush1.bf16.msra.mxu0 %v1348
    %1710 = vmatprep.subr.bf16.mxu0 %v1345
    %1711 = vmatpush1.bf16.msra.mxu0 %v1344
    %1712 = vmatprep.subr.bf16.mxu0 %v1341
    %1713 = vmatpush1.bf16.msra.mxu0 %v1340
    %1714 = vmatprep.subr.bf16.mxu0 %v1337
    %1715 = vmatpush1.bf16.msra.mxu0 %v1336
    %1716 = vmatprep.subr.bf16.mxu0 %v1333
    %1717 = vmatpush1.bf16.msra.mxu0 %v1332
    %1718 = vmatprep.subr.bf16.mxu0 %v1329
    %1719 = vmatpush1.bf16.msra.mxu0 %v1328
    %1720 = vmatprep.subr.bf16.mxu0 0
    %1721 = vmatpush2.bf16.msra.mxu0 0
    %1722 = vmatprep.subr.bf16.mxu0 0
    %1723 = vmatpush2.bf16.msra.mxu0 0
    %1724 = vmatprep.subr.bf16.mxu0 0
    %1725 = vmatpush2.bf16.msra.mxu0 0
    %1726 = vmatprep.subr.bf16.mxu0 0
    %1727 = vmatpush2.bf16.msra.mxu0 0
    %1728 = vmatprep.subr.bf16.mxu0 0
    %1729 = vmatpush2.bf16.msra.mxu0 0
    %1730 = vmatprep.subr.bf16.mxu0 0
    %1731 = vmatpush2.bf16.msra.mxu0 0
    %1732 = vmatprep.subr.bf16.mxu0 0
    %1733 = vmatpush2.bf16.msra.mxu0 0
    %1734 = vmatprep.subr.bf16.mxu0 0
    %1735 = vmatpush2.bf16.msra.mxu0 0
    %1736 = vmatprep.mubr.bf16.mxu0 0
    %1737 = vmatmul.mubr.bf16.gmra.mxu0 %v1703
    %v1738 = vpop.f32.mrf.mxu0
    %v1739 = vadd.f32 0.0, %v1738
    %v1740 = vpop.f32.mrf.mxu0
    %v1741 = vadd.f32 0.0, %v1740
    %v1742 = vpop.f32.mrf.mxu0
    %v1743 = vpop.f32.mrf.mxu0
    %1744 = vdwg.mxu0
    %1745 = vmatprep.subr.bf16.mxu0 %v1359
    %1746 = vmatpush1.bf16.msra.mxu0 %v1358
    %1747 = vmatprep.subr.bf16.mxu0 %v1355
    %1748 = vmatpush1.bf16.msra.mxu0 %v1354
    %1749 = vmatprep.subr.bf16.mxu0 %v1351
    %1750 = vmatpush1.bf16.msra.mxu0 %v1350
    %1751 = vmatprep.subr.bf16.mxu0 %v1347
    %1752 = vmatpush1.bf16.msra.mxu0 %v1346
    %1753 = vmatprep.subr.bf16.mxu0 %v1343
    %1754 = vmatpush1.bf16.msra.mxu0 %v1342
    %1755 = vmatprep.subr.bf16.mxu0 %v1339
    %1756 = vmatpush1.bf16.msra.mxu0 %v1338
    %1757 = vmatprep.subr.bf16.mxu0 %v1335
    %1758 = vmatpush1.bf16.msra.mxu0 %v1334
    %1759 = vmatprep.subr.bf16.mxu0 %v1331
    %1760 = vmatpush1.bf16.msra.mxu0 %v1330
    %1761 = vmatprep.subr.bf16.mxu0 0
    %1762 = vmatpush2.bf16.msra.mxu0 0
    %1763 = vmatprep.subr.bf16.mxu0 0
    %1764 = vmatpush2.bf16.msra.mxu0 0
    %1765 = vmatprep.subr.bf16.mxu0 0
    %1766 = vmatpush2.bf16.msra.mxu0 0
    %1767 = vmatprep.subr.bf16.mxu0 0
    %1768 = vmatpush2.bf16.msra.mxu0 0
    %1769 = vmatprep.subr.bf16.mxu0 0
    %1770 = vmatpush2.bf16.msra.mxu0 0
    %1771 = vmatprep.subr.bf16.mxu0 0
    %1772 = vmatpush2.bf16.msra.mxu0 0
    %1773 = vmatprep.subr.bf16.mxu0 0
    %1774 = vmatpush2.bf16.msra.mxu0 0
    %1775 = vmatprep.subr.bf16.mxu0 0
    %1776 = vmatpush2.bf16.msra.mxu0 0
    %1777 = vmatprep.mubr.bf16.mxu0 0
    %1778 = vmatmul.mubr.bf16.gmra.mxu0 %v1703
    %v1779 = vpop.f32.mrf.mxu0
    %v1780 = vadd.f32 0.0, %v1779
    %v1781 = vpop.f32.mrf.mxu0
    %v1782 = vadd.f32 0.0, %v1781
    %v1783 = vpop.f32.mrf.mxu0
    %v1784 = vpop.f32.mrf.mxu0
    %1785 = vdwg.mxu0
    %v1786 = vadd.f32 %v1539, %v1739
    %v1787 = vadd.f32 %v1541, %v1741
    %v1788 = vadd.f32 %v1580, %v1780
    %v1789 = vadd.f32 %v1582, %v1782
    %v1790 = vxor.u32 %v1786, 2147483648
    %v1791 = vmul.f32 %v1790, 1.442695
    %v1792 = vpow.pop %v1791
    %v1793 = vadd.f32 %v1792, 1.0
    %v1794 = vrcp.pop %v1793
    %v1795 = vmul.f32 1.0, %v1794
    %v1796 = vxor.u32 %v1787, 2147483648
    %v1797 = vmul.f32 %v1796, 1.442695
    %v1798 = vpow.pop %v1797
    %v1799 = vadd.f32 %v1798, 1.0
    %v1800 = vrcp.pop %v1799
    %v1801 = vmul.f32 1.0, %v1800
    %v1802 = vtanh.pop %v1788
    %v1803 = vxor.u32 %v1789, 2147483648
    %v1804 = vmul.f32 %v1803, 1.442695
    %v1805 = vpow.pop %v1804
    %v1806 = vadd.f32 %v1805, 1.0
    %v1807 = vrcp.pop %v1806
    %v1808 = vmul.f32 1.0, %v1807
    %v1809 = vmul.f32 %v1801, %v1499
    %v1810 = vmul.f32 %v1795, %v1802
    %v1811 = vadd.f32 %v1809, %v1810
    %v1812 = vtanh.pop %v1811
    %v1813 = vmul.f32 %v1808, %v1812
    %s1814 = scalar_lea.vmem [#allocation3], 8
    %1815 = vst [vmem:[%s1814] sm:$0xff] %v1813
    %v1816 = vpack.c.bf16 %v1813, %v1813
    %1817 = vmatprep.subr.bf16.mxu0 %v836
    %1818 = vmatpush1.bf16.msra.mxu0 %v835
    %1819 = vmatprep.subr.bf16.mxu0 %v832
    %1820 = vmatpush1.bf16.msra.mxu0 %v831
    %1821 = vmatprep.subr.bf16.mxu0 %v828
    %1822 = vmatpush1.bf16.msra.mxu0 %v827
    %1823 = vmatprep.subr.bf16.mxu0 %v824
    %1824 = vmatpush1.bf16.msra.mxu0 %v823
    %1825 = vmatprep.subr.bf16.mxu0 %v820
    %1826 = vmatpush1.bf16.msra.mxu0 %v819
    %1827 = vmatprep.subr.bf16.mxu0 %v816
    %1828 = vmatpush1.bf16.msra.mxu0 %v815
    %1829 = vmatprep.subr.bf16.mxu0 %v812
    %1830 = vmatpush1.bf16.msra.mxu0 %v811
    %1831 = vmatprep.subr.bf16.mxu0 %v808
    %1832 = vmatpush1.bf16.msra.mxu0 %v807
    %1833 = vmatprep.subr.bf16.mxu0 0
    %1834 = vmatpush2.bf16.msra.mxu0 0
    %1835 = vmatprep.subr.bf16.mxu0 0
    %1836 = vmatpush2.bf16.msra.mxu0 0
    %1837 = vmatprep.subr.bf16.mxu0 0
    %1838 = vmatpush2.bf16.msra.mxu0 0
    %1839 = vmatprep.subr.bf16.mxu0 0
    %1840 = vmatpush2.bf16.msra.mxu0 0
    %1841 = vmatprep.subr.bf16.mxu0 0
    %1842 = vmatpush2.bf16.msra.mxu0 0
    %1843 = vmatprep.subr.bf16.mxu0 0
    %1844 = vmatpush2.bf16.msra.mxu0 0
    %1845 = vmatprep.subr.bf16.mxu0 0
    %1846 = vmatpush2.bf16.msra.mxu0 0
    %1847 = vmatprep.subr.bf16.mxu0 0
    %1848 = vmatpush2.bf16.msra.mxu0 0
    %1849 = vmatprep.mubr.bf16.mxu0 0
    %1850 = vmatmul.mubr.bf16.gmra.mxu0 %v1816
    %v1851 = vpop.f32.mrf.mxu0
    %v1852 = vadd.f32 %v694, %v1851
    %v1853 = vpop.f32.mrf.mxu0
    %v1854 = vadd.f32 %v698, %v1853
    %v1855 = vpop.f32.mrf.mxu0
    %v1856 = vpop.f32.mrf.mxu0
    %1857 = vdwg.mxu0
    %1858 = vmatprep.subr.bf16.mxu0 %v838
    %1859 = vmatpush1.bf16.msra.mxu0 %v837
    %1860 = vmatprep.subr.bf16.mxu0 %v834
    %1861 = vmatpush1.bf16.msra.mxu0 %v833
    %1862 = vmatprep.subr.bf16.mxu0 %v830
    %1863 = vmatpush1.bf16.msra.mxu0 %v829
    %1864 = vmatprep.subr.bf16.mxu0 %v826
    %1865 = vmatpush1.bf16.msra.mxu0 %v825
    %1866 = vmatprep.subr.bf16.mxu0 %v822
    %1867 = vmatpush1.bf16.msra.mxu0 %v821
    %1868 = vmatprep.subr.bf16.mxu0 %v818
    %1869 = vmatpush1.bf16.msra.mxu0 %v817
    %1870 = vmatprep.subr.bf16.mxu0 %v814
    %1871 = vmatpush1.bf16.msra.mxu0 %v813
    %1872 = vmatprep.subr.bf16.mxu0 %v810
    %1873 = vmatpush1.bf16.msra.mxu0 %v809
    %1874 = vmatprep.subr.bf16.mxu0 0
    %1875 = vmatpush2.bf16.msra.mxu0 0
    %1876 = vmatprep.subr.bf16.mxu0 0
    %1877 = vmatpush2.bf16.msra.mxu0 0
    %1878 = vmatprep.subr.bf16.mxu0 0
    %1879 = vmatpush2.bf16.msra.mxu0 0
    %1880 = vmatprep.subr.bf16.mxu0 0
    %1881 = vmatpush2.bf16.msra.mxu0 0
    %1882 = vmatprep.subr.bf16.mxu0 0
    %1883 = vmatpush2.bf16.msra.mxu0 0
    %1884 = vmatprep.subr.bf16.mxu0 0
    %1885 = vmatpush2.bf16.msra.mxu0 0
    %1886 = vmatprep.subr.bf16.mxu0 0
    %1887 = vmatpush2.bf16.msra.mxu0 0
    %1888 = vmatprep.subr.bf16.mxu0 0
    %1889 = vmatpush2.bf16.msra.mxu0 0
    %1890 = vmatprep.mubr.bf16.mxu0 0
    %1891 = vmatmul.mubr.bf16.gmra.mxu0 %v1816
    %v1892 = vpop.f32.mrf.mxu0
    %v1893 = vadd.f32 %v702, %v1892
    %v1894 = vpop.f32.mrf.mxu0
    %v1895 = vadd.f32 %v706, %v1894
    %v1896 = vpop.f32.mrf.mxu0
    %v1897 = vpop.f32.mrf.mxu0
    %1898 = vdwg.mxu0
    %s1899 = smul.u32 2, 4
    %s1900 = smul.addr %s1899, 8
    %s1901 = scalar_lea.vmem [#allocation2], %s1900
    %v1902 = vld [vmem:[%s1901] sm:$0xff]
    %v1903 = vld [vmem:[%s1901 + $0x8] sm:$0xff]
    %v1904 = vld [vmem:[%s1901 + $0x10] sm:$0xff]
    %v1905 = vld [vmem:[%s1901 + $0x18] sm:$0xff]
    %1906 = vmatprep.subr.bf16.mxu0 %v1086
    %1907 = vmatpush1.bf16.msra.mxu0 %v1085
    %1908 = vmatprep.subr.bf16.mxu0 %v1082
    %1909 = vmatpush1.bf16.msra.mxu0 %v1081
    %1910 = vmatprep.subr.bf16.mxu0 %v1078
    %1911 = vmatpush1.bf16.msra.mxu0 %v1077
    %1912 = vmatprep.subr.bf16.mxu0 %v1074
    %1913 = vmatpush1.bf16.msra.mxu0 %v1073
    %1914 = vmatprep.subr.bf16.mxu0 %v1070
    %1915 = vmatpush1.bf16.msra.mxu0 %v1069
    %1916 = vmatprep.subr.bf16.mxu0 %v1066
    %1917 = vmatpush1.bf16.msra.mxu0 %v1065
    %1918 = vmatprep.subr.bf16.mxu0 %v1062
    %1919 = vmatpush1.bf16.msra.mxu0 %v1061
    %1920 = vmatprep.subr.bf16.mxu0 %v1058
    %1921 = vmatpush1.bf16.msra.mxu0 %v1057
    %1922 = vmatprep.subr.bf16.mxu0 0
    %1923 = vmatpush2.bf16.msra.mxu0 0
    %1924 = vmatprep.subr.bf16.mxu0 0
    %1925 = vmatpush2.bf16.msra.mxu0 0
    %1926 = vmatprep.subr.bf16.mxu0 0
    %1927 = vmatpush2.bf16.msra.mxu0 0
    %1928 = vmatprep.subr.bf16.mxu0 0
    %1929 = vmatpush2.bf16.msra.mxu0 0
    %1930 = vmatprep.subr.bf16.mxu0 0
    %1931 = vmatpush2.bf16.msra.mxu0 0
    %1932 = vmatprep.subr.bf16.mxu0 0
    %1933 = vmatpush2.bf16.msra.mxu0 0
    %1934 = vmatprep.subr.bf16.mxu0 0
    %1935 = vmatpush2.bf16.msra.mxu0 0
    %1936 = vmatprep.subr.bf16.mxu0 0
    %1937 = vmatpush2.bf16.msra.mxu0 0
    %1938 = vmatprep.mubr.bf16.mxu0 0
    %1939 = vmatmul.mubr.bf16.gmra.mxu0 %v1703
    %v1940 = vpop.f32.mrf.mxu0
    %v1941 = vadd.f32 0.0, %v1940
    %v1942 = vpop.f32.mrf.mxu0
    %v1943 = vadd.f32 0.0, %v1942
    %v1944 = vpop.f32.mrf.mxu0
    %v1945 = vpop.f32.mrf.mxu0
    %1946 = vdwg.mxu0
    %1947 = vmatprep.subr.bf16.mxu0 %v1088
    %1948 = vmatpush1.bf16.msra.mxu0 %v1087
    %1949 = vmatprep.subr.bf16.mxu0 %v1084
    %1950 = vmatpush1.bf16.msra.mxu0 %v1083
    %1951 = vmatprep.subr.bf16.mxu0 %v1080
    %1952 = vmatpush1.bf16.msra.mxu0 %v1079
    %1953 = vmatprep.subr.bf16.mxu0 %v1076
    %1954 = vmatpush1.bf16.msra.mxu0 %v1075
    %1955 = vmatprep.subr.bf16.mxu0 %v1072
    %1956 = vmatpush1.bf16.msra.mxu0 %v1071
    %1957 = vmatprep.subr.bf16.mxu0 %v1068
    %1958 = vmatpush1.bf16.msra.mxu0 %v1067
    %1959 = vmatprep.subr.bf16.mxu0 %v1064
    %1960 = vmatpush1.bf16.msra.mxu0 %v1063
    %1961 = vmatprep.subr.bf16.mxu0 %v1060
    %1962 = vmatpush1.bf16.msra.mxu0 %v1059
    %1963 = vmatprep.subr.bf16.mxu0 0
    %1964 = vmatpush2.bf16.msra.mxu0 0
    %1965 = vmatprep.subr.bf16.mxu0 0
    %1966 = vmatpush2.bf16.msra.mxu0 0
    %1967 = vmatprep.subr.bf16.mxu0 0
    %1968 = vmatpush2.bf16.msra.mxu0 0
    %1969 = vmatprep.subr.bf16.mxu0 0
    %1970 = vmatpush2.bf16.msra.mxu0 0
    %1971 = vmatprep.subr.bf16.mxu0 0
    %1972 = vmatpush2.bf16.msra.mxu0 0
    %1973 = vmatprep.subr.bf16.mxu0 0
    %1974 = vmatpush2.bf16.msra.mxu0 0
    %1975 = vmatprep.subr.bf16.mxu0 0
    %1976 = vmatpush2.bf16.msra.mxu0 0
    %1977 = vmatprep.subr.bf16.mxu0 0
    %1978 = vmatpush2.bf16.msra.mxu0 0
    %1979 = vmatprep.mubr.bf16.mxu0 0
    %1980 = vmatmul.mubr.bf16.gmra.mxu0 %v1703
    %v1981 = vpop.f32.mrf.mxu0
    %v1982 = vadd.f32 0.0, %v1981
    %v1983 = vpop.f32.mrf.mxu0
    %v1984 = vadd.f32 0.0, %v1983
    %v1985 = vpop.f32.mrf.mxu0
    %v1986 = vpop.f32.mrf.mxu0
    %1987 = vdwg.mxu0
    %v1988 = vadd.f32 %v1902, %v1941
    %v1989 = vadd.f32 %v1903, %v1943
    %v1990 = vadd.f32 %v1904, %v1982
    %v1991 = vadd.f32 %v1905, %v1984
    %v1992 = vxor.u32 %v1988, 2147483648
    %v1993 = vmul.f32 %v1992, 1.442695
    %v1994 = vpow.pop %v1993
    %v1995 = vadd.f32 %v1994, 1.0
    %v1996 = vrcp.pop %v1995
    %v1997 = vmul.f32 1.0, %v1996
    %v1998 = vxor.u32 %v1989, 2147483648
    %v1999 = vmul.f32 %v1998, 1.442695
    %v2000 = vpow.pop %v1999
    %v2001 = vadd.f32 %v2000, 1.0
    %v2002 = vrcp.pop %v2001
    %v2003 = vmul.f32 1.0, %v2002
    %v2004 = vtanh.pop %v1990
    %v2005 = vxor.u32 %v1991, 2147483648
    %v2006 = vmul.f32 %v2005, 1.442695
    %v2007 = vpow.pop %v2006
    %v2008 = vadd.f32 %v2007, 1.0
    %v2009 = vrcp.pop %v2008
    %v2010 = vmul.f32 1.0, %v2009
    %v2011 = vmul.f32 %v2003, %v1700
    %v2012 = vmul.f32 %v1997, %v2004
    %v2013 = vadd.f32 %v2011, %v2012
    %v2014 = vtanh.pop %v2013
    %v2015 = vmul.f32 %v2010, %v2014
    %v2016 = vpack.c.bf16 %v2015, %v2015
    %2017 = vmatprep.subr.bf16.mxu0 %v1357
    %2018 = vmatpush1.bf16.msra.mxu0 %v1356
    %2019 = vmatprep.subr.bf16.mxu0 %v1353
    %2020 = vmatpush1.bf16.msra.mxu0 %v1352
    %2021 = vmatprep.subr.bf16.mxu0 %v1349
    %2022 = vmatpush1.bf16.msra.mxu0 %v1348
    %2023 = vmatprep.subr.bf16.mxu0 %v1345
    %2024 = vmatpush1.bf16.msra.mxu0 %v1344
    %2025 = vmatprep.subr.bf16.mxu0 %v1341
    %2026 = vmatpush1.bf16.msra.mxu0 %v1340
    %2027 = vmatprep.subr.bf16.mxu0 %v1337
    %2028 = vmatpush1.bf16.msra.mxu0 %v1336
    %2029 = vmatprep.subr.bf16.mxu0 %v1333
    %2030 = vmatpush1.bf16.msra.mxu0 %v1332
    %2031 = vmatprep.subr.bf16.mxu0 %v1329
    %2032 = vmatpush1.bf16.msra.mxu0 %v1328
    %2033 = vmatprep.subr.bf16.mxu0 0
    %2034 = vmatpush2.bf16.msra.mxu0 0
    %2035 = vmatprep.subr.bf16.mxu0 0
    %2036 = vmatpush2.bf16.msra.mxu0 0
    %2037 = vmatprep.subr.bf16.mxu0 0
    %2038 = vmatpush2.bf16.msra.mxu0 0
    %2039 = vmatprep.subr.bf16.mxu0 0
    %2040 = vmatpush2.bf16.msra.mxu0 0
    %2041 = vmatprep.subr.bf16.mxu0 0
    %2042 = vmatpush2.bf16.msra.mxu0 0
    %2043 = vmatprep.subr.bf16.mxu0 0
    %2044 = vmatpush2.bf16.msra.mxu0 0
    %2045 = vmatprep.subr.bf16.mxu0 0
    %2046 = vmatpush2.bf16.msra.mxu0 0
    %2047 = vmatprep.subr.bf16.mxu0 0
    %2048 = vmatpush2.bf16.msra.mxu0 0
    %2049 = vmatprep.mubr.bf16.mxu0 0
    %2050 = vmatmul.mubr.bf16.gmra.mxu0 %v2016
    %v2051 = vpop.f32.mrf.mxu0
    %v2052 = vadd.f32 0.0, %v2051
    %v2053 = vpop.f32.mrf.mxu0
    %v2054 = vadd.f32 0.0, %v2053
    %v2055 = vpop.f32.mrf.mxu0
    %v2056 = vpop.f32.mrf.mxu0
    %2057 = vdwg.mxu0
    %2058 = vmatprep.subr.bf16.mxu0 %v1359
    %2059 = vmatpush1.bf16.msra.mxu0 %v1358
    %2060 = vmatprep.subr.bf16.mxu0 %v1355
    %2061 = vmatpush1.bf16.msra.mxu0 %v1354
    %2062 = vmatprep.subr.bf16.mxu0 %v1351
    %2063 = vmatpush1.bf16.msra.mxu0 %v1350
    %2064 = vmatprep.subr.bf16.mxu0 %v1347
    %2065 = vmatpush1.bf16.msra.mxu0 %v1346
    %2066 = vmatprep.subr.bf16.mxu0 %v1343
    %2067 = vmatpush1.bf16.msra.mxu0 %v1342
    %2068 = vmatprep.subr.bf16.mxu0 %v1339
    %2069 = vmatpush1.bf16.msra.mxu0 %v1338
    %2070 = vmatprep.subr.bf16.mxu0 %v1335
    %2071 = vmatpush1.bf16.msra.mxu0 %v1334
    %2072 = vmatprep.subr.bf16.mxu0 %v1331
    %2073 = vmatpush1.bf16.msra.mxu0 %v1330
    %2074 = vmatprep.subr.bf16.mxu0 0
    %2075 = vmatpush2.bf16.msra.mxu0 0
    %2076 = vmatprep.subr.bf16.mxu0 0
    %2077 = vmatpush2.bf16.msra.mxu0 0
    %2078 = vmatprep.subr.bf16.mxu0 0
    %2079 = vmatpush2.bf16.msra.mxu0 0
    %2080 = vmatprep.subr.bf16.mxu0 0
    %2081 = vmatpush2.bf16.msra.mxu0 0
    %2082 = vmatprep.subr.bf16.mxu0 0
    %2083 = vmatpush2.bf16.msra.mxu0 0
    %2084 = vmatprep.subr.bf16.mxu0 0
    %2085 = vmatpush2.bf16.msra.mxu0 0
    %2086 = vmatprep.subr.bf16.mxu0 0
    %2087 = vmatpush2.bf16.msra.mxu0 0
    %2088 = vmatprep.subr.bf16.mxu0 0
    %2089 = vmatpush2.bf16.msra.mxu0 0
    %2090 = vmatprep.mubr.bf16.mxu0 0
    %2091 = vmatmul.mubr.bf16.gmra.mxu0 %v2016
    %v2092 = vpop.f32.mrf.mxu0
    %v2093 = vadd.f32 0.0, %v2092
    %v2094 = vpop.f32.mrf.mxu0
    %v2095 = vadd.f32 0.0, %v2094
    %v2096 = vpop.f32.mrf.mxu0
    %v2097 = vpop.f32.mrf.mxu0
    %2098 = vdwg.mxu0
    %v2099 = vadd.f32 %v1852, %v2052
    %v2100 = vadd.f32 %v1854, %v2054
    %v2101 = vadd.f32 %v1893, %v2093
    %v2102 = vadd.f32 %v1895, %v2095
    %v2103 = vxor.u32 %v2099, 2147483648
    %v2104 = vmul.f32 %v2103, 1.442695
    %v2105 = vpow.pop %v2104
    %v2106 = vadd.f32 %v2105, 1.0
    %v2107 = vrcp.pop %v2106
    %v2108 = vmul.f32 1.0, %v2107
    %v2109 = vxor.u32 %v2100, 2147483648
    %v2110 = vmul.f32 %v2109, 1.442695
    %v2111 = vpow.pop %v2110
    %v2112 = vadd.f32 %v2111, 1.0
    %v2113 = vrcp.pop %v2112
    %v2114 = vmul.f32 1.0, %v2113
    %v2115 = vtanh.pop %v2101
    %v2116 = vxor.u32 %v2102, 2147483648
    %v2117 = vmul.f32 %v2116, 1.442695
    %v2118 = vpow.pop %v2117
    %v2119 = vadd.f32 %v2118, 1.0
    %v2120 = vrcp.pop %v2119
    %v2121 = vmul.f32 1.0, %v2120
    %v2122 = vmul.f32 %v2114, %v1811
    %v2123 = vmul.f32 %v2108, %v2115
    %v2124 = vadd.f32 %v2122, %v2123
    %v2125 = vtanh.pop %v2124
    %v2126 = vmul.f32 %v2121, %v2125
    %s2127 = scalar_lea.vmem [#allocation3], 16
    %2128 = vst [vmem:[%s2127] sm:$0xff] %v2126
    %v2129 = vpack.c.bf16 %v2126, %v2126
    %2130 = vmatprep.subr.bf16.mxu0 %v836
    %2131 = vmatpush1.bf16.msra.mxu0 %v835
    %2132 = vmatprep.subr.bf16.mxu0 %v832
    %2133 = vmatpush1.bf16.msra.mxu0 %v831
    %2134 = vmatprep.subr.bf16.mxu0 %v828
    %2135 = vmatpush1.bf16.msra.mxu0 %v827
    %2136 = vmatprep.subr.bf16.mxu0 %v824
    %2137 = vmatpush1.bf16.msra.mxu0 %v823
    %2138 = vmatprep.subr.bf16.mxu0 %v820
    %2139 = vmatpush1.bf16.msra.mxu0 %v819
    %2140 = vmatprep.subr.bf16.mxu0 %v816
    %2141 = vmatpush1.bf16.msra.mxu0 %v815
    %2142 = vmatprep.subr.bf16.mxu0 %v812
    %2143 = vmatpush1.bf16.msra.mxu0 %v811
    %2144 = vmatprep.subr.bf16.mxu0 %v808
    %2145 = vmatpush1.bf16.msra.mxu0 %v807
    %2146 = vmatprep.subr.bf16.mxu0 0
    %2147 = vmatpush2.bf16.msra.mxu0 0
    %2148 = vmatprep.subr.bf16.mxu0 0
    %2149 = vmatpush2.bf16.msra.mxu0 0
    %2150 = vmatprep.subr.bf16.mxu0 0
    %2151 = vmatpush2.bf16.msra.mxu0 0
    %2152 = vmatprep.subr.bf16.mxu0 0
    %2153 = vmatpush2.bf16.msra.mxu0 0
    %2154 = vmatprep.subr.bf16.mxu0 0
    %2155 = vmatpush2.bf16.msra.mxu0 0
    %2156 = vmatprep.subr.bf16.mxu0 0
    %2157 = vmatpush2.bf16.msra.mxu0 0
    %2158 = vmatprep.subr.bf16.mxu0 0
    %2159 = vmatpush2.bf16.msra.mxu0 0
    %2160 = vmatprep.subr.bf16.mxu0 0
    %2161 = vmatpush2.bf16.msra.mxu0 0
    %2162 = vmatprep.mubr.bf16.mxu0 0
    %2163 = vmatmul.mubr.bf16.gmra.mxu0 %v2129
    %v2164 = vpop.f32.mrf.mxu0
    %v2165 = vadd.f32 %v694, %v2164
    %v2166 = vpop.f32.mrf.mxu0
    %v2167 = vadd.f32 %v698, %v2166
    %v2168 = vpop.f32.mrf.mxu0
    %v2169 = vpop.f32.mrf.mxu0
    %2170 = vdwg.mxu0
    %2171 = vmatprep.subr.bf16.mxu0 %v838
    %2172 = vmatpush1.bf16.msra.mxu0 %v837
    %2173 = vmatprep.subr.bf16.mxu0 %v834
    %2174 = vmatpush1.bf16.msra.mxu0 %v833
    %2175 = vmatprep.subr.bf16.mxu0 %v830
    %2176 = vmatpush1.bf16.msra.mxu0 %v829
    %2177 = vmatprep.subr.bf16.mxu0 %v826
    %2178 = vmatpush1.bf16.msra.mxu0 %v825
    %2179 = vmatprep.subr.bf16.mxu0 %v822
    %2180 = vmatpush1.bf16.msra.mxu0 %v821
    %2181 = vmatprep.subr.bf16.mxu0 %v818
    %2182 = vmatpush1.bf16.msra.mxu0 %v817
    %2183 = vmatprep.subr.bf16.mxu0 %v814
    %2184 = vmatpush1.bf16.msra.mxu0 %v813
    %2185 = vmatprep.subr.bf16.mxu0 %v810
    %2186 = vmatpush1.bf16.msra.mxu0 %v809
    %2187 = vmatprep.subr.bf16.mxu0 0
    %2188 = vmatpush2.bf16.msra.mxu0 0
    %2189 = vmatprep.subr.bf16.mxu0 0
    %2190 = vmatpush2.bf16.msra.mxu0 0
    %2191 = vmatprep.subr.bf16.mxu0 0
    %2192 = vmatpush2.bf16.msra.mxu0 0
    %2193 = vmatprep.subr.bf16.mxu0 0
    %2194 = vmatpush2.bf16.msra.mxu0 0
    %2195 = vmatprep.subr.bf16.mxu0 0
    %2196 = vmatpush2.bf16.msra.mxu0 0
    %2197 = vmatprep.subr.bf16.mxu0 0
    %2198 = vmatpush2.bf16.msra.mxu0 0
    %2199 = vmatprep.subr.bf16.mxu0 0
    %2200 = vmatpush2.bf16.msra.mxu0 0
    %2201 = vmatprep.subr.bf16.mxu0 0
    %2202 = vmatpush2.bf16.msra.mxu0 0
    %2203 = vmatprep.mubr.bf16.mxu0 0
    %2204 = vmatmul.mubr.bf16.gmra.mxu0 %v2129
    %v2205 = vpop.f32.mrf.mxu0
    %v2206 = vadd.f32 %v702, %v2205
    %v2207 = vpop.f32.mrf.mxu0
    %v2208 = vadd.f32 %v706, %v2207
    %v2209 = vpop.f32.mrf.mxu0
    %v2210 = vpop.f32.mrf.mxu0
    %2211 = vdwg.mxu0
    %s2212 = smul.u32 3, 4
    %s2213 = smul.addr %s2212, 8
    %s2214 = scalar_lea.vmem [#allocation2], %s2213
    %v2215 = vld [vmem:[%s2214] sm:$0xff]
    %v2216 = vld [vmem:[%s2214 + $0x8] sm:$0xff]
    %v2217 = vld [vmem:[%s2214 + $0x10] sm:$0xff]
    %v2218 = vld [vmem:[%s2214 + $0x18] sm:$0xff]
    %2219 = vmatprep.subr.bf16.mxu0 %v1086
    %2220 = vmatpush1.bf16.msra.mxu0 %v1085
    %2221 = vmatprep.subr.bf16.mxu0 %v1082
    %2222 = vmatpush1.bf16.msra.mxu0 %v1081
    %2223 = vmatprep.subr.bf16.mxu0 %v1078
    %2224 = vmatpush1.bf16.msra.mxu0 %v1077
    %2225 = vmatprep.subr.bf16.mxu0 %v1074
    %2226 = vmatpush1.bf16.msra.mxu0 %v1073
    %2227 = vmatprep.subr.bf16.mxu0 %v1070
    %2228 = vmatpush1.bf16.msra.mxu0 %v1069
    %2229 = vmatprep.subr.bf16.mxu0 %v1066
    %2230 = vmatpush1.bf16.msra.mxu0 %v1065
    %2231 = vmatprep.subr.bf16.mxu0 %v1062
    %2232 = vmatpush1.bf16.msra.mxu0 %v1061
    %2233 = vmatprep.subr.bf16.mxu0 %v1058
    %2234 = vmatpush1.bf16.msra.mxu0 %v1057
    %2235 = vmatprep.subr.bf16.mxu0 0
    %2236 = vmatpush2.bf16.msra.mxu0 0
    %2237 = vmatprep.subr.bf16.mxu0 0
    %2238 = vmatpush2.bf16.msra.mxu0 0
    %2239 = vmatprep.subr.bf16.mxu0 0
    %2240 = vmatpush2.bf16.msra.mxu0 0
    %2241 = vmatprep.subr.bf16.mxu0 0
    %2242 = vmatpush2.bf16.msra.mxu0 0
    %2243 = vmatprep.subr.bf16.mxu0 0
    %2244 = vmatpush2.bf16.msra.mxu0 0
    %2245 = vmatprep.subr.bf16.mxu0 0
    %2246 = vmatpush2.bf16.msra.mxu0 0
    %2247 = vmatprep.subr.bf16.mxu0 0
    %2248 = vmatpush2.bf16.msra.mxu0 0
    %2249 = vmatprep.subr.bf16.mxu0 0
    %2250 = vmatpush2.bf16.msra.mxu0 0
    %2251 = vmatprep.mubr.bf16.mxu0 0
    %2252 = vmatmul.mubr.bf16.gmra.mxu0 %v2016
    %v2253 = vpop.f32.mrf.mxu0
    %v2254 = vadd.f32 0.0, %v2253
    %v2255 = vpop.f32.mrf.mxu0
    %v2256 = vadd.f32 0.0, %v2255
    %v2257 = vpop.f32.mrf.mxu0
    %v2258 = vpop.f32.mrf.mxu0
    %2259 = vdwg.mxu0
    %2260 = vmatprep.subr.bf16.mxu0 %v1088
    %2261 = vmatpush1.bf16.msra.mxu0 %v1087
    %2262 = vmatprep.subr.bf16.mxu0 %v1084
    %2263 = vmatpush1.bf16.msra.mxu0 %v1083
    %2264 = vmatprep.subr.bf16.mxu0 %v1080
    %2265 = vmatpush1.bf16.msra.mxu0 %v1079
    %2266 = vmatprep.subr.bf16.mxu0 %v1076
    %2267 = vmatpush1.bf16.msra.mxu0 %v1075
    %2268 = vmatprep.subr.bf16.mxu0 %v1072
    %2269 = vmatpush1.bf16.msra.mxu0 %v1071
    %2270 = vmatprep.subr.bf16.mxu0 %v1068
    %2271 = vmatpush1.bf16.msra.mxu0 %v1067
    %2272 = vmatprep.subr.bf16.mxu0 %v1064
    %2273 = vmatpush1.bf16.msra.mxu0 %v1063
    %2274 = vmatprep.subr.bf16.mxu0 %v1060
    %2275 = vmatpush1.bf16.msra.mxu0 %v1059
    %2276 = vmatprep.subr.bf16.mxu0 0
    %2277 = vmatpush2.bf16.msra.mxu0 0
    %2278 = vmatprep.subr.bf16.mxu0 0
    %2279 = vmatpush2.bf16.msra.mxu0 0
    %2280 = vmatprep.subr.bf16.mxu0 0
    %2281 = vmatpush2.bf16.msra.mxu0 0
    %2282 = vmatprep.subr.bf16.mxu0 0
    %2283 = vmatpush2.bf16.msra.mxu0 0
    %2284 = vmatprep.subr.bf16.mxu0 0
    %2285 = vmatpush2.bf16.msra.mxu0 0
    %2286 = vmatprep.subr.bf16.mxu0 0
    %2287 = vmatpush2.bf16.msra.mxu0 0
    %2288 = vmatprep.subr.bf16.mxu0 0
    %2289 = vmatpush2.bf16.msra.mxu0 0
    %2290 = vmatprep.subr.bf16.mxu0 0
    %2291 = vmatpush2.bf16.msra.mxu0 0
    %2292 = vmatprep.mubr.bf16.mxu0 0
    %2293 = vmatmul.mubr.bf16.gmra.mxu0 %v2016
    %v2294 = vpop.f32.mrf.mxu0
    %v2295 = vadd.f32 0.0, %v2294
    %v2296 = vpop.f32.mrf.mxu0
    %v2297 = vadd.f32 0.0, %v2296
    %v2298 = vpop.f32.mrf.mxu0
    %v2299 = vpop.f32.mrf.mxu0
    %2300 = vdwg.mxu0
    %v2301 = vadd.f32 %v2215, %v2254
    %v2302 = vadd.f32 %v2216, %v2256
    %v2303 = vadd.f32 %v2217, %v2295
    %v2304 = vadd.f32 %v2218, %v2297
    %v2305 = vxor.u32 %v2301, 2147483648
    %v2306 = vmul.f32 %v2305, 1.442695
    %v2307 = vpow.pop %v2306
    %v2308 = vadd.f32 %v2307, 1.0
    %v2309 = vrcp.pop %v2308
    %v2310 = vmul.f32 1.0, %v2309
    %v2311 = vxor.u32 %v2302, 2147483648
    %v2312 = vmul.f32 %v2311, 1.442695
    %v2313 = vpow.pop %v2312
    %v2314 = vadd.f32 %v2313, 1.0
    %v2315 = vrcp.pop %v2314
    %v2316 = vmul.f32 1.0, %v2315
    %v2317 = vtanh.pop %v2303
    %v2318 = vxor.u32 %v2304, 2147483648
    %v2319 = vmul.f32 %v2318, 1.442695
    %v2320 = vpow.pop %v2319
    %v2321 = vadd.f32 %v2320, 1.0
    %v2322 = vrcp.pop %v2321
    %v2323 = vmul.f32 1.0, %v2322
    %v2324 = vmul.f32 %v2316, %v2013
    %v2325 = vmul.f32 %v2310, %v2317
    %v2326 = vadd.f32 %v2324, %v2325
    %v2327 = vtanh.pop %v2326
    %v2328 = vmul.f32 %v2323, %v2327
    %v2329 = vpack.c.bf16 %v2328, %v2328
    %2330 = vmatprep.subr.bf16.mxu0 %v1357
    %2331 = vmatpush1.bf16.msra.mxu0 %v1356
    %2332 = vmatprep.subr.bf16.mxu0 %v1353
    %2333 = vmatpush1.bf16.msra.mxu0 %v1352
    %2334 = vmatprep.subr.bf16.mxu0 %v1349
    %2335 = vmatpush1.bf16.msra.mxu0 %v1348
    %2336 = vmatprep.subr.bf16.mxu0 %v1345
    %2337 = vmatpush1.bf16.msra.mxu0 %v1344
    %2338 = vmatprep.subr.bf16.mxu0 %v1341
    %2339 = vmatpush1.bf16.msra.mxu0 %v1340
    %2340 = vmatprep.subr.bf16.mxu0 %v1337
    %2341 = vmatpush1.bf16.msra.mxu0 %v1336
    %2342 = vmatprep.subr.bf16.mxu0 %v1333
    %2343 = vmatpush1.bf16.msra.mxu0 %v1332
    %2344 = vmatprep.subr.bf16.mxu0 %v1329
    %2345 = vmatpush1.bf16.msra.mxu0 %v1328
    %2346 = vmatprep.subr.bf16.mxu0 0
    %2347 = vmatpush2.bf16.msra.mxu0 0
    %2348 = vmatprep.subr.bf16.mxu0 0
    %2349 = vmatpush2.bf16.msra.mxu0 0
    %2350 = vmatprep.subr.bf16.mxu0 0
    %2351 = vmatpush2.bf16.msra.mxu0 0
    %2352 = vmatprep.subr.bf16.mxu0 0
    %2353 = vmatpush2.bf16.msra.mxu0 0
    %2354 = vmatprep.subr.bf16.mxu0 0
    %2355 = vmatpush2.bf16.msra.mxu0 0
    %2356 = vmatprep.subr.bf16.mxu0 0
    %2357 = vmatpush2.bf16.msra.mxu0 0
    %2358 = vmatprep.subr.bf16.mxu0 0
    %2359 = vmatpush2.bf16.msra.mxu0 0
    %2360 = vmatprep.subr.bf16.mxu0 0
    %2361 = vmatpush2.bf16.msra.mxu0 0
    %2362 = vmatprep.mubr.bf16.mxu0 0
    %2363 = vmatmul.mubr.bf16.gmra.mxu0 %v2329
    %v2364 = vpop.f32.mrf.mxu0
    %v2365 = vadd.f32 0.0, %v2364
    %v2366 = vpop.f32.mrf.mxu0
    %v2367 = vadd.f32 0.0, %v2366
    %v2368 = vpop.f32.mrf.mxu0
    %v2369 = vpop.f32.mrf.mxu0
    %2370 = vdwg.mxu0
    %2371 = vmatprep.subr.bf16.mxu0 %v1359
    %2372 = vmatpush1.bf16.msra.mxu0 %v1358
    %2373 = vmatprep.subr.bf16.mxu0 %v1355
    %2374 = vmatpush1.bf16.msra.mxu0 %v1354
    %2375 = vmatprep.subr.bf16.mxu0 %v1351
    %2376 = vmatpush1.bf16.msra.mxu0 %v1350
    %2377 = vmatprep.subr.bf16.mxu0 %v1347
    %2378 = vmatpush1.bf16.msra.mxu0 %v1346
    %2379 = vmatprep.subr.bf16.mxu0 %v1343
    %2380 = vmatpush1.bf16.msra.mxu0 %v1342
    %2381 = vmatprep.subr.bf16.mxu0 %v1339
    %2382 = vmatpush1.bf16.msra.mxu0 %v1338
    %2383 = vmatprep.subr.bf16.mxu0 %v1335
    %2384 = vmatpush1.bf16.msra.mxu0 %v1334
    %2385 = vmatprep.subr.bf16.mxu0 %v1331
    %2386 = vmatpush1.bf16.msra.mxu0 %v1330
    %2387 = vmatprep.subr.bf16.mxu0 0
    %2388 = vmatpush2.bf16.msra.mxu0 0
    %2389 = vmatprep.subr.bf16.mxu0 0
    %2390 = vmatpush2.bf16.msra.mxu0 0
    %2391 = vmatprep.subr.bf16.mxu0 0
    %2392 = vmatpush2.bf16.msra.mxu0 0
    %2393 = vmatprep.subr.bf16.mxu0 0
    %2394 = vmatpush2.bf16.msra.mxu0 0
    %2395 = vmatprep.subr.bf16.mxu0 0
    %2396 = vmatpush2.bf16.msra.mxu0 0
    %2397 = vmatprep.subr.bf16.mxu0 0
    %2398 = vmatpush2.bf16.msra.mxu0 0
    %2399 = vmatprep.subr.bf16.mxu0 0
    %2400 = vmatpush2.bf16.msra.mxu0 0
    %2401 = vmatprep.subr.bf16.mxu0 0
    %2402 = vmatpush2.bf16.msra.mxu0 0
    %2403 = vmatprep.mubr.bf16.mxu0 0
    %2404 = vmatmul.mubr.bf16.gmra.mxu0 %v2329
    %v2405 = vpop.f32.mrf.mxu0
    %v2406 = vadd.f32 0.0, %v2405
    %v2407 = vpop.f32.mrf.mxu0
    %v2408 = vadd.f32 0.0, %v2407
    %v2409 = vpop.f32.mrf.mxu0
    %v2410 = vpop.f32.mrf.mxu0
    %2411 = vdwg.mxu0
    %v2412 = vadd.f32 %v2165, %v2365
    %v2413 = vadd.f32 %v2167, %v2367
    %v2414 = vadd.f32 %v2206, %v2406
    %v2415 = vadd.f32 %v2208, %v2408
    %v2416 = vxor.u32 %v2412, 2147483648
    %v2417 = vmul.f32 %v2416, 1.442695
    %v2418 = vpow.pop %v2417
    %v2419 = vadd.f32 %v2418, 1.0
    %v2420 = vrcp.pop %v2419
    %v2421 = vmul.f32 1.0, %v2420
    %v2422 = vxor.u32 %v2413, 2147483648
    %v2423 = vmul.f32 %v2422, 1.442695
    %v2424 = vpow.pop %v2423
    %v2425 = vadd.f32 %v2424, 1.0
    %v2426 = vrcp.pop %v2425
    %v2427 = vmul.f32 1.0, %v2426
    %v2428 = vtanh.pop %v2414
    %v2429 = vxor.u32 %v2415, 2147483648
    %v2430 = vmul.f32 %v2429, 1.442695
    %v2431 = vpow.pop %v2430
    %v2432 = vadd.f32 %v2431, 1.0
    %v2433 = vrcp.pop %v2432
    %v2434 = vmul.f32 1.0, %v2433
    %v2435 = vmul.f32 %v2427, %v2124
    %v2436 = vmul.f32 %v2421, %v2428
    %v2437 = vadd.f32 %v2435, %v2436
    %v2438 = vtanh.pop %v2437
    %v2439 = vmul.f32 %v2434, %v2438
    %s2440 = scalar_lea.vmem [#allocation3], 24
    %2441 = vst [vmem:[%s2440] sm:$0xff] %v2439
    %v2442 = vpack.c.bf16 %v2439, %v2439
    %2443 = vmatprep.subr.bf16.mxu0 %v836
    %2444 = vmatpush1.bf16.msra.mxu0 %v835
    %2445 = vmatprep.subr.bf16.mxu0 %v832
    %2446 = vmatpush1.bf16.msra.mxu0 %v831
    %2447 = vmatprep.subr.bf16.mxu0 %v828
    %2448 = vmatpush1.bf16.msra.mxu0 %v827
    %2449 = vmatprep.subr.bf16.mxu0 %v824
    %2450 = vmatpush1.bf16.msra.mxu0 %v823
    %2451 = vmatprep.subr.bf16.mxu0 %v820
    %2452 = vmatpush1.bf16.msra.mxu0 %v819
    %2453 = vmatprep.subr.bf16.mxu0 %v816
    %2454 = vmatpush1.bf16.msra.mxu0 %v815
    %2455 = vmatprep.subr.bf16.mxu0 %v812
    %2456 = vmatpush1.bf16.msra.mxu0 %v811
    %2457 = vmatprep.subr.bf16.mxu0 %v808
    %2458 = vmatpush1.bf16.msra.mxu0 %v807
    %2459 = vmatprep.subr.bf16.mxu0 0
    %2460 = vmatpush2.bf16.msra.mxu0 0
    %2461 = vmatprep.subr.bf16.mxu0 0
    %2462 = vmatpush2.bf16.msra.mxu0 0
    %2463 = vmatprep.subr.bf16.mxu0 0
    %2464 = vmatpush2.bf16.msra.mxu0 0
    %2465 = vmatprep.subr.bf16.mxu0 0
    %2466 = vmatpush2.bf16.msra.mxu0 0
    %2467 = vmatprep.subr.bf16.mxu0 0
    %2468 = vmatpush2.bf16.msra.mxu0 0
    %2469 = vmatprep.subr.bf16.mxu0 0
    %2470 = vmatpush2.bf16.msra.mxu0 0
    %2471 = vmatprep.subr.bf16.mxu0 0
    %2472 = vmatpush2.bf16.msra.mxu0 0
    %2473 = vmatprep.subr.bf16.mxu0 0
    %2474 = vmatpush2.bf16.msra.mxu0 0
    %2475 = vmatprep.mubr.bf16.mxu0 0
    %2476 = vmatmul.mubr.bf16.gmra.mxu0 %v2442
    %v2477 = vpop.f32.mrf.mxu0
    %v2478 = vadd.f32 %v694, %v2477
    %v2479 = vpop.f32.mrf.mxu0
    %v2480 = vadd.f32 %v698, %v2479
    %v2481 = vpop.f32.mrf.mxu0
    %v2482 = vpop.f32.mrf.mxu0
    %2483 = vdwg.mxu0
    %2484 = vmatprep.subr.bf16.mxu0 %v838
    %2485 = vmatpush1.bf16.msra.mxu0 %v837
    %2486 = vmatprep.subr.bf16.mxu0 %v834
    %2487 = vmatpush1.bf16.msra.mxu0 %v833
    %2488 = vmatprep.subr.bf16.mxu0 %v830
    %2489 = vmatpush1.bf16.msra.mxu0 %v829
    %2490 = vmatprep.subr.bf16.mxu0 %v826
    %2491 = vmatpush1.bf16.msra.mxu0 %v825
    %2492 = vmatprep.subr.bf16.mxu0 %v822
    %2493 = vmatpush1.bf16.msra.mxu0 %v821
    %2494 = vmatprep.subr.bf16.mxu0 %v818
    %2495 = vmatpush1.bf16.msra.mxu0 %v817
    %2496 = vmatprep.subr.bf16.mxu0 %v814
    %2497 = vmatpush1.bf16.msra.mxu0 %v813
    %2498 = vmatprep.subr.bf16.mxu0 %v810
    %2499 = vmatpush1.bf16.msra.mxu0 %v809
    %2500 = vmatprep.subr.bf16.mxu0 0
    %2501 = vmatpush2.bf16.msra.mxu0 0
    %2502 = vmatprep.subr.bf16.mxu0 0
    %2503 = vmatpush2.bf16.msra.mxu0 0
    %2504 = vmatprep.subr.bf16.mxu0 0
    %2505 = vmatpush2.bf16.msra.mxu0 0
    %2506 = vmatprep.subr.bf16.mxu0 0
    %2507 = vmatpush2.bf16.msra.mxu0 0
    %2508 = vmatprep.subr.bf16.mxu0 0
    %2509 = vmatpush2.bf16.msra.mxu0 0
    %2510 = vmatprep.subr.bf16.mxu0 0
    %2511 = vmatpush2.bf16.msra.mxu0 0
    %2512 = vmatprep.subr.bf16.mxu0 0
    %2513 = vmatpush2.bf16.msra.mxu0 0
    %2514 = vmatprep.subr.bf16.mxu0 0
    %2515 = vmatpush2.bf16.msra.mxu0 0
    %2516 = vmatprep.mubr.bf16.mxu0 0
    %2517 = vmatmul.mubr.bf16.gmra.mxu0 %v2442
    %v2518 = vpop.f32.mrf.mxu0
    %v2519 = vadd.f32 %v702, %v2518
    %v2520 = vpop.f32.mrf.mxu0
    %v2521 = vadd.f32 %v706, %v2520
    %v2522 = vpop.f32.mrf.mxu0
    %v2523 = vpop.f32.mrf.mxu0
    %2524 = vdwg.mxu0
    %s2525 = smul.u32 4, 4
    %s2526 = smul.addr %s2525, 8
    %s2527 = scalar_lea.vmem [#allocation2], %s2526
    %v2528 = vld [vmem:[%s2527] sm:$0xff]
    %v2529 = vld [vmem:[%s2527 + $0x8] sm:$0xff]
    %v2530 = vld [vmem:[%s2527 + $0x10] sm:$0xff]
    %v2531 = vld [vmem:[%s2527 + $0x18] sm:$0xff]
    %2532 = vmatprep.subr.bf16.mxu0 %v1086
    %2533 = vmatpush1.bf16.msra.mxu0 %v1085
    %2534 = vmatprep.subr.bf16.mxu0 %v1082
    %2535 = vmatpush1.bf16.msra.mxu0 %v1081
    %2536 = vmatprep.subr.bf16.mxu0 %v1078
    %2537 = vmatpush1.bf16.msra.mxu0 %v1077
    %2538 = vmatprep.subr.bf16.mxu0 %v1074
    %2539 = vmatpush1.bf16.msra.mxu0 %v1073
    %2540 = vmatprep.subr.bf16.mxu0 %v1070
    %2541 = vmatpush1.bf16.msra.mxu0 %v1069
    %2542 = vmatprep.subr.bf16.mxu0 %v1066
    %2543 = vmatpush1.bf16.msra.mxu0 %v1065
    %2544 = vmatprep.subr.bf16.mxu0 %v1062
    %2545 = vmatpush1.bf16.msra.mxu0 %v1061
    %2546 = vmatprep.subr.bf16.mxu0 %v1058
    %2547 = vmatpush1.bf16.msra.mxu0 %v1057
    %2548 = vmatprep.subr.bf16.mxu0 0
    %2549 = vmatpush2.bf16.msra.mxu0 0
    %2550 = vmatprep.subr.bf16.mxu0 0
    %2551 = vmatpush2.bf16.msra.mxu0 0
    %2552 = vmatprep.subr.bf16.mxu0 0
    %2553 = vmatpush2.bf16.msra.mxu0 0
    %2554 = vmatprep.subr.bf16.mxu0 0
    %2555 = vmatpush2.bf16.msra.mxu0 0
    %2556 = vmatprep.subr.bf16.mxu0 0
    %2557 = vmatpush2.bf16.msra.mxu0 0
    %2558 = vmatprep.subr.bf16.mxu0 0
    %2559 = vmatpush2.bf16.msra.mxu0 0
    %2560 = vmatprep.subr.bf16.mxu0 0
    %2561 = vmatpush2.bf16.msra.mxu0 0
    %2562 = vmatprep.subr.bf16.mxu0 0
    %2563 = vmatpush2.bf16.msra.mxu0 0
    %2564 = vmatprep.mubr.bf16.mxu0 0
    %2565 = vmatmul.mubr.bf16.gmra.mxu0 %v2329
    %v2566 = vpop.f32.mrf.mxu0
    %v2567 = vadd.f32 0.0, %v2566
    %v2568 = vpop.f32.mrf.mxu0
    %v2569 = vadd.f32 0.0, %v2568
    %v2570 = vpop.f32.mrf.mxu0
    %v2571 = vpop.f32.mrf.mxu0
    %2572 = vdwg.mxu0
    %2573 = vmatprep.subr.bf16.mxu0 %v1088
    %2574 = vmatpush1.bf16.msra.mxu0 %v1087
    %2575 = vmatprep.subr.bf16.mxu0 %v1084
    %2576 = vmatpush1.bf16.msra.mxu0 %v1083
    %2577 = vmatprep.subr.bf16.mxu0 %v1080
    %2578 = vmatpush1.bf16.msra.mxu0 %v1079
    %2579 = vmatprep.subr.bf16.mxu0 %v1076
    %2580 = vmatpush1.bf16.msra.mxu0 %v1075
    %2581 = vmatprep.subr.bf16.mxu0 %v1072
    %2582 = vmatpush1.bf16.msra.mxu0 %v1071
    %2583 = vmatprep.subr.bf16.mxu0 %v1068
    %2584 = vmatpush1.bf16.msra.mxu0 %v1067
    %2585 = vmatprep.subr.bf16.mxu0 %v1064
    %2586 = vmatpush1.bf16.msra.mxu0 %v1063
    %2587 = vmatprep.subr.bf16.mxu0 %v1060
    %2588 = vmatpush1.bf16.msra.mxu0 %v1059
    %2589 = vmatprep.subr.bf16.mxu0 0
    %2590 = vmatpush2.bf16.msra.mxu0 0
    %2591 = vmatprep.subr.bf16.mxu0 0
    %2592 = vmatpush2.bf16.msra.mxu0 0
    %2593 = vmatprep.subr.bf16.mxu0 0
    %2594 = vmatpush2.bf16.msra.mxu0 0
    %2595 = vmatprep.subr.bf16.mxu0 0
    %2596 = vmatpush2.bf16.msra.mxu0 0
    %2597 = vmatprep.subr.bf16.mxu0 0
    %2598 = vmatpush2.bf16.msra.mxu0 0
    %2599 = vmatprep.subr.bf16.mxu0 0
    %2600 = vmatpush2.bf16.msra.mxu0 0
    %2601 = vmatprep.subr.bf16.mxu0 0
    %2602 = vmatpush2.bf16.msra.mxu0 0
    %2603 = vmatprep.subr.bf16.mxu0 0
    %2604 = vmatpush2.bf16.msra.mxu0 0
    %2605 = vmatprep.mubr.bf16.mxu0 0
    %2606 = vmatmul.mubr.bf16.gmra.mxu0 %v2329
    %v2607 = vpop.f32.mrf.mxu0
    %v2608 = vadd.f32 0.0, %v2607
    %v2609 = vpop.f32.mrf.mxu0
    %v2610 = vadd.f32 0.0, %v2609
    %v2611 = vpop.f32.mrf.mxu0
    %v2612 = vpop.f32.mrf.mxu0
    %2613 = vdwg.mxu0
    %v2614 = vadd.f32 %v2528, %v2567
    %v2615 = vadd.f32 %v2529, %v2569
    %v2616 = vadd.f32 %v2530, %v2608
    %v2617 = vadd.f32 %v2531, %v2610
    %v2618 = vxor.u32 %v2614, 2147483648
    %v2619 = vmul.f32 %v2618, 1.442695
    %v2620 = vpow.pop %v2619
    %v2621 = vadd.f32 %v2620, 1.0
    %v2622 = vrcp.pop %v2621
    %v2623 = vmul.f32 1.0, %v2622
    %v2624 = vxor.u32 %v2615, 2147483648
    %v2625 = vmul.f32 %v2624, 1.442695
    %v2626 = vpow.pop %v2625
    %v2627 = vadd.f32 %v2626, 1.0
    %v2628 = vrcp.pop %v2627
    %v2629 = vmul.f32 1.0, %v2628
    %v2630 = vtanh.pop %v2616
    %v2631 = vxor.u32 %v2617, 2147483648
    %v2632 = vmul.f32 %v2631, 1.442695
    %v2633 = vpow.pop %v2632
    %v2634 = vadd.f32 %v2633, 1.0
    %v2635 = vrcp.pop %v2634
    %v2636 = vmul.f32 1.0, %v2635
    %v2637 = vmul.f32 %v2629, %v2326
    %v2638 = vmul.f32 %v2623, %v2630
    %v2639 = vadd.f32 %v2637, %v2638
    %v2640 = vtanh.pop %v2639
    %v2641 = vmul.f32 %v2636, %v2640
    %v2642 = vpack.c.bf16 %v2641, %v2641
    %2643 = vmatprep.subr.bf16.mxu0 %v1357
    %2644 = vmatpush1.bf16.msra.mxu0 %v1356
    %2645 = vmatprep.subr.bf16.mxu0 %v1353
    %2646 = vmatpush1.bf16.msra.mxu0 %v1352
    %2647 = vmatprep.subr.bf16.mxu0 %v1349
    %2648 = vmatpush1.bf16.msra.mxu0 %v1348
    %2649 = vmatprep.subr.bf16.mxu0 %v1345
    %2650 = vmatpush1.bf16.msra.mxu0 %v1344
    %2651 = vmatprep.subr.bf16.mxu0 %v1341
    %2652 = vmatpush1.bf16.msra.mxu0 %v1340
    %2653 = vmatprep.subr.bf16.mxu0 %v1337
    %2654 = vmatpush1.bf16.msra.mxu0 %v1336
    %2655 = vmatprep.subr.bf16.mxu0 %v1333
    %2656 = vmatpush1.bf16.msra.mxu0 %v1332
    %2657 = vmatprep.subr.bf16.mxu0 %v1329
    %2658 = vmatpush1.bf16.msra.mxu0 %v1328
    %2659 = vmatprep.subr.bf16.mxu0 0
    %2660 = vmatpush2.bf16.msra.mxu0 0
    %2661 = vmatprep.subr.bf16.mxu0 0
    %2662 = vmatpush2.bf16.msra.mxu0 0
    %2663 = vmatprep.subr.bf16.mxu0 0
    %2664 = vmatpush2.bf16.msra.mxu0 0
    %2665 = vmatprep.subr.bf16.mxu0 0
    %2666 = vmatpush2.bf16.msra.mxu0 0
    %2667 = vmatprep.subr.bf16.mxu0 0
    %2668 = vmatpush2.bf16.msra.mxu0 0
    %2669 = vmatprep.subr.bf16.mxu0 0
    %2670 = vmatpush2.bf16.msra.mxu0 0
    %2671 = vmatprep.subr.bf16.mxu0 0
    %2672 = vmatpush2.bf16.msra.mxu0 0
    %2673 = vmatprep.subr.bf16.mxu0 0
    %2674 = vmatpush2.bf16.msra.mxu0 0
    %2675 = vmatprep.mubr.bf16.mxu0 0
    %2676 = vmatmul.mubr.bf16.gmra.mxu0 %v2642
    %v2677 = vpop.f32.mrf.mxu0
    %v2678 = vadd.f32 0.0, %v2677
    %v2679 = vpop.f32.mrf.mxu0
    %v2680 = vadd.f32 0.0, %v2679
    %v2681 = vpop.f32.mrf.mxu0
    %v2682 = vpop.f32.mrf.mxu0
    %2683 = vdwg.mxu0
    %2684 = vmatprep.subr.bf16.mxu0 %v1359
    %2685 = vmatpush1.bf16.msra.mxu0 %v1358
    %2686 = vmatprep.subr.bf16.mxu0 %v1355
    %2687 = vmatpush1.bf16.msra.mxu0 %v1354
    %2688 = vmatprep.subr.bf16.mxu0 %v1351
    %2689 = vmatpush1.bf16.msra.mxu0 %v1350
    %2690 = vmatprep.subr.bf16.mxu0 %v1347
    %2691 = vmatpush1.bf16.msra.mxu0 %v1346
    %2692 = vmatprep.subr.bf16.mxu0 %v1343
    %2693 = vmatpush1.bf16.msra.mxu0 %v1342
    %2694 = vmatprep.subr.bf16.mxu0 %v1339
    %2695 = vmatpush1.bf16.msra.mxu0 %v1338
    %2696 = vmatprep.subr.bf16.mxu0 %v1335
    %2697 = vmatpush1.bf16.msra.mxu0 %v1334
    %2698 = vmatprep.subr.bf16.mxu0 %v1331
    %2699 = vmatpush1.bf16.msra.mxu0 %v1330
    %2700 = vmatprep.subr.bf16.mxu0 0
    %2701 = vmatpush2.bf16.msra.mxu0 0
    %2702 = vmatprep.subr.bf16.mxu0 0
    %2703 = vmatpush2.bf16.msra.mxu0 0
    %2704 = vmatprep.subr.bf16.mxu0 0
    %2705 = vmatpush2.bf16.msra.mxu0 0
    %2706 = vmatprep.subr.bf16.mxu0 0
    %2707 = vmatpush2.bf16.msra.mxu0 0
    %2708 = vmatprep.subr.bf16.mxu0 0
    %2709 = vmatpush2.bf16.msra.mxu0 0
    %2710 = vmatprep.subr.bf16.mxu0 0
    %2711 = vmatpush2.bf16.msra.mxu0 0
    %2712 = vmatprep.subr.bf16.mxu0 0
    %2713 = vmatpush2.bf16.msra.mxu0 0
    %2714 = vmatprep.subr.bf16.mxu0 0
    %2715 = vmatpush2.bf16.msra.mxu0 0
    %2716 = vmatprep.mubr.bf16.mxu0 0
    %2717 = vmatmul.mubr.bf16.gmra.mxu0 %v2642
    %v2718 = vpop.f32.mrf.mxu0
    %v2719 = vadd.f32 0.0, %v2718
    %v2720 = vpop.f32.mrf.mxu0
    %v2721 = vadd.f32 0.0, %v2720
    %v2722 = vpop.f32.mrf.mxu0
    %v2723 = vpop.f32.mrf.mxu0
    %2724 = vdwg.mxu0
    %v2725 = vadd.f32 %v2478, %v2678
    %v2726 = vadd.f32 %v2480, %v2680
    %v2727 = vadd.f32 %v2519, %v2719
    %v2728 = vadd.f32 %v2521, %v2721
    %v2729 = vxor.u32 %v2725, 2147483648
    %v2730 = vmul.f32 %v2729, 1.442695
    %v2731 = vpow.pop %v2730
    %v2732 = vadd.f32 %v2731, 1.0
    %v2733 = vrcp.pop %v2732
    %v2734 = vmul.f32 1.0, %v2733
    %v2735 = vxor.u32 %v2726, 2147483648
    %v2736 = vmul.f32 %v2735, 1.442695
    %v2737 = vpow.pop %v2736
    %v2738 = vadd.f32 %v2737, 1.0
    %v2739 = vrcp.pop %v2738
    %v2740 = vmul.f32 1.0, %v2739
    %v2741 = vtanh.pop %v2727
    %v2742 = vxor.u32 %v2728, 2147483648
    %v2743 = vmul.f32 %v2742, 1.442695
    %v2744 = vpow.pop %v2743
    %v2745 = vadd.f32 %v2744, 1.0
    %v2746 = vrcp.pop %v2745
    %v2747 = vmul.f32 1.0, %v2746
    %v2748 = vmul.f32 %v2740, %v2437
    %v2749 = vmul.f32 %v2734, %v2741
    %v2750 = vadd.f32 %v2748, %v2749
    %v2751 = vtanh.pop %v2750
    %v2752 = vmul.f32 %v2747, %v2751
    %s2753 = scalar_lea.vmem [#allocation3], 32
    %2754 = vst [vmem:[%s2753] sm:$0xff] %v2752
    %v2755 = vpack.c.bf16 %v2752, %v2752
    %2756 = vmatprep.subr.bf16.mxu0 %v836
    %2757 = vmatpush1.bf16.msra.mxu0 %v835
    %2758 = vmatprep.subr.bf16.mxu0 %v832
    %2759 = vmatpush1.bf16.msra.mxu0 %v831
    %2760 = vmatprep.subr.bf16.mxu0 %v828
    %2761 = vmatpush1.bf16.msra.mxu0 %v827
    %2762 = vmatprep.subr.bf16.mxu0 %v824
    %2763 = vmatpush1.bf16.msra.mxu0 %v823
    %2764 = vmatprep.subr.bf16.mxu0 %v820
    %2765 = vmatpush1.bf16.msra.mxu0 %v819
    %2766 = vmatprep.subr.bf16.mxu0 %v816
    %2767 = vmatpush1.bf16.msra.mxu0 %v815
    %2768 = vmatprep.subr.bf16.mxu0 %v812
    %2769 = vmatpush1.bf16.msra.mxu0 %v811
    %2770 = vmatprep.subr.bf16.mxu0 %v808
    %2771 = vmatpush1.bf16.msra.mxu0 %v807
    %2772 = vmatprep.subr.bf16.mxu0 0
    %2773 = vmatpush2.bf16.msra.mxu0 0
    %2774 = vmatprep.subr.bf16.mxu0 0
    %2775 = vmatpush2.bf16.msra.mxu0 0
    %2776 = vmatprep.subr.bf16.mxu0 0
    %2777 = vmatpush2.bf16.msra.mxu0 0
    %2778 = vmatprep.subr.bf16.mxu0 0
    %2779 = vmatpush2.bf16.msra.mxu0 0
    %2780 = vmatprep.subr.bf16.mxu0 0
    %2781 = vmatpush2.bf16.msra.mxu0 0
    %2782 = vmatprep.subr.bf16.mxu0 0
    %2783 = vmatpush2.bf16.msra.mxu0 0
    %2784 = vmatprep.subr.bf16.mxu0 0
    %2785 = vmatpush2.bf16.msra.mxu0 0
    %2786 = vmatprep.subr.bf16.mxu0 0
    %2787 = vmatpush2.bf16.msra.mxu0 0
    %2788 = vmatprep.mubr.bf16.mxu0 0
    %2789 = vmatmul.mubr.bf16.gmra.mxu0 %v2755
    %v2790 = vpop.f32.mrf.mxu0
    %v2791 = vadd.f32 %v694, %v2790
    %v2792 = vpop.f32.mrf.mxu0
    %v2793 = vadd.f32 %v698, %v2792
    %v2794 = vpop.f32.mrf.mxu0
    %v2795 = vpop.f32.mrf.mxu0
    %2796 = vdwg.mxu0
    %2797 = vmatprep.subr.bf16.mxu0 %v838
    %2798 = vmatpush1.bf16.msra.mxu0 %v837
    %2799 = vmatprep.subr.bf16.mxu0 %v834
    %2800 = vmatpush1.bf16.msra.mxu0 %v833
    %2801 = vmatprep.subr.bf16.mxu0 %v830
    %2802 = vmatpush1.bf16.msra.mxu0 %v829
    %2803 = vmatprep.subr.bf16.mxu0 %v826
    %2804 = vmatpush1.bf16.msra.mxu0 %v825
    %2805 = vmatprep.subr.bf16.mxu0 %v822
    %2806 = vmatpush1.bf16.msra.mxu0 %v821
    %2807 = vmatprep.subr.bf16.mxu0 %v818
    %2808 = vmatpush1.bf16.msra.mxu0 %v817
    %2809 = vmatprep.subr.bf16.mxu0 %v814
    %2810 = vmatpush1.bf16.msra.mxu0 %v813
    %2811 = vmatprep.subr.bf16.mxu0 %v810
    %2812 = vmatpush1.bf16.msra.mxu0 %v809
    %2813 = vmatprep.subr.bf16.mxu0 0
    %2814 = vmatpush2.bf16.msra.mxu0 0
    %2815 = vmatprep.subr.bf16.mxu0 0
    %2816 = vmatpush2.bf16.msra.mxu0 0
    %2817 = vmatprep.subr.bf16.mxu0 0
    %2818 = vmatpush2.bf16.msra.mxu0 0
    %2819 = vmatprep.subr.bf16.mxu0 0
    %2820 = vmatpush2.bf16.msra.mxu0 0
    %2821 = vmatprep.subr.bf16.mxu0 0
    %2822 = vmatpush2.bf16.msra.mxu0 0
    %2823 = vmatprep.subr.bf16.mxu0 0
    %2824 = vmatpush2.bf16.msra.mxu0 0
    %2825 = vmatprep.subr.bf16.mxu0 0
    %2826 = vmatpush2.bf16.msra.mxu0 0
    %2827 = vmatprep.subr.bf16.mxu0 0
    %2828 = vmatpush2.bf16.msra.mxu0 0
    %2829 = vmatprep.mubr.bf16.mxu0 0
    %2830 = vmatmul.mubr.bf16.gmra.mxu0 %v2755
    %v2831 = vpop.f32.mrf.mxu0
    %v2832 = vadd.f32 %v702, %v2831
    %v2833 = vpop.f32.mrf.mxu0
    %v2834 = vadd.f32 %v706, %v2833
    %v2835 = vpop.f32.mrf.mxu0
    %v2836 = vpop.f32.mrf.mxu0
    %2837 = vdwg.mxu0
    %s2838 = smul.u32 5, 4
    %s2839 = smul.addr %s2838, 8
    %s2840 = scalar_lea.vmem [#allocation2], %s2839
    %v2841 = vld [vmem:[%s2840] sm:$0xff]
    %v2842 = vld [vmem:[%s2840 + $0x8] sm:$0xff]
    %v2843 = vld [vmem:[%s2840 + $0x10] sm:$0xff]
    %v2844 = vld [vmem:[%s2840 + $0x18] sm:$0xff]
    %2845 = vmatprep.subr.bf16.mxu0 %v1086
    %2846 = vmatpush1.bf16.msra.mxu0 %v1085
    %2847 = vmatprep.subr.bf16.mxu0 %v1082
    %2848 = vmatpush1.bf16.msra.mxu0 %v1081
    %2849 = vmatprep.subr.bf16.mxu0 %v1078
    %2850 = vmatpush1.bf16.msra.mxu0 %v1077
    %2851 = vmatprep.subr.bf16.mxu0 %v1074
    %2852 = vmatpush1.bf16.msra.mxu0 %v1073
    %2853 = vmatprep.subr.bf16.mxu0 %v1070
    %2854 = vmatpush1.bf16.msra.mxu0 %v1069
    %2855 = vmatprep.subr.bf16.mxu0 %v1066
    %2856 = vmatpush1.bf16.msra.mxu0 %v1065
    %2857 = vmatprep.subr.bf16.mxu0 %v1062
    %2858 = vmatpush1.bf16.msra.mxu0 %v1061
    %2859 = vmatprep.subr.bf16.mxu0 %v1058
    %2860 = vmatpush1.bf16.msra.mxu0 %v1057
    %2861 = vmatprep.subr.bf16.mxu0 0
    %2862 = vmatpush2.bf16.msra.mxu0 0
    %2863 = vmatprep.subr.bf16.mxu0 0
    %2864 = vmatpush2.bf16.msra.mxu0 0
    %2865 = vmatprep.subr.bf16.mxu0 0
    %2866 = vmatpush2.bf16.msra.mxu0 0
    %2867 = vmatprep.subr.bf16.mxu0 0
    %2868 = vmatpush2.bf16.msra.mxu0 0
    %2869 = vmatprep.subr.bf16.mxu0 0
    %2870 = vmatpush2.bf16.msra.mxu0 0
    %2871 = vmatprep.subr.bf16.mxu0 0
    %2872 = vmatpush2.bf16.msra.mxu0 0
    %2873 = vmatprep.subr.bf16.mxu0 0
    %2874 = vmatpush2.bf16.msra.mxu0 0
    %2875 = vmatprep.subr.bf16.mxu0 0
    %2876 = vmatpush2.bf16.msra.mxu0 0
    %2877 = vmatprep.mubr.bf16.mxu0 0
    %2878 = vmatmul.mubr.bf16.gmra.mxu0 %v2642
    %v2879 = vpop.f32.mrf.mxu0
    %v2880 = vadd.f32 0.0, %v2879
    %v2881 = vpop.f32.mrf.mxu0
    %v2882 = vadd.f32 0.0, %v2881
    %v2883 = vpop.f32.mrf.mxu0
    %v2884 = vpop.f32.mrf.mxu0
    %2885 = vdwg.mxu0
    %2886 = vmatprep.subr.bf16.mxu0 %v1088
    %2887 = vmatpush1.bf16.msra.mxu0 %v1087
    %2888 = vmatprep.subr.bf16.mxu0 %v1084
    %2889 = vmatpush1.bf16.msra.mxu0 %v1083
    %2890 = vmatprep.subr.bf16.mxu0 %v1080
    %2891 = vmatpush1.bf16.msra.mxu0 %v1079
    %2892 = vmatprep.subr.bf16.mxu0 %v1076
    %2893 = vmatpush1.bf16.msra.mxu0 %v1075
    %2894 = vmatprep.subr.bf16.mxu0 %v1072
    %2895 = vmatpush1.bf16.msra.mxu0 %v1071
    %2896 = vmatprep.subr.bf16.mxu0 %v1068
    %2897 = vmatpush1.bf16.msra.mxu0 %v1067
    %2898 = vmatprep.subr.bf16.mxu0 %v1064
    %2899 = vmatpush1.bf16.msra.mxu0 %v1063
    %2900 = vmatprep.subr.bf16.mxu0 %v1060
    %2901 = vmatpush1.bf16.msra.mxu0 %v1059
    %2902 = vmatprep.subr.bf16.mxu0 0
    %2903 = vmatpush2.bf16.msra.mxu0 0
    %2904 = vmatprep.subr.bf16.mxu0 0
    %2905 = vmatpush2.bf16.msra.mxu0 0
    %2906 = vmatprep.subr.bf16.mxu0 0
    %2907 = vmatpush2.bf16.msra.mxu0 0
    %2908 = vmatprep.subr.bf16.mxu0 0
    %2909 = vmatpush2.bf16.msra.mxu0 0
    %2910 = vmatprep.subr.bf16.mxu0 0
    %2911 = vmatpush2.bf16.msra.mxu0 0
    %2912 = vmatprep.subr.bf16.mxu0 0
    %2913 = vmatpush2.bf16.msra.mxu0 0
    %2914 = vmatprep.subr.bf16.mxu0 0
    %2915 = vmatpush2.bf16.msra.mxu0 0
    %2916 = vmatprep.subr.bf16.mxu0 0
    %2917 = vmatpush2.bf16.msra.mxu0 0
    %2918 = vmatprep.mubr.bf16.mxu0 0
    %2919 = vmatmul.mubr.bf16.gmra.mxu0 %v2642
    %v2920 = vpop.f32.mrf.mxu0
    %v2921 = vadd.f32 0.0, %v2920
    %v2922 = vpop.f32.mrf.mxu0
    %v2923 = vadd.f32 0.0, %v2922
    %v2924 = vpop.f32.mrf.mxu0
    %v2925 = vpop.f32.mrf.mxu0
    %2926 = vdwg.mxu0
    %v2927 = vadd.f32 %v2841, %v2880
    %v2928 = vadd.f32 %v2842, %v2882
    %v2929 = vadd.f32 %v2843, %v2921
    %v2930 = vadd.f32 %v2844, %v2923
    %v2931 = vxor.u32 %v2927, 2147483648
    %v2932 = vmul.f32 %v2931, 1.442695
    %v2933 = vpow.pop %v2932
    %v2934 = vadd.f32 %v2933, 1.0
    %v2935 = vrcp.pop %v2934
    %v2936 = vmul.f32 1.0, %v2935
    %v2937 = vxor.u32 %v2928, 2147483648
    %v2938 = vmul.f32 %v2937, 1.442695
    %v2939 = vpow.pop %v2938
    %v2940 = vadd.f32 %v2939, 1.0
    %v2941 = vrcp.pop %v2940
    %v2942 = vmul.f32 1.0, %v2941
    %v2943 = vtanh.pop %v2929
    %v2944 = vxor.u32 %v2930, 2147483648
    %v2945 = vmul.f32 %v2944, 1.442695
    %v2946 = vpow.pop %v2945
    %v2947 = vadd.f32 %v2946, 1.0
    %v2948 = vrcp.pop %v2947
    %v2949 = vmul.f32 1.0, %v2948
    %v2950 = vmul.f32 %v2942, %v2639
    %v2951 = vmul.f32 %v2936, %v2943
    %v2952 = vadd.f32 %v2950, %v2951
    %v2953 = vtanh.pop %v2952
    %v2954 = vmul.f32 %v2949, %v2953
    %v2955 = vpack.c.bf16 %v2954, %v2954
    %2956 = vmatprep.subr.bf16.mxu0 %v1357
    %2957 = vmatpush1.bf16.msra.mxu0 %v1356
    %2958 = vmatprep.subr.bf16.mxu0 %v1353
    %2959 = vmatpush1.bf16.msra.mxu0 %v1352
    %2960 = vmatprep.subr.bf16.mxu0 %v1349
    %2961 = vmatpush1.bf16.msra.mxu0 %v1348
    %2962 = vmatprep.subr.bf16.mxu0 %v1345
    %2963 = vmatpush1.bf16.msra.mxu0 %v1344
    %2964 = vmatprep.subr.bf16.mxu0 %v1341
    %2965 = vmatpush1.bf16.msra.mxu0 %v1340
    %2966 = vmatprep.subr.bf16.mxu0 %v1337
    %2967 = vmatpush1.bf16.msra.mxu0 %v1336
    %2968 = vmatprep.subr.bf16.mxu0 %v1333
    %2969 = vmatpush1.bf16.msra.mxu0 %v1332
    %2970 = vmatprep.subr.bf16.mxu0 %v1329
    %2971 = vmatpush1.bf16.msra.mxu0 %v1328
    %2972 = vmatprep.subr.bf16.mxu0 0
    %2973 = vmatpush2.bf16.msra.mxu0 0
    %2974 = vmatprep.subr.bf16.mxu0 0
    %2975 = vmatpush2.bf16.msra.mxu0 0
    %2976 = vmatprep.subr.bf16.mxu0 0
    %2977 = vmatpush2.bf16.msra.mxu0 0
    %2978 = vmatprep.subr.bf16.mxu0 0
    %2979 = vmatpush2.bf16.msra.mxu0 0
    %2980 = vmatprep.subr.bf16.mxu0 0
    %2981 = vmatpush2.bf16.msra.mxu0 0
    %2982 = vmatprep.subr.bf16.mxu0 0
    %2983 = vmatpush2.bf16.msra.mxu0 0
    %2984 = vmatprep.subr.bf16.mxu0 0
    %2985 = vmatpush2.bf16.msra.mxu0 0
    %2986 = vmatprep.subr.bf16.mxu0 0
    %2987 = vmatpush2.bf16.msra.mxu0 0
    %2988 = vmatprep.mubr.bf16.mxu0 0
    %2989 = vmatmul.mubr.bf16.gmra.mxu0 %v2955
    %v2990 = vpop.f32.mrf.mxu0
    %v2991 = vadd.f32 0.0, %v2990
    %v2992 = vpop.f32.mrf.mxu0
    %v2993 = vadd.f32 0.0, %v2992
    %v2994 = vpop.f32.mrf.mxu0
    %v2995 = vpop.f32.mrf.mxu0
    %2996 = vdwg.mxu0
    %2997 = vmatprep.subr.bf16.mxu0 %v1359
    %2998 = vmatpush1.bf16.msra.mxu0 %v1358
    %2999 = vmatprep.subr.bf16.mxu0 %v1355
    %3000 = vmatpush1.bf16.msra.mxu0 %v1354
    %3001 = vmatprep.subr.bf16.mxu0 %v1351
    %3002 = vmatpush1.bf16.msra.mxu0 %v1350
    %3003 = vmatprep.subr.bf16.mxu0 %v1347
    %3004 = vmatpush1.bf16.msra.mxu0 %v1346
    %3005 = vmatprep.subr.bf16.mxu0 %v1343
    %3006 = vmatpush1.bf16.msra.mxu0 %v1342
    %3007 = vmatprep.subr.bf16.mxu0 %v1339
    %3008 = vmatpush1.bf16.msra.mxu0 %v1338
    %3009 = vmatprep.subr.bf16.mxu0 %v1335
    %3010 = vmatpush1.bf16.msra.mxu0 %v1334
    %3011 = vmatprep.subr.bf16.mxu0 %v1331
    %3012 = vmatpush1.bf16.msra.mxu0 %v1330
    %3013 = vmatprep.subr.bf16.mxu0 0
    %3014 = vmatpush2.bf16.msra.mxu0 0
    %3015 = vmatprep.subr.bf16.mxu0 0
    %3016 = vmatpush2.bf16.msra.mxu0 0
    %3017 = vmatprep.subr.bf16.mxu0 0
    %3018 = vmatpush2.bf16.msra.mxu0 0
    %3019 = vmatprep.subr.bf16.mxu0 0
    %3020 = vmatpush2.bf16.msra.mxu0 0
    %3021 = vmatprep.subr.bf16.mxu0 0
    %3022 = vmatpush2.bf16.msra.mxu0 0
    %3023 = vmatprep.subr.bf16.mxu0 0
    %3024 = vmatpush2.bf16.msra.mxu0 0
    %3025 = vmatprep.subr.bf16.mxu0 0
    %3026 = vmatpush2.bf16.msra.mxu0 0
    %3027 = vmatprep.subr.bf16.mxu0 0
    %3028 = vmatpush2.bf16.msra.mxu0 0
    %3029 = vmatprep.mubr.bf16.mxu0 0
    %3030 = vmatmul.mubr.bf16.gmra.mxu0 %v2955
    %v3031 = vpop.f32.mrf.mxu0
    %v3032 = vadd.f32 0.0, %v3031
    %v3033 = vpop.f32.mrf.mxu0
    %v3034 = vadd.f32 0.0, %v3033
    %v3035 = vpop.f32.mrf.mxu0
    %v3036 = vpop.f32.mrf.mxu0
    %3037 = vdwg.mxu0
    %v3038 = vadd.f32 %v2791, %v2991
    %v3039 = vadd.f32 %v2793, %v2993
    %v3040 = vadd.f32 %v2832, %v3032
    %v3041 = vadd.f32 %v2834, %v3034
    %v3042 = vxor.u32 %v3038, 2147483648
    %v3043 = vmul.f32 %v3042, 1.442695
    %v3044 = vpow.pop %v3043
    %v3045 = vadd.f32 %v3044, 1.0
    %v3046 = vrcp.pop %v3045
    %v3047 = vmul.f32 1.0, %v3046
    %v3048 = vxor.u32 %v3039, 2147483648
    %v3049 = vmul.f32 %v3048, 1.442695
    %v3050 = vpow.pop %v3049
    %v3051 = vadd.f32 %v3050, 1.0
    %v3052 = vrcp.pop %v3051
    %v3053 = vmul.f32 1.0, %v3052
    %v3054 = vtanh.pop %v3040
    %v3055 = vxor.u32 %v3041, 2147483648
    %v3056 = vmul.f32 %v3055, 1.442695
    %v3057 = vpow.pop %v3056
    %v3058 = vadd.f32 %v3057, 1.0
    %v3059 = vrcp.pop %v3058
    %v3060 = vmul.f32 1.0, %v3059
    %v3061 = vmul.f32 %v3053, %v2750
    %v3062 = vmul.f32 %v3047, %v3054
    %v3063 = vadd.f32 %v3061, %v3062
    %v3064 = vtanh.pop %v3063
    %v3065 = vmul.f32 %v3060, %v3064
    %s3066 = scalar_lea.vmem [#allocation3], 40
    %3067 = vst [vmem:[%s3066] sm:$0xff] %v3065
    %v3068 = vpack.c.bf16 %v3065, %v3065
    %3069 = vmatprep.subr.bf16.mxu0 %v836
    %3070 = vmatpush1.bf16.msra.mxu0 %v835
    %3071 = vmatprep.subr.bf16.mxu0 %v832
    %3072 = vmatpush1.bf16.msra.mxu0 %v831
    %3073 = vmatprep.subr.bf16.mxu0 %v828
    %3074 = vmatpush1.bf16.msra.mxu0 %v827
    %3075 = vmatprep.subr.bf16.mxu0 %v824
    %3076 = vmatpush1.bf16.msra.mxu0 %v823
    %3077 = vmatprep.subr.bf16.mxu0 %v820
    %3078 = vmatpush1.bf16.msra.mxu0 %v819
    %3079 = vmatprep.subr.bf16.mxu0 %v816
    %3080 = vmatpush1.bf16.msra.mxu0 %v815
    %3081 = vmatprep.subr.bf16.mxu0 %v812
    %3082 = vmatpush1.bf16.msra.mxu0 %v811
    %3083 = vmatprep.subr.bf16.mxu0 %v808
    %3084 = vmatpush1.bf16.msra.mxu0 %v807
    %3085 = vmatprep.subr.bf16.mxu0 0
    %3086 = vmatpush2.bf16.msra.mxu0 0
    %3087 = vmatprep.subr.bf16.mxu0 0
    %3088 = vmatpush2.bf16.msra.mxu0 0
    %3089 = vmatprep.subr.bf16.mxu0 0
    %3090 = vmatpush2.bf16.msra.mxu0 0
    %3091 = vmatprep.subr.bf16.mxu0 0
    %3092 = vmatpush2.bf16.msra.mxu0 0
    %3093 = vmatprep.subr.bf16.mxu0 0
    %3094 = vmatpush2.bf16.msra.mxu0 0
    %3095 = vmatprep.subr.bf16.mxu0 0
    %3096 = vmatpush2.bf16.msra.mxu0 0
    %3097 = vmatprep.subr.bf16.mxu0 0
    %3098 = vmatpush2.bf16.msra.mxu0 0
    %3099 = vmatprep.subr.bf16.mxu0 0
    %3100 = vmatpush2.bf16.msra.mxu0 0
    %3101 = vmatprep.mubr.bf16.mxu0 0
    %3102 = vmatmul.mubr.bf16.gmra.mxu0 %v3068
    %v3103 = vpop.f32.mrf.mxu0
    %v3104 = vadd.f32 %v694, %v3103
    %v3105 = vpop.f32.mrf.mxu0
    %v3106 = vadd.f32 %v698, %v3105
    %v3107 = vpop.f32.mrf.mxu0
    %v3108 = vpop.f32.mrf.mxu0
    %3109 = vdwg.mxu0
    %3110 = vmatprep.subr.bf16.mxu0 %v838
    %3111 = vmatpush1.bf16.msra.mxu0 %v837
    %3112 = vmatprep.subr.bf16.mxu0 %v834
    %3113 = vmatpush1.bf16.msra.mxu0 %v833
    %3114 = vmatprep.subr.bf16.mxu0 %v830
    %3115 = vmatpush1.bf16.msra.mxu0 %v829
    %3116 = vmatprep.subr.bf16.mxu0 %v826
    %3117 = vmatpush1.bf16.msra.mxu0 %v825
    %3118 = vmatprep.subr.bf16.mxu0 %v822
    %3119 = vmatpush1.bf16.msra.mxu0 %v821
    %3120 = vmatprep.subr.bf16.mxu0 %v818
    %3121 = vmatpush1.bf16.msra.mxu0 %v817
    %3122 = vmatprep.subr.bf16.mxu0 %v814
    %3123 = vmatpush1.bf16.msra.mxu0 %v813
    %3124 = vmatprep.subr.bf16.mxu0 %v810
    %3125 = vmatpush1.bf16.msra.mxu0 %v809
    %3126 = vmatprep.subr.bf16.mxu0 0
    %3127 = vmatpush2.bf16.msra.mxu0 0
    %3128 = vmatprep.subr.bf16.mxu0 0
    %3129 = vmatpush2.bf16.msra.mxu0 0
    %3130 = vmatprep.subr.bf16.mxu0 0
    %3131 = vmatpush2.bf16.msra.mxu0 0
    %3132 = vmatprep.subr.bf16.mxu0 0
    %3133 = vmatpush2.bf16.msra.mxu0 0
    %3134 = vmatprep.subr.bf16.mxu0 0
    %3135 = vmatpush2.bf16.msra.mxu0 0
    %3136 = vmatprep.subr.bf16.mxu0 0
    %3137 = vmatpush2.bf16.msra.mxu0 0
    %3138 = vmatprep.subr.bf16.mxu0 0
    %3139 = vmatpush2.bf16.msra.mxu0 0
    %3140 = vmatprep.subr.bf16.mxu0 0
    %3141 = vmatpush2.bf16.msra.mxu0 0
    %3142 = vmatprep.mubr.bf16.mxu0 0
    %3143 = vmatmul.mubr.bf16.gmra.mxu0 %v3068
    %v3144 = vpop.f32.mrf.mxu0
    %v3145 = vadd.f32 %v702, %v3144
    %v3146 = vpop.f32.mrf.mxu0
    %v3147 = vadd.f32 %v706, %v3146
    %v3148 = vpop.f32.mrf.mxu0
    %v3149 = vpop.f32.mrf.mxu0
    %3150 = vdwg.mxu0
    %s3151 = smul.u32 6, 4
    %s3152 = smul.addr %s3151, 8
    %s3153 = scalar_lea.vmem [#allocation2], %s3152
    %v3154 = vld [vmem:[%s3153] sm:$0xff]
    %v3155 = vld [vmem:[%s3153 + $0x8] sm:$0xff]
    %v3156 = vld [vmem:[%s3153 + $0x10] sm:$0xff]
    %v3157 = vld [vmem:[%s3153 + $0x18] sm:$0xff]
    %3158 = vmatprep.subr.bf16.mxu0 %v1086
    %3159 = vmatpush1.bf16.msra.mxu0 %v1085
    %3160 = vmatprep.subr.bf16.mxu0 %v1082
    %3161 = vmatpush1.bf16.msra.mxu0 %v1081
    %3162 = vmatprep.subr.bf16.mxu0 %v1078
    %3163 = vmatpush1.bf16.msra.mxu0 %v1077
    %3164 = vmatprep.subr.bf16.mxu0 %v1074
    %3165 = vmatpush1.bf16.msra.mxu0 %v1073
    %3166 = vmatprep.subr.bf16.mxu0 %v1070
    %3167 = vmatpush1.bf16.msra.mxu0 %v1069
    %3168 = vmatprep.subr.bf16.mxu0 %v1066
    %3169 = vmatpush1.bf16.msra.mxu0 %v1065
    %3170 = vmatprep.subr.bf16.mxu0 %v1062
    %3171 = vmatpush1.bf16.msra.mxu0 %v1061
    %3172 = vmatprep.subr.bf16.mxu0 %v1058
    %3173 = vmatpush1.bf16.msra.mxu0 %v1057
    %3174 = vmatprep.subr.bf16.mxu0 0
    %3175 = vmatpush2.bf16.msra.mxu0 0
    %3176 = vmatprep.subr.bf16.mxu0 0
    %3177 = vmatpush2.bf16.msra.mxu0 0
    %3178 = vmatprep.subr.bf16.mxu0 0
    %3179 = vmatpush2.bf16.msra.mxu0 0
    %3180 = vmatprep.subr.bf16.mxu0 0
    %3181 = vmatpush2.bf16.msra.mxu0 0
    %3182 = vmatprep.subr.bf16.mxu0 0
    %3183 = vmatpush2.bf16.msra.mxu0 0
    %3184 = vmatprep.subr.bf16.mxu0 0
    %3185 = vmatpush2.bf16.msra.mxu0 0
    %3186 = vmatprep.subr.bf16.mxu0 0
    %3187 = vmatpush2.bf16.msra.mxu0 0
    %3188 = vmatprep.subr.bf16.mxu0 0
    %3189 = vmatpush2.bf16.msra.mxu0 0
    %3190 = vmatprep.mubr.bf16.mxu0 0
    %3191 = vmatmul.mubr.bf16.gmra.mxu0 %v2955
    %v3192 = vpop.f32.mrf.mxu0
    %v3193 = vadd.f32 0.0, %v3192
    %v3194 = vpop.f32.mrf.mxu0
    %v3195 = vadd.f32 0.0, %v3194
    %v3196 = vpop.f32.mrf.mxu0
    %v3197 = vpop.f32.mrf.mxu0
    %3198 = vdwg.mxu0
    %3199 = vmatprep.subr.bf16.mxu0 %v1088
    %3200 = vmatpush1.bf16.msra.mxu0 %v1087
    %3201 = vmatprep.subr.bf16.mxu0 %v1084
    %3202 = vmatpush1.bf16.msra.mxu0 %v1083
    %3203 = vmatprep.subr.bf16.mxu0 %v1080
    %3204 = vmatpush1.bf16.msra.mxu0 %v1079
    %3205 = vmatprep.subr.bf16.mxu0 %v1076
    %3206 = vmatpush1.bf16.msra.mxu0 %v1075
    %3207 = vmatprep.subr.bf16.mxu0 %v1072
    %3208 = vmatpush1.bf16.msra.mxu0 %v1071
    %3209 = vmatprep.subr.bf16.mxu0 %v1068
    %3210 = vmatpush1.bf16.msra.mxu0 %v1067
    %3211 = vmatprep.subr.bf16.mxu0 %v1064
    %3212 = vmatpush1.bf16.msra.mxu0 %v1063
    %3213 = vmatprep.subr.bf16.mxu0 %v1060
    %3214 = vmatpush1.bf16.msra.mxu0 %v1059
    %3215 = vmatprep.subr.bf16.mxu0 0
    %3216 = vmatpush2.bf16.msra.mxu0 0
    %3217 = vmatprep.subr.bf16.mxu0 0
    %3218 = vmatpush2.bf16.msra.mxu0 0
    %3219 = vmatprep.subr.bf16.mxu0 0
    %3220 = vmatpush2.bf16.msra.mxu0 0
    %3221 = vmatprep.subr.bf16.mxu0 0
    %3222 = vmatpush2.bf16.msra.mxu0 0
    %3223 = vmatprep.subr.bf16.mxu0 0
    %3224 = vmatpush2.bf16.msra.mxu0 0
    %3225 = vmatprep.subr.bf16.mxu0 0
    %3226 = vmatpush2.bf16.msra.mxu0 0
    %3227 = vmatprep.subr.bf16.mxu0 0
    %3228 = vmatpush2.bf16.msra.mxu0 0
    %3229 = vmatprep.subr.bf16.mxu0 0
    %3230 = vmatpush2.bf16.msra.mxu0 0
    %3231 = vmatprep.mubr.bf16.mxu0 0
    %3232 = vmatmul.mubr.bf16.gmra.mxu0 %v2955
    %v3233 = vpop.f32.mrf.mxu0
    %v3234 = vadd.f32 0.0, %v3233
    %v3235 = vpop.f32.mrf.mxu0
    %v3236 = vadd.f32 0.0, %v3235
    %v3237 = vpop.f32.mrf.mxu0
    %v3238 = vpop.f32.mrf.mxu0
    %3239 = vdwg.mxu0
    %v3240 = vadd.f32 %v3154, %v3193
    %v3241 = vadd.f32 %v3155, %v3195
    %v3242 = vadd.f32 %v3156, %v3234
    %v3243 = vadd.f32 %v3157, %v3236
    %v3244 = vxor.u32 %v3240, 2147483648
    %v3245 = vmul.f32 %v3244, 1.442695
    %v3246 = vpow.pop %v3245
    %v3247 = vadd.f32 %v3246, 1.0
    %v3248 = vrcp.pop %v3247
    %v3249 = vmul.f32 1.0, %v3248
    %v3250 = vxor.u32 %v3241, 2147483648
    %v3251 = vmul.f32 %v3250, 1.442695
    %v3252 = vpow.pop %v3251
    %v3253 = vadd.f32 %v3252, 1.0
    %v3254 = vrcp.pop %v3253
    %v3255 = vmul.f32 1.0, %v3254
    %v3256 = vtanh.pop %v3242
    %v3257 = vxor.u32 %v3243, 2147483648
    %v3258 = vmul.f32 %v3257, 1.442695
    %v3259 = vpow.pop %v3258
    %v3260 = vadd.f32 %v3259, 1.0
    %v3261 = vrcp.pop %v3260
    %v3262 = vmul.f32 1.0, %v3261
    %v3263 = vmul.f32 %v3255, %v2952
    %v3264 = vmul.f32 %v3249, %v3256
    %v3265 = vadd.f32 %v3263, %v3264
    %v3266 = vtanh.pop %v3265
    %v3267 = vmul.f32 %v3262, %v3266
    %v3268 = vpack.c.bf16 %v3267, %v3267
    %3269 = vmatprep.subr.bf16.mxu0 %v1357
    %3270 = vmatpush1.bf16.msra.mxu0 %v1356
    %3271 = vmatprep.subr.bf16.mxu0 %v1353
    %3272 = vmatpush1.bf16.msra.mxu0 %v1352
    %3273 = vmatprep.subr.bf16.mxu0 %v1349
    %3274 = vmatpush1.bf16.msra.mxu0 %v1348
    %3275 = vmatprep.subr.bf16.mxu0 %v1345
    %3276 = vmatpush1.bf16.msra.mxu0 %v1344
    %3277 = vmatprep.subr.bf16.mxu0 %v1341
    %3278 = vmatpush1.bf16.msra.mxu0 %v1340
    %3279 = vmatprep.subr.bf16.mxu0 %v1337
    %3280 = vmatpush1.bf16.msra.mxu0 %v1336
    %3281 = vmatprep.subr.bf16.mxu0 %v1333
    %3282 = vmatpush1.bf16.msra.mxu0 %v1332
    %3283 = vmatprep.subr.bf16.mxu0 %v1329
    %3284 = vmatpush1.bf16.msra.mxu0 %v1328
    %3285 = vmatprep.subr.bf16.mxu0 0
    %3286 = vmatpush2.bf16.msra.mxu0 0
    %3287 = vmatprep.subr.bf16.mxu0 0
    %3288 = vmatpush2.bf16.msra.mxu0 0
    %3289 = vmatprep.subr.bf16.mxu0 0
    %3290 = vmatpush2.bf16.msra.mxu0 0
    %3291 = vmatprep.subr.bf16.mxu0 0
    %3292 = vmatpush2.bf16.msra.mxu0 0
    %3293 = vmatprep.subr.bf16.mxu0 0
    %3294 = vmatpush2.bf16.msra.mxu0 0
    %3295 = vmatprep.subr.bf16.mxu0 0
    %3296 = vmatpush2.bf16.msra.mxu0 0
    %3297 = vmatprep.subr.bf16.mxu0 0
    %3298 = vmatpush2.bf16.msra.mxu0 0
    %3299 = vmatprep.subr.bf16.mxu0 0
    %3300 = vmatpush2.bf16.msra.mxu0 0
    %3301 = vmatprep.mubr.bf16.mxu0 0
    %3302 = vmatmul.mubr.bf16.gmra.mxu0 %v3268
    %v3303 = vpop.f32.mrf.mxu0
    %v3304 = vadd.f32 0.0, %v3303
    %v3305 = vpop.f32.mrf.mxu0
    %v3306 = vadd.f32 0.0, %v3305
    %v3307 = vpop.f32.mrf.mxu0
    %v3308 = vpop.f32.mrf.mxu0
    %3309 = vdwg.mxu0
    %3310 = vmatprep.subr.bf16.mxu0 %v1359
    %3311 = vmatpush1.bf16.msra.mxu0 %v1358
    %3312 = vmatprep.subr.bf16.mxu0 %v1355
    %3313 = vmatpush1.bf16.msra.mxu0 %v1354
    %3314 = vmatprep.subr.bf16.mxu0 %v1351
    %3315 = vmatpush1.bf16.msra.mxu0 %v1350
    %3316 = vmatprep.subr.bf16.mxu0 %v1347
    %3317 = vmatpush1.bf16.msra.mxu0 %v1346
    %3318 = vmatprep.subr.bf16.mxu0 %v1343
    %3319 = vmatpush1.bf16.msra.mxu0 %v1342
    %3320 = vmatprep.subr.bf16.mxu0 %v1339
    %3321 = vmatpush1.bf16.msra.mxu0 %v1338
    %3322 = vmatprep.subr.bf16.mxu0 %v1335
    %3323 = vmatpush1.bf16.msra.mxu0 %v1334
    %3324 = vmatprep.subr.bf16.mxu0 %v1331
    %3325 = vmatpush1.bf16.msra.mxu0 %v1330
    %3326 = vmatprep.subr.bf16.mxu0 0
    %3327 = vmatpush2.bf16.msra.mxu0 0
    %3328 = vmatprep.subr.bf16.mxu0 0
    %3329 = vmatpush2.bf16.msra.mxu0 0
    %3330 = vmatprep.subr.bf16.mxu0 0
    %3331 = vmatpush2.bf16.msra.mxu0 0
    %3332 = vmatprep.subr.bf16.mxu0 0
    %3333 = vmatpush2.bf16.msra.mxu0 0
    %3334 = vmatprep.subr.bf16.mxu0 0
    %3335 = vmatpush2.bf16.msra.mxu0 0
    %3336 = vmatprep.subr.bf16.mxu0 0
    %3337 = vmatpush2.bf16.msra.mxu0 0
    %3338 = vmatprep.subr.bf16.mxu0 0
    %3339 = vmatpush2.bf16.msra.mxu0 0
    %3340 = vmatprep.subr.bf16.mxu0 0
    %3341 = vmatpush2.bf16.msra.mxu0 0
    %3342 = vmatprep.mubr.bf16.mxu0 0
    %3343 = vmatmul.mubr.bf16.gmra.mxu0 %v3268
    %v3344 = vpop.f32.mrf.mxu0
    %v3345 = vadd.f32 0.0, %v3344
    %v3346 = vpop.f32.mrf.mxu0
    %v3347 = vadd.f32 0.0, %v3346
    %v3348 = vpop.f32.mrf.mxu0
    %v3349 = vpop.f32.mrf.mxu0
    %3350 = vdwg.mxu0
    %v3351 = vadd.f32 %v3104, %v3304
    %v3352 = vadd.f32 %v3106, %v3306
    %v3353 = vadd.f32 %v3145, %v3345
    %v3354 = vadd.f32 %v3147, %v3347
    %v3355 = vxor.u32 %v3351, 2147483648
    %v3356 = vmul.f32 %v3355, 1.442695
    %v3357 = vpow.pop %v3356
    %v3358 = vadd.f32 %v3357, 1.0
    %v3359 = vrcp.pop %v3358
    %v3360 = vmul.f32 1.0, %v3359
    %v3361 = vxor.u32 %v3352, 2147483648
    %v3362 = vmul.f32 %v3361, 1.442695
    %v3363 = vpow.pop %v3362
    %v3364 = vadd.f32 %v3363, 1.0
    %v3365 = vrcp.pop %v3364
    %v3366 = vmul.f32 1.0, %v3365
    %v3367 = vtanh.pop %v3353
    %v3368 = vxor.u32 %v3354, 2147483648
    %v3369 = vmul.f32 %v3368, 1.442695
    %v3370 = vpow.pop %v3369
    %v3371 = vadd.f32 %v3370, 1.0
    %v3372 = vrcp.pop %v3371
    %v3373 = vmul.f32 1.0, %v3372
    %v3374 = vmul.f32 %v3366, %v3063
    %v3375 = vmul.f32 %v3360, %v3367
    %v3376 = vadd.f32 %v3374, %v3375
    %v3377 = vtanh.pop %v3376
    %v3378 = vmul.f32 %v3373, %v3377
    %s3379 = scalar_lea.vmem [#allocation3], 48
    %3380 = vst [vmem:[%s3379] sm:$0xff] %v3378
    %v3381 = vpack.c.bf16 %v3378, %v3378
    %3382 = vmatprep.subr.bf16.mxu0 %v836
    %3383 = vmatpush1.bf16.msra.mxu0 %v835
    %3384 = vmatprep.subr.bf16.mxu0 %v832
    %3385 = vmatpush1.bf16.msra.mxu0 %v831
    %3386 = vmatprep.subr.bf16.mxu0 %v828
    %3387 = vmatpush1.bf16.msra.mxu0 %v827
    %3388 = vmatprep.subr.bf16.mxu0 %v824
    %3389 = vmatpush1.bf16.msra.mxu0 %v823
    %3390 = vmatprep.subr.bf16.mxu0 %v820
    %3391 = vmatpush1.bf16.msra.mxu0 %v819
    %3392 = vmatprep.subr.bf16.mxu0 %v816
    %3393 = vmatpush1.bf16.msra.mxu0 %v815
    %3394 = vmatprep.subr.bf16.mxu0 %v812
    %3395 = vmatpush1.bf16.msra.mxu0 %v811
    %3396 = vmatprep.subr.bf16.mxu0 %v808
    %3397 = vmatpush1.bf16.msra.mxu0 %v807
    %3398 = vmatprep.subr.bf16.mxu0 0
    %3399 = vmatpush2.bf16.msra.mxu0 0
    %3400 = vmatprep.subr.bf16.mxu0 0
    %3401 = vmatpush2.bf16.msra.mxu0 0
    %3402 = vmatprep.subr.bf16.mxu0 0
    %3403 = vmatpush2.bf16.msra.mxu0 0
    %3404 = vmatprep.subr.bf16.mxu0 0
    %3405 = vmatpush2.bf16.msra.mxu0 0
    %3406 = vmatprep.subr.bf16.mxu0 0
    %3407 = vmatpush2.bf16.msra.mxu0 0
    %3408 = vmatprep.subr.bf16.mxu0 0
    %3409 = vmatpush2.bf16.msra.mxu0 0
    %3410 = vmatprep.subr.bf16.mxu0 0
    %3411 = vmatpush2.bf16.msra.mxu0 0
    %3412 = vmatprep.subr.bf16.mxu0 0
    %3413 = vmatpush2.bf16.msra.mxu0 0
    %3414 = vmatprep.mubr.bf16.mxu0 0
    %3415 = vmatmul.mubr.bf16.gmra.mxu0 %v3381
    %v3416 = vpop.f32.mrf.mxu0
    %v3417 = vadd.f32 %v694, %v3416
    %v3418 = vpop.f32.mrf.mxu0
    %v3419 = vadd.f32 %v698, %v3418
    %v3420 = vpop.f32.mrf.mxu0
    %v3421 = vpop.f32.mrf.mxu0
    %3422 = vdwg.mxu0
    %3423 = vmatprep.subr.bf16.mxu0 %v838
    %3424 = vmatpush1.bf16.msra.mxu0 %v837
    %3425 = vmatprep.subr.bf16.mxu0 %v834
    %3426 = vmatpush1.bf16.msra.mxu0 %v833
    %3427 = vmatprep.subr.bf16.mxu0 %v830
    %3428 = vmatpush1.bf16.msra.mxu0 %v829
    %3429 = vmatprep.subr.bf16.mxu0 %v826
    %3430 = vmatpush1.bf16.msra.mxu0 %v825
    %3431 = vmatprep.subr.bf16.mxu0 %v822
    %3432 = vmatpush1.bf16.msra.mxu0 %v821
    %3433 = vmatprep.subr.bf16.mxu0 %v818
    %3434 = vmatpush1.bf16.msra.mxu0 %v817
    %3435 = vmatprep.subr.bf16.mxu0 %v814
    %3436 = vmatpush1.bf16.msra.mxu0 %v813
    %3437 = vmatprep.subr.bf16.mxu0 %v810
    %3438 = vmatpush1.bf16.msra.mxu0 %v809
    %3439 = vmatprep.subr.bf16.mxu0 0
    %3440 = vmatpush2.bf16.msra.mxu0 0
    %3441 = vmatprep.subr.bf16.mxu0 0
    %3442 = vmatpush2.bf16.msra.mxu0 0
    %3443 = vmatprep.subr.bf16.mxu0 0
    %3444 = vmatpush2.bf16.msra.mxu0 0
    %3445 = vmatprep.subr.bf16.mxu0 0
    %3446 = vmatpush2.bf16.msra.mxu0 0
    %3447 = vmatprep.subr.bf16.mxu0 0
    %3448 = vmatpush2.bf16.msra.mxu0 0
    %3449 = vmatprep.subr.bf16.mxu0 0
    %3450 = vmatpush2.bf16.msra.mxu0 0
    %3451 = vmatprep.subr.bf16.mxu0 0
    %3452 = vmatpush2.bf16.msra.mxu0 0
    %3453 = vmatprep.subr.bf16.mxu0 0
    %3454 = vmatpush2.bf16.msra.mxu0 0
    %3455 = vmatprep.mubr.bf16.mxu0 0
    %3456 = vmatmul.mubr.bf16.gmra.mxu0 %v3381
    %v3457 = vpop.f32.mrf.mxu0
    %v3458 = vadd.f32 %v702, %v3457
    %v3459 = vpop.f32.mrf.mxu0
    %v3460 = vadd.f32 %v706, %v3459
    %v3461 = vpop.f32.mrf.mxu0
    %v3462 = vpop.f32.mrf.mxu0
    %3463 = vdwg.mxu0
    %s3464 = smul.u32 7, 4
    %s3465 = smul.addr %s3464, 8
    %s3466 = scalar_lea.vmem [#allocation2], %s3465
    %v3467 = vld [vmem:[%s3466] sm:$0xff]
    %v3468 = vld [vmem:[%s3466 + $0x8] sm:$0xff]
    %v3469 = vld [vmem:[%s3466 + $0x10] sm:$0xff]
    %v3470 = vld [vmem:[%s3466 + $0x18] sm:$0xff]
    %3471 = vmatprep.subr.bf16.mxu0 %v1086
    %3472 = vmatpush1.bf16.msra.mxu0 %v1085
    %3473 = vmatprep.subr.bf16.mxu0 %v1082
    %3474 = vmatpush1.bf16.msra.mxu0 %v1081
    %3475 = vmatprep.subr.bf16.mxu0 %v1078
    %3476 = vmatpush1.bf16.msra.mxu0 %v1077
    %3477 = vmatprep.subr.bf16.mxu0 %v1074
    %3478 = vmatpush1.bf16.msra.mxu0 %v1073
    %3479 = vmatprep.subr.bf16.mxu0 %v1070
    %3480 = vmatpush1.bf16.msra.mxu0 %v1069
    %3481 = vmatprep.subr.bf16.mxu0 %v1066
    %3482 = vmatpush1.bf16.msra.mxu0 %v1065
    %3483 = vmatprep.subr.bf16.mxu0 %v1062
    %3484 = vmatpush1.bf16.msra.mxu0 %v1061
    %3485 = vmatprep.subr.bf16.mxu0 %v1058
    %3486 = vmatpush1.bf16.msra.mxu0 %v1057
    %3487 = vmatprep.subr.bf16.mxu0 0
    %3488 = vmatpush2.bf16.msra.mxu0 0
    %3489 = vmatprep.subr.bf16.mxu0 0
    %3490 = vmatpush2.bf16.msra.mxu0 0
    %3491 = vmatprep.subr.bf16.mxu0 0
    %3492 = vmatpush2.bf16.msra.mxu0 0
    %3493 = vmatprep.subr.bf16.mxu0 0
    %3494 = vmatpush2.bf16.msra.mxu0 0
    %3495 = vmatprep.subr.bf16.mxu0 0
    %3496 = vmatpush2.bf16.msra.mxu0 0
    %3497 = vmatprep.subr.bf16.mxu0 0
    %3498 = vmatpush2.bf16.msra.mxu0 0
    %3499 = vmatprep.subr.bf16.mxu0 0
    %3500 = vmatpush2.bf16.msra.mxu0 0
    %3501 = vmatprep.subr.bf16.mxu0 0
    %3502 = vmatpush2.bf16.msra.mxu0 0
    %3503 = vmatprep.mubr.bf16.mxu0 0
    %3504 = vmatmul.mubr.bf16.gmra.mxu0 %v3268
    %v3505 = vpop.f32.mrf.mxu0
    %v3506 = vadd.f32 0.0, %v3505
    %v3507 = vpop.f32.mrf.mxu0
    %v3508 = vadd.f32 0.0, %v3507
    %v3509 = vpop.f32.mrf.mxu0
    %v3510 = vpop.f32.mrf.mxu0
    %3511 = vdwg.mxu0
    %3512 = vmatprep.subr.bf16.mxu0 %v1088
    %3513 = vmatpush1.bf16.msra.mxu0 %v1087
    %3514 = vmatprep.subr.bf16.mxu0 %v1084
    %3515 = vmatpush1.bf16.msra.mxu0 %v1083
    %3516 = vmatprep.subr.bf16.mxu0 %v1080
    %3517 = vmatpush1.bf16.msra.mxu0 %v1079
    %3518 = vmatprep.subr.bf16.mxu0 %v1076
    %3519 = vmatpush1.bf16.msra.mxu0 %v1075
    %3520 = vmatprep.subr.bf16.mxu0 %v1072
    %3521 = vmatpush1.bf16.msra.mxu0 %v1071
    %3522 = vmatprep.subr.bf16.mxu0 %v1068
    %3523 = vmatpush1.bf16.msra.mxu0 %v1067
    %3524 = vmatprep.subr.bf16.mxu0 %v1064
    %3525 = vmatpush1.bf16.msra.mxu0 %v1063
    %3526 = vmatprep.subr.bf16.mxu0 %v1060
    %3527 = vmatpush1.bf16.msra.mxu0 %v1059
    %3528 = vmatprep.subr.bf16.mxu0 0
    %3529 = vmatpush2.bf16.msra.mxu0 0
    %3530 = vmatprep.subr.bf16.mxu0 0
    %3531 = vmatpush2.bf16.msra.mxu0 0
    %3532 = vmatprep.subr.bf16.mxu0 0
    %3533 = vmatpush2.bf16.msra.mxu0 0
    %3534 = vmatprep.subr.bf16.mxu0 0
    %3535 = vmatpush2.bf16.msra.mxu0 0
    %3536 = vmatprep.subr.bf16.mxu0 0
    %3537 = vmatpush2.bf16.msra.mxu0 0
    %3538 = vmatprep.subr.bf16.mxu0 0
    %3539 = vmatpush2.bf16.msra.mxu0 0
    %3540 = vmatprep.subr.bf16.mxu0 0
    %3541 = vmatpush2.bf16.msra.mxu0 0
    %3542 = vmatprep.subr.bf16.mxu0 0
    %3543 = vmatpush2.bf16.msra.mxu0 0
    %3544 = vmatprep.mubr.bf16.mxu0 0
    %3545 = vmatmul.mubr.bf16.gmra.mxu0 %v3268
    %v3546 = vpop.f32.mrf.mxu0
    %v3547 = vadd.f32 0.0, %v3546
    %v3548 = vpop.f32.mrf.mxu0
    %v3549 = vadd.f32 0.0, %v3548
    %v3550 = vpop.f32.mrf.mxu0
    %v3551 = vpop.f32.mrf.mxu0
    %3552 = vdwg.mxu0
    %v3553 = vadd.f32 %v3467, %v3506
    %v3554 = vadd.f32 %v3468, %v3508
    %v3555 = vadd.f32 %v3469, %v3547
    %v3556 = vadd.f32 %v3470, %v3549
    %v3557 = vxor.u32 %v3553, 2147483648
    %v3558 = vmul.f32 %v3557, 1.442695
    %v3559 = vpow.pop %v3558
    %v3560 = vadd.f32 %v3559, 1.0
    %v3561 = vrcp.pop %v3560
    %v3562 = vmul.f32 1.0, %v3561
    %v3563 = vxor.u32 %v3554, 2147483648
    %v3564 = vmul.f32 %v3563, 1.442695
    %v3565 = vpow.pop %v3564
    %v3566 = vadd.f32 %v3565, 1.0
    %v3567 = vrcp.pop %v3566
    %v3568 = vmul.f32 1.0, %v3567
    %v3569 = vtanh.pop %v3555
    %v3570 = vxor.u32 %v3556, 2147483648
    %v3571 = vmul.f32 %v3570, 1.442695
    %v3572 = vpow.pop %v3571
    %v3573 = vadd.f32 %v3572, 1.0
    %v3574 = vrcp.pop %v3573
    %v3575 = vmul.f32 1.0, %v3574
    %v3576 = vmul.f32 %v3568, %v3265
    %v3577 = vmul.f32 %v3562, %v3569
    %v3578 = vadd.f32 %v3576, %v3577
    %v3579 = vtanh.pop %v3578
    %v3580 = vmul.f32 %v3575, %v3579
    %v3581 = vpack.c.bf16 %v3580, %v3580
    %3582 = vmatprep.subr.bf16.mxu0 %v1357
    %3583 = vmatpush1.bf16.msra.mxu0 %v1356
    %3584 = vmatprep.subr.bf16.mxu0 %v1353
    %3585 = vmatpush1.bf16.msra.mxu0 %v1352
    %3586 = vmatprep.subr.bf16.mxu0 %v1349
    %3587 = vmatpush1.bf16.msra.mxu0 %v1348
    %3588 = vmatprep.subr.bf16.mxu0 %v1345
    %3589 = vmatpush1.bf16.msra.mxu0 %v1344
    %3590 = vmatprep.subr.bf16.mxu0 %v1341
    %3591 = vmatpush1.bf16.msra.mxu0 %v1340
    %3592 = vmatprep.subr.bf16.mxu0 %v1337
    %3593 = vmatpush1.bf16.msra.mxu0 %v1336
    %3594 = vmatprep.subr.bf16.mxu0 %v1333
    %3595 = vmatpush1.bf16.msra.mxu0 %v1332
    %3596 = vmatprep.subr.bf16.mxu0 %v1329
    %3597 = vmatpush1.bf16.msra.mxu0 %v1328
    %3598 = vmatprep.subr.bf16.mxu0 0
    %3599 = vmatpush2.bf16.msra.mxu0 0
    %3600 = vmatprep.subr.bf16.mxu0 0
    %3601 = vmatpush2.bf16.msra.mxu0 0
    %3602 = vmatprep.subr.bf16.mxu0 0
    %3603 = vmatpush2.bf16.msra.mxu0 0
    %3604 = vmatprep.subr.bf16.mxu0 0
    %3605 = vmatpush2.bf16.msra.mxu0 0
    %3606 = vmatprep.subr.bf16.mxu0 0
    %3607 = vmatpush2.bf16.msra.mxu0 0
    %3608 = vmatprep.subr.bf16.mxu0 0
    %3609 = vmatpush2.bf16.msra.mxu0 0
    %3610 = vmatprep.subr.bf16.mxu0 0
    %3611 = vmatpush2.bf16.msra.mxu0 0
    %3612 = vmatprep.subr.bf16.mxu0 0
    %3613 = vmatpush2.bf16.msra.mxu0 0
    %3614 = vmatprep.mubr.bf16.mxu0 0
    %3615 = vmatmul.mubr.bf16.gmra.mxu0 %v3581
    %v3616 = vpop.f32.mrf.mxu0
    %v3617 = vadd.f32 0.0, %v3616
    %v3618 = vpop.f32.mrf.mxu0
    %v3619 = vadd.f32 0.0, %v3618
    %v3620 = vpop.f32.mrf.mxu0
    %v3621 = vpop.f32.mrf.mxu0
    %3622 = vdwg.mxu0
    %3623 = vmatprep.subr.bf16.mxu0 %v1359
    %3624 = vmatpush1.bf16.msra.mxu0 %v1358
    %3625 = vmatprep.subr.bf16.mxu0 %v1355
    %3626 = vmatpush1.bf16.msra.mxu0 %v1354
    %3627 = vmatprep.subr.bf16.mxu0 %v1351
    %3628 = vmatpush1.bf16.msra.mxu0 %v1350
    %3629 = vmatprep.subr.bf16.mxu0 %v1347
    %3630 = vmatpush1.bf16.msra.mxu0 %v1346
    %3631 = vmatprep.subr.bf16.mxu0 %v1343
    %3632 = vmatpush1.bf16.msra.mxu0 %v1342
    %3633 = vmatprep.subr.bf16.mxu0 %v1339
    %3634 = vmatpush1.bf16.msra.mxu0 %v1338
    %3635 = vmatprep.subr.bf16.mxu0 %v1335
    %3636 = vmatpush1.bf16.msra.mxu0 %v1334
    %3637 = vmatprep.subr.bf16.mxu0 %v1331
    %3638 = vmatpush1.bf16.msra.mxu0 %v1330
    %3639 = vmatprep.subr.bf16.mxu0 0
    %3640 = vmatpush2.bf16.msra.mxu0 0
    %3641 = vmatprep.subr.bf16.mxu0 0
    %3642 = vmatpush2.bf16.msra.mxu0 0
    %3643 = vmatprep.subr.bf16.mxu0 0
    %3644 = vmatpush2.bf16.msra.mxu0 0
    %3645 = vmatprep.subr.bf16.mxu0 0
    %3646 = vmatpush2.bf16.msra.mxu0 0
    %3647 = vmatprep.subr.bf16.mxu0 0
    %3648 = vmatpush2.bf16.msra.mxu0 0
    %3649 = vmatprep.subr.bf16.mxu0 0
    %3650 = vmatpush2.bf16.msra.mxu0 0
    %3651 = vmatprep.subr.bf16.mxu0 0
    %3652 = vmatpush2.bf16.msra.mxu0 0
    %3653 = vmatprep.subr.bf16.mxu0 0
    %3654 = vmatpush2.bf16.msra.mxu0 0
    %3655 = vmatprep.mubr.bf16.mxu0 0
    %3656 = vmatmul.mubr.bf16.gmra.mxu0 %v3581
    %v3657 = vpop.f32.mrf.mxu0
    %v3658 = vadd.f32 0.0, %v3657
    %v3659 = vpop.f32.mrf.mxu0
    %v3660 = vadd.f32 0.0, %v3659
    %v3661 = vpop.f32.mrf.mxu0
    %v3662 = vpop.f32.mrf.mxu0
    %3663 = vdwg.mxu0
    %v3664 = vadd.f32 %v3417, %v3617
    %v3665 = vadd.f32 %v3419, %v3619
    %v3666 = vadd.f32 %v3458, %v3658
    %v3667 = vadd.f32 %v3460, %v3660
    %v3668 = vxor.u32 %v3664, 2147483648
    %v3669 = vmul.f32 %v3668, 1.442695
    %v3670 = vpow.pop %v3669
    %v3671 = vadd.f32 %v3670, 1.0
    %v3672 = vrcp.pop %v3671
    %v3673 = vmul.f32 1.0, %v3672
    %v3674 = vxor.u32 %v3665, 2147483648
    %v3675 = vmul.f32 %v3674, 1.442695
    %v3676 = vpow.pop %v3675
    %v3677 = vadd.f32 %v3676, 1.0
    %v3678 = vrcp.pop %v3677
    %v3679 = vmul.f32 1.0, %v3678
    %v3680 = vtanh.pop %v3666
    %v3681 = vxor.u32 %v3667, 2147483648
    %v3682 = vmul.f32 %v3681, 1.442695
    %v3683 = vpow.pop %v3682
    %v3684 = vadd.f32 %v3683, 1.0
    %v3685 = vrcp.pop %v3684
    %v3686 = vmul.f32 1.0, %v3685
    %v3687 = vmul.f32 %v3679, %v3376
    %v3688 = vmul.f32 %v3673, %v3680
    %v3689 = vadd.f32 %v3687, %v3688
    %v3690 = vtanh.pop %v3689
    %v3691 = vmul.f32 %v3686, %v3690
    %s3692 = scalar_lea.vmem [#allocation3], 56
    %3693 = vst [vmem:[%s3692] sm:$0xff] %v3691
    %3694 = vst [vmem:[#allocation4] sm:$0xff] %v3580
    %3695 = vst [vmem:[#allocation5] sm:$0xff] %v3578
    %3696 = vst [vmem:[#allocation6] sm:$0xff] %v3691
    %3697 = vst [vmem:[#allocation7] sm:$0xff] %v3689
    %v3698 = vld [vmem:[#allocation3] sm:$0xff]
    %v3699 = vld [vmem:[#allocation3 + $0x8] sm:$0xff]
    %v3700 = vld [vmem:[#allocation3 + $0x10] sm:$0xff]
    %v3701 = vld [vmem:[#allocation3 + $0x18] sm:$0xff]
    %v3702 = vld [vmem:[#allocation3 + $0x20] sm:$0xff]
    %v3703 = vld [vmem:[#allocation3 + $0x28] sm:$0xff]
    %v3704 = vld [vmem:[#allocation3 + $0x30] sm:$0xff]
    %v3705 = vld [vmem:[#allocation3 + $0x38] sm:$0xff]
    %v3706 = vpack.c.bf16 %v3699, %v3698
    %v3707 = vpack.c.bf16 %v3701, %v3700
    %v3708 = vpack.c.bf16 %v3703, %v3702
    %v3709 = vpack.c.bf16 %v3705, %v3704
    %v3710 = vld [vmem:[#allocation16] sm:$0xff]
    %v3711 = vld [vmem:[#allocation16 + $0x8] sm:$0xf]
    %v3712 = vld [vmem:[#allocation16 + $0xc] sm:$0xff]
    %v3713 = vld [vmem:[#allocation16 + $0x14] sm:$0xf]
    %v3714 = vld [vmem:[#allocation16 + $0x18] sm:$0xff]
    %v3715 = vld [vmem:[#allocation16 + $0x20] sm:$0xf]
    %v3716 = vld [vmem:[#allocation16 + $0x24] sm:$0xff]
    %v3717 = vld [vmem:[#allocation16 + $0x2c] sm:$0xf]
    %v3718 = vld [vmem:[#allocation16 + $0x30] sm:$0xff]
    %v3719 = vld [vmem:[#allocation16 + $0x38] sm:$0xf]
    %v3720 = vld [vmem:[#allocation16 + $0x3c] sm:$0xff]
    %v3721 = vld [vmem:[#allocation16 + $0x44] sm:$0xf]
    %v3722 = vld [vmem:[#allocation16 + $0x48] sm:$0xff]
    %v3723 = vld [vmem:[#allocation16 + $0x50] sm:$0xf]
    %v3724 = vld [vmem:[#allocation16 + $0x54] sm:$0xff]
    %v3725 = vld [vmem:[#allocation16 + $0x5c] sm:$0xf]
    %v3726 = vld [vmem:[#allocation16 + $0x60] sm:$0xff]
    %v3727 = vld [vmem:[#allocation16 + $0x68] sm:$0xf]
    %v3728 = vld [vmem:[#allocation16 + $0x6c] sm:$0xff]
    %v3729 = vld [vmem:[#allocation16 + $0x74] sm:$0xf]
    %v3730 = vld [vmem:[#allocation16 + $0x78] sm:$0xff]
    %v3731 = vld [vmem:[#allocation16 + $0x80] sm:$0xf]
    %v3732 = vld [vmem:[#allocation16 + $0x84] sm:$0xff]
    %v3733 = vld [vmem:[#allocation16 + $0x8c] sm:$0xf]
    %v3734 = vld [vmem:[#allocation16 + $0x90] sm:$0xff]
    %v3735 = vld [vmem:[#allocation16 + $0x98] sm:$0xf]
    %v3736 = vld [vmem:[#allocation16 + $0x9c] sm:$0xff]
    %v3737 = vld [vmem:[#allocation16 + $0xa4] sm:$0xf]
    %v3738 = vld [vmem:[#allocation16 + $0xa8] sm:$0xff]
    %v3739 = vld [vmem:[#allocation16 + $0xb0] sm:$0xf]
    %v3740 = vld [vmem:[#allocation16 + $0xb4] sm:$0xff]
    %v3741 = vld [vmem:[#allocation16 + $0xbc] sm:$0xf]
    %v3742 = vld [vmem:[%s8] sm:$0x7]
    %v3744 = vlaneseq
    %v3745 = vshrl.u32 %v3744, 7
    %v3746 = vsub.s32 0, %v3745
    %v3747 = vrot.slane %v3742, %v3746
    %v3748 = vlaneseq
    %v3749 = vshrl.u32 %v3748, 7
    %v3750 = vsub.s32 1, %v3749
    %v3751 = vrot.slane %v3742, %v3750
    %v3752 = vlaneseq
    %v3753 = vshrl.u32 %v3752, 7
    %v3754 = vsub.s32 2, %v3753
    %v3755 = vrot.slane %v3742, %v3754
    %v3791 = vunpack.c.l.b16 %v3710
    %v3792 = vunpack.c.h.b16 %v3710
    %v3793 = vunpack.c.l.b16 %v3711
    %v3794 = vunpack.c.l.b16 %v3712
    %v3795 = vunpack.c.h.b16 %v3712
    %v3796 = vunpack.c.l.b16 %v3713
    %v3797 = vunpack.c.l.b16 %v3714
    %v3798 = vunpack.c.h.b16 %v3714
    %v3799 = vunpack.c.l.b16 %v3715
    %v3800 = vunpack.c.l.b16 %v3716
    %v3801 = vunpack.c.h.b16 %v3716
    %v3802 = vunpack.c.l.b16 %v3717
    %v3803 = vunpack.c.l.b16 %v3718
    %v3804 = vunpack.c.h.b16 %v3718
    %v3805 = vunpack.c.l.b16 %v3719
    %v3806 = vunpack.c.l.b16 %v3720
    %v3807 = vunpack.c.h.b16 %v3720
    %v3808 = vunpack.c.l.b16 %v3721
    %v3809 = vunpack.c.l.b16 %v3722
    %v3810 = vunpack.c.h.b16 %v3722
    %v3811 = vunpack.c.l.b16 %v3723
    %v3812 = vunpack.c.l.b16 %v3724
    %v3813 = vunpack.c.h.b16 %v3724
    %v3814 = vunpack.c.l.b16 %v3725
    %v3815 = vunpack.c.l.b16 %v3726
    %v3816 = vunpack.c.h.b16 %v3726
    %v3817 = vunpack.c.l.b16 %v3727
    %v3818 = vunpack.c.l.b16 %v3728
    %v3819 = vunpack.c.h.b16 %v3728
    %v3820 = vunpack.c.l.b16 %v3729
    %v3821 = vunpack.c.l.b16 %v3730
    %v3822 = vunpack.c.h.b16 %v3730
    %v3823 = vunpack.c.l.b16 %v3731
    %v3824 = vunpack.c.l.b16 %v3732
    %v3825 = vunpack.c.h.b16 %v3732
    %v3826 = vunpack.c.l.b16 %v3733
    %v3827 = vunpack.c.l.b16 %v3734
    %v3828 = vunpack.c.h.b16 %v3734
    %v3829 = vunpack.c.l.b16 %v3735
    %v3830 = vunpack.c.l.b16 %v3736
    %v3831 = vunpack.c.h.b16 %v3736
    %v3832 = vunpack.c.l.b16 %v3737
    %v3833 = vunpack.c.l.b16 %v3738
    %v3834 = vunpack.c.h.b16 %v3738
    %v3835 = vunpack.c.l.b16 %v3739
    %v3836 = vunpack.c.l.b16 %v3740
    %v3837 = vunpack.c.h.b16 %v3740
    %v3838 = vunpack.c.l.b16 %v3741
    %v3839 = vpack.c.b16 %v3794, %v3791
    %v3840 = vpack.c.b16 %v3795, %v3792
    %v3841 = vpack.c.b16 %v3796, %v3793
    %v3842 = vpack.c.b16 %v3800, %v3797
    %v3843 = vpack.c.b16 %v3801, %v3798
    %v3844 = vpack.c.b16 %v3802, %v3799
    %v3845 = vpack.c.b16 %v3806, %v3803
    %v3846 = vpack.c.b16 %v3807, %v3804
    %v3847 = vpack.c.b16 %v3808, %v3805
    %v3848 = vpack.c.b16 %v3812, %v3809
    %v3849 = vpack.c.b16 %v3813, %v3810
    %v3850 = vpack.c.b16 %v3814, %v3811
    %v3851 = vpack.c.b16 %v3818, %v3815
    %v3852 = vpack.c.b16 %v3819, %v3816
    %v3853 = vpack.c.b16 %v3820, %v3817
    %v3854 = vpack.c.b16 %v3824, %v3821
    %v3855 = vpack.c.b16 %v3825, %v3822
    %v3856 = vpack.c.b16 %v3826, %v3823
    %v3857 = vpack.c.b16 %v3830, %v3827
    %v3858 = vpack.c.b16 %v3831, %v3828
    %v3859 = vpack.c.b16 %v3832, %v3829
    %v3860 = vpack.c.b16 %v3836, %v3833
    %v3861 = vpack.c.b16 %v3837, %v3834
    %v3862 = vpack.c.b16 %v3838, %v3835
    %3887 = vmatprep.subr.bf16.mxu0 %v3861
    %3888 = vmatpush1.bf16.msra.mxu0 %v3860
    %3889 = vmatprep.subr.bf16.mxu0 %v3858
    %3890 = vmatpush1.bf16.msra.mxu0 %v3857
    %3891 = vmatprep.subr.bf16.mxu0 %v3855
    %3892 = vmatpush1.bf16.msra.mxu0 %v3854
    %3893 = vmatprep.subr.bf16.mxu0 %v3852
    %3894 = vmatpush1.bf16.msra.mxu0 %v3851
    %3895 = vmatprep.subr.bf16.mxu0 %v3849
    %3896 = vmatpush1.bf16.msra.mxu0 %v3848
    %3897 = vmatprep.subr.bf16.mxu0 %v3846
    %3898 = vmatpush1.bf16.msra.mxu0 %v3845
    %3899 = vmatprep.subr.bf16.mxu0 %v3843
    %3900 = vmatpush1.bf16.msra.mxu0 %v3842
    %3901 = vmatprep.subr.bf16.mxu0 %v3840
    %3902 = vmatpush1.bf16.msra.mxu0 %v3839
    %3903 = vmatprep.subr.bf16.mxu0 0
    %3904 = vmatpush2.bf16.msra.mxu0 0
    %3905 = vmatprep.subr.bf16.mxu0 0
    %3906 = vmatpush2.bf16.msra.mxu0 0
    %3907 = vmatprep.subr.bf16.mxu0 0
    %3908 = vmatpush2.bf16.msra.mxu0 0
    %3909 = vmatprep.subr.bf16.mxu0 0
    %3910 = vmatpush2.bf16.msra.mxu0 0
    %3911 = vmatprep.subr.bf16.mxu0 0
    %3912 = vmatpush2.bf16.msra.mxu0 0
    %3913 = vmatprep.subr.bf16.mxu0 0
    %3914 = vmatpush2.bf16.msra.mxu0 0
    %3915 = vmatprep.subr.bf16.mxu0 0
    %3916 = vmatpush2.bf16.msra.mxu0 0
    %3917 = vmatprep.subr.bf16.mxu0 0
    %3918 = vmatpush2.bf16.msra.mxu0 0
    %3919 = vmatprep.mubr.bf16.mxu0 0
    %3920 = vmatmul.mubr.bf16.gmra.mxu0 %v3706
    %v3921 = vpop.f32.mrf.mxu0
    %v3922 = vadd.f32 %v3747, %v3921
    %v3923 = vpop.f32.mrf.mxu0
    %v3924 = vadd.f32 %v3751, %v3923
    %v3925 = vpop.f32.mrf.mxu0
    %v3926 = vadd.f32 %v3747, %v3925
    %v3927 = vpop.f32.mrf.mxu0
    %v3928 = vadd.f32 %v3751, %v3927
    %3929 = vmatprep.mubr.bf16.mxu0 0
    %3930 = vmatmul.mubr.bf16.gmra.mxu0 %v3707
    %v3931 = vpop.f32.mrf.mxu0
    %v3932 = vadd.f32 %v3747, %v3931
    %v3933 = vpop.f32.mrf.mxu0
    %v3934 = vadd.f32 %v3751, %v3933
    %v3935 = vpop.f32.mrf.mxu0
    %v3936 = vadd.f32 %v3747, %v3935
    %v3937 = vpop.f32.mrf.mxu0
    %v3938 = vadd.f32 %v3751, %v3937
    %3939 = vmatprep.mubr.bf16.mxu0 0
    %3940 = vmatmul.mubr.bf16.gmra.mxu0 %v3708
    %v3941 = vpop.f32.mrf.mxu0
    %v3942 = vadd.f32 %v3747, %v3941
    %v3943 = vpop.f32.mrf.mxu0
    %v3944 = vadd.f32 %v3751, %v3943
    %v3945 = vpop.f32.mrf.mxu0
    %v3946 = vadd.f32 %v3747, %v3945
    %v3947 = vpop.f32.mrf.mxu0
    %v3948 = vadd.f32 %v3751, %v3947
    %3949 = vmatprep.mubr.bf16.mxu0 0
    %3950 = vmatmul.mubr.bf16.gmra.mxu0 %v3709
    %v3951 = vpop.f32.mrf.mxu0
    %v3952 = vadd.f32 %v3747, %v3951
    %v3953 = vpop.f32.mrf.mxu0
    %v3954 = vadd.f32 %v3751, %v3953
    %v3955 = vpop.f32.mrf.mxu0
    %v3956 = vadd.f32 %v3747, %v3955
    %v3957 = vpop.f32.mrf.mxu0
    %v3958 = vadd.f32 %v3751, %v3957
    %3959 = vdwg.mxu0
    %3960 = vmatprep.subr.bf16.mxu0 0
    %3961 = vmatpush1.bf16.msra.mxu0 %v3862
    %3962 = vmatprep.subr.bf16.mxu0 0
    %3963 = vmatpush1.bf16.msra.mxu0 %v3859
    %3964 = vmatprep.subr.bf16.mxu0 0
    %3965 = vmatpush1.bf16.msra.mxu0 %v3856
    %3966 = vmatprep.subr.bf16.mxu0 0
    %3967 = vmatpush1.bf16.msra.mxu0 %v3853
    %3968 = vmatprep.subr.bf16.mxu0 0
    %3969 = vmatpush1.bf16.msra.mxu0 %v3850
    %3970 = vmatprep.subr.bf16.mxu0 0
    %3971 = vmatpush1.bf16.msra.mxu0 %v3847
    %3972 = vmatprep.subr.bf16.mxu0 0
    %3973 = vmatpush1.bf16.msra.mxu0 %v3844
    %3974 = vmatprep.subr.bf16.mxu0 0
    %3975 = vmatpush1.bf16.msra.mxu0 %v3841
    %3976 = vmatprep.subr.bf16.mxu0 0
    %3977 = vmatpush2.bf16.msra.mxu0 0
    %3978 = vmatprep.subr.bf16.mxu0 0
    %3979 = vmatpush2.bf16.msra.mxu0 0
    %3980 = vmatprep.subr.bf16.mxu0 0
    %3981 = vmatpush2.bf16.msra.mxu0 0
    %3982 = vmatprep.subr.bf16.mxu0 0
    %3983 = vmatpush2.bf16.msra.mxu0 0
    %3984 = vmatprep.subr.bf16.mxu0 0
    %3985 = vmatpush2.bf16.msra.mxu0 0
    %3986 = vmatprep.subr.bf16.mxu0 0
    %3987 = vmatpush2.bf16.msra.mxu0 0
    %3988 = vmatprep.subr.bf16.mxu0 0
    %3989 = vmatpush2.bf16.msra.mxu0 0
    %3990 = vmatprep.subr.bf16.mxu0 0
    %3991 = vmatpush2.bf16.msra.mxu0 0
    %3992 = vmatprep.mubr.bf16.mxu0 0
    %3993 = vmatmul.mubr.bf16.gmra.mxu0 %v3706
    %v3994 = vpop.f32.mrf.mxu0
    %v3995 = vadd.f32 %v3755, %v3994
    %v3996 = vpop.f32.mrf.mxu0
    %v3997 = vpop.f32.mrf.mxu0
    %v3998 = vadd.f32 %v3755, %v3997
    %v3999 = vpop.f32.mrf.mxu0
    %4000 = vmatprep.mubr.bf16.mxu0 0
    %4001 = vmatmul.mubr.bf16.gmra.mxu0 %v3707
    %v4002 = vpop.f32.mrf.mxu0
    %v4003 = vadd.f32 %v3755, %v4002
    %v4004 = vpop.f32.mrf.mxu0
    %v4005 = vpop.f32.mrf.mxu0
    %v4006 = vadd.f32 %v3755, %v4005
    %v4007 = vpop.f32.mrf.mxu0
    %4008 = vmatprep.mubr.bf16.mxu0 0
    %4009 = vmatmul.mubr.bf16.gmra.mxu0 %v3708
    %v4010 = vpop.f32.mrf.mxu0
    %v4011 = vadd.f32 %v3755, %v4010
    %v4012 = vpop.f32.mrf.mxu0
    %v4013 = vpop.f32.mrf.mxu0
    %v4014 = vadd.f32 %v3755, %v4013
    %v4015 = vpop.f32.mrf.mxu0
    %4016 = vmatprep.mubr.bf16.mxu0 0
    %4017 = vmatmul.mubr.bf16.gmra.mxu0 %v3709
    %v4018 = vpop.f32.mrf.mxu0
    %v4019 = vadd.f32 %v3755, %v4018
    %v4020 = vpop.f32.mrf.mxu0
    %v4021 = vpop.f32.mrf.mxu0
    %v4022 = vadd.f32 %v3755, %v4021
    %v4023 = vpop.f32.mrf.mxu0
    %4024 = vdwg.mxu0
    %v4025 = vtanh.pop %v3922
    %v4026 = vtanh.pop %v3924
    %v4027 = vtanh.pop %v3995
    %v4028 = vtanh.pop %v3926
    %v4029 = vtanh.pop %v3928
    %v4030 = vtanh.pop %v3998
    %v4031 = vtanh.pop %v3932
    %v4032 = vtanh.pop %v3934
    %v4033 = vtanh.pop %v4003
    %v4034 = vtanh.pop %v3936
    %v4035 = vtanh.pop %v3938
    %v4036 = vtanh.pop %v4006
    %v4037 = vtanh.pop %v3942
    %v4038 = vtanh.pop %v3944
    %v4039 = vtanh.pop %v4011
    %v4040 = vtanh.pop %v3946
    %v4041 = vtanh.pop %v3948
    %v4042 = vtanh.pop %v4014
    %v4043 = vtanh.pop %v3952
    %v4044 = vtanh.pop %v3954
    %v4045 = vtanh.pop %v4019
    %v4046 = vtanh.pop %v3956
    %v4047 = vtanh.pop %v3958
    %v4048 = vtanh.pop %v4022
    %v4049 = vpack.c.bf16 %v4028, %v4025
    %v4050 = vpack.c.bf16 %v4029, %v4026
    %v4051 = vpack.c.bf16 %v4030, %v4027
    %v4052 = vpack.c.bf16 %v4034, %v4031
    %v4053 = vpack.c.bf16 %v4035, %v4032
    %v4054 = vpack.c.bf16 %v4036, %v4033
    %v4055 = vpack.c.bf16 %v4040, %v4037
    %v4056 = vpack.c.bf16 %v4041, %v4038
    %v4057 = vpack.c.bf16 %v4042, %v4039
    %v4058 = vpack.c.bf16 %v4046, %v4043
    %v4059 = vpack.c.bf16 %v4047, %v4044
    %v4060 = vpack.c.bf16 %v4048, %v4045
    %v4061 = vld [vmem:[#allocation17] sm:$0xf]
    %v4062 = vld [vmem:[#allocation17 + $0x4] sm:$0xf]
    %v4063 = vld [vmem:[#allocation17 + $0x8] sm:$0xf]
    %v4064 = vld [vmem:[#allocation17 + $0xc] sm:$0xf]
    %v4065 = vld [vmem:[#allocation17 + $0x10] sm:$0xf]
    %v4066 = vld [vmem:[#allocation17 + $0x14] sm:$0xf]
    %v4067 = vld [vmem:[#allocation17 + $0x18] sm:$0xf]
    %v4068 = vld [vmem:[#allocation17 + $0x1c] sm:$0xf]
    %v4069 = vld [vmem:[#allocation17 + $0x20] sm:$0xf]
    %v4070 = vld [vmem:[#allocation17 + $0x24] sm:$0xf]
    %v4071 = vld [vmem:[#allocation17 + $0x28] sm:$0xf]
    %v4072 = vld [vmem:[#allocation17 + $0x2c] sm:$0xf]
    %v4073 = vld [vmem:[#allocation17 + $0x30] sm:$0xf]
    %v4074 = vld [vmem:[#allocation17 + $0x34] sm:$0xf]
    %v4075 = vld [vmem:[#allocation17 + $0x38] sm:$0xf]
    %v4076 = vld [vmem:[#allocation17 + $0x3c] sm:$0xf]
    %v4077 = vld [vmem:[#allocation17 + $0x40] sm:$0xf]
    %v4078 = vld [vmem:[#allocation17 + $0x44] sm:$0xf]
    %v4079 = vld [vmem:[#allocation17 + $0x48] sm:$0xf]
    %v4080 = vld [vmem:[#allocation17 + $0x4c] sm:$0xf]
    %v4081 = vld [vmem:[#allocation17 + $0x50] sm:$0xf]
    %v4082 = vld [vmem:[#allocation17 + $0x54] sm:$0xf]
    %v4083 = vld [vmem:[#allocation17 + $0x58] sm:$0xf]
    %v4084 = vld [vmem:[#allocation17 + $0x5c] sm:$0xf]
    %v4085 = vld [vmem:[#allocation17 + $0x60] sm:$0xf]
    %v4086 = vld [vmem:[#allocation17 + $0x64] sm:$0xf]
    %v4087 = vld [vmem:[#allocation17 + $0x68] sm:$0xf]
    %v4088 = vld [vmem:[#allocation17 + $0x6c] sm:$0xf]
    %v4089 = vld [vmem:[#allocation17 + $0x70] sm:$0xf]
    %v4090 = vld [vmem:[#allocation17 + $0x74] sm:$0xf]
    %v4091 = vld [vmem:[#allocation17 + $0x78] sm:$0xf]
    %v4092 = vld [vmem:[#allocation17 + $0x7c] sm:$0xf]
    %v4093 = vld [vmem:[#allocation17 + $0x80] sm:$0xf]
    %v4094 = vld [vmem:[#allocation17 + $0x84] sm:$0xf]
    %v4095 = vld [vmem:[#allocation17 + $0x88] sm:$0xf]
    %v4096 = vld [vmem:[#allocation17 + $0x8c] sm:$0xf]
    %v4097 = vld [vmem:[#allocation17 + $0x90] sm:$0xf]
    %v4098 = vld [vmem:[#allocation17 + $0x94] sm:$0xf]
    %v4099 = vld [vmem:[#allocation17 + $0x98] sm:$0xf]
    %v4100 = vld [vmem:[#allocation17 + $0x9c] sm:$0xf]
    %v4101 = vld [vmem:[#allocation17 + $0xa0] sm:$0xf]
    %v4102 = vld [vmem:[#allocation17 + $0xa4] sm:$0xf]
    %v4103 = vld [vmem:[#allocation17 + $0xa8] sm:$0xf]
    %v4104 = vld [vmem:[#allocation17 + $0xac] sm:$0xf]
    %v4105 = vld [vmem:[#allocation17 + $0xb0] sm:$0xf]
    %v4106 = vld [vmem:[#allocation17 + $0xb4] sm:$0xf]
    %v4107 = vld [vmem:[#allocation17 + $0xb8] sm:$0xf]
    %v4108 = vld [vmem:[#allocation17 + $0xbc] sm:$0xf]
    %v4109 = vld [vmem:[%s10] sm:$0x1]
    %v4111 = vlaneseq
    %v4112 = vshrl.u32 %v4111, 7
    %v4113 = vsub.s32 0, %v4112
    %v4114 = vrot.slane %v4109, %v4113
    %v4164 = vunpack.c.l.b16 %v4061
    %v4165 = vunpack.c.l.b16 %v4062
    %v4166 = vunpack.c.l.b16 %v4063
    %v4167 = vunpack.c.l.b16 %v4064
    %v4168 = vunpack.c.l.b16 %v4065
    %v4169 = vunpack.c.l.b16 %v4066
    %v4170 = vunpack.c.l.b16 %v4067
    %v4171 = vunpack.c.l.b16 %v4068
    %v4172 = vunpack.c.l.b16 %v4069
    %v4173 = vunpack.c.l.b16 %v4070
    %v4174 = vunpack.c.l.b16 %v4071
    %v4175 = vunpack.c.l.b16 %v4072
    %v4176 = vunpack.c.l.b16 %v4073
    %v4177 = vunpack.c.l.b16 %v4074
    %v4178 = vunpack.c.l.b16 %v4075
    %v4179 = vunpack.c.l.b16 %v4076
    %v4180 = vunpack.c.l.b16 %v4077
    %v4181 = vunpack.c.l.b16 %v4078
    %v4182 = vunpack.c.l.b16 %v4079
    %v4183 = vunpack.c.l.b16 %v4080
    %v4184 = vunpack.c.l.b16 %v4081
    %v4185 = vunpack.c.l.b16 %v4082
    %v4186 = vunpack.c.l.b16 %v4083
    %v4187 = vunpack.c.l.b16 %v4084
    %v4188 = vunpack.c.l.b16 %v4085
    %v4189 = vunpack.c.l.b16 %v4086
    %v4190 = vunpack.c.l.b16 %v4087
    %v4191 = vunpack.c.l.b16 %v4088
    %v4192 = vunpack.c.l.b16 %v4089
    %v4193 = vunpack.c.l.b16 %v4090
    %v4194 = vunpack.c.l.b16 %v4091
    %v4195 = vunpack.c.l.b16 %v4092
    %v4196 = vunpack.c.l.b16 %v4093
    %v4197 = vunpack.c.l.b16 %v4094
    %v4198 = vunpack.c.l.b16 %v4095
    %v4199 = vunpack.c.l.b16 %v4096
    %v4200 = vunpack.c.l.b16 %v4097
    %v4201 = vunpack.c.l.b16 %v4098
    %v4202 = vunpack.c.l.b16 %v4099
    %v4203 = vunpack.c.l.b16 %v4100
    %v4204 = vunpack.c.l.b16 %v4101
    %v4205 = vunpack.c.l.b16 %v4102
    %v4206 = vunpack.c.l.b16 %v4103
    %v4207 = vunpack.c.l.b16 %v4104
    %v4208 = vunpack.c.l.b16 %v4105
    %v4209 = vunpack.c.l.b16 %v4106
    %v4210 = vunpack.c.l.b16 %v4107
    %v4211 = vunpack.c.l.b16 %v4108
    %v4212 = vpack.c.b16 %v4165, %v4164
    %v4213 = vpack.c.b16 %v4167, %v4166
    %v4214 = vpack.c.b16 %v4169, %v4168
    %v4215 = vpack.c.b16 %v4171, %v4170
    %v4216 = vpack.c.b16 %v4173, %v4172
    %v4217 = vpack.c.b16 %v4175, %v4174
    %v4218 = vpack.c.b16 %v4177, %v4176
    %v4219 = vpack.c.b16 %v4179, %v4178
    %v4220 = vpack.c.b16 %v4181, %v4180
    %v4221 = vpack.c.b16 %v4183, %v4182
    %v4222 = vpack.c.b16 %v4185, %v4184
    %v4223 = vpack.c.b16 %v4187, %v4186
    %v4224 = vpack.c.b16 %v4189, %v4188
    %v4225 = vpack.c.b16 %v4191, %v4190
    %v4226 = vpack.c.b16 %v4193, %v4192
    %v4227 = vpack.c.b16 %v4195, %v4194
    %v4228 = vpack.c.b16 %v4197, %v4196
    %v4229 = vpack.c.b16 %v4199, %v4198
    %v4230 = vpack.c.b16 %v4201, %v4200
    %v4231 = vpack.c.b16 %v4203, %v4202
    %v4232 = vpack.c.b16 %v4205, %v4204
    %v4233 = vpack.c.b16 %v4207, %v4206
    %v4234 = vpack.c.b16 %v4209, %v4208
    %v4235 = vpack.c.b16 %v4211, %v4210
    %4260 = vmatprep.subr.bf16.mxu0 0
    %4261 = vmatpush1.bf16.msra.mxu0 %v4219
    %4262 = vmatprep.subr.bf16.mxu0 0
    %4263 = vmatpush1.bf16.msra.mxu0 %v4218
    %4264 = vmatprep.subr.bf16.mxu0 0
    %4265 = vmatpush1.bf16.msra.mxu0 %v4217
    %4266 = vmatprep.subr.bf16.mxu0 0
    %4267 = vmatpush1.bf16.msra.mxu0 %v4216
    %4268 = vmatprep.subr.bf16.mxu0 0
    %4269 = vmatpush1.bf16.msra.mxu0 %v4215
    %4270 = vmatprep.subr.bf16.mxu0 0
    %4271 = vmatpush1.bf16.msra.mxu0 %v4214
    %4272 = vmatprep.subr.bf16.mxu0 0
    %4273 = vmatpush1.bf16.msra.mxu0 %v4213
    %4274 = vmatprep.subr.bf16.mxu0 0
    %4275 = vmatpush1.bf16.msra.mxu0 %v4212
    %4276 = vmatprep.subr.bf16.mxu0 0
    %4277 = vmatpush2.bf16.msra.mxu0 %v4227
    %4278 = vmatprep.subr.bf16.mxu0 0
    %4279 = vmatpush2.bf16.msra.mxu0 %v4226
    %4280 = vmatprep.subr.bf16.mxu0 0
    %4281 = vmatpush2.bf16.msra.mxu0 %v4225
    %4282 = vmatprep.subr.bf16.mxu0 0
    %4283 = vmatpush2.bf16.msra.mxu0 %v4224
    %4284 = vmatprep.subr.bf16.mxu0 0
    %4285 = vmatpush2.bf16.msra.mxu0 %v4223
    %4286 = vmatprep.subr.bf16.mxu0 0
    %4287 = vmatpush2.bf16.msra.mxu0 %v4222
    %4288 = vmatprep.subr.bf16.mxu0 0
    %4289 = vmatpush2.bf16.msra.mxu0 %v4221
    %4290 = vmatprep.subr.bf16.mxu0 0
    %4291 = vmatpush2.bf16.msra.mxu0 %v4220
    %4292 = vmatprep.mubr.bf16.mxu0 %v4050
    %4293 = vmatmul.mubr.bf16.gmra.mxu0 %v4049
    %v4294 = vpop.f32.mrf.mxu0
    %v4295 = vadd.f32 %v4114, %v4294
    %v4296 = vpop.f32.mrf.mxu0
    %v4297 = vpop.f32.mrf.mxu0
    %v4298 = vadd.f32 %v4114, %v4297
    %v4299 = vpop.f32.mrf.mxu0
    %4300 = vmatprep.mubr.bf16.mxu0 %v4053
    %4301 = vmatmul.mubr.bf16.gmra.mxu0 %v4052
    %v4302 = vpop.f32.mrf.mxu0
    %v4303 = vadd.f32 %v4114, %v4302
    %v4304 = vpop.f32.mrf.mxu0
    %v4305 = vpop.f32.mrf.mxu0
    %v4306 = vadd.f32 %v4114, %v4305
    %v4307 = vpop.f32.mrf.mxu0
    %4308 = vmatprep.mubr.bf16.mxu0 %v4056
    %4309 = vmatmul.mubr.bf16.gmra.mxu0 %v4055
    %v4310 = vpop.f32.mrf.mxu0
    %v4311 = vadd.f32 %v4114, %v4310
    %v4312 = vpop.f32.mrf.mxu0
    %v4313 = vpop.f32.mrf.mxu0
    %v4314 = vadd.f32 %v4114, %v4313
    %v4315 = vpop.f32.mrf.mxu0
    %4316 = vmatprep.mubr.bf16.mxu0 %v4059
    %4317 = vmatmul.mubr.bf16.gmra.mxu0 %v4058
    %v4318 = vpop.f32.mrf.mxu0
    %v4319 = vadd.f32 %v4114, %v4318
    %v4320 = vpop.f32.mrf.mxu0
    %v4321 = vpop.f32.mrf.mxu0
    %v4322 = vadd.f32 %v4114, %v4321
    %v4323 = vpop.f32.mrf.mxu0
    %4324 = vdwg.mxu0
    %4325 = vmatprep.subr.bf16.mxu0 0
    %4326 = vmatpush1.bf16.msra.mxu0 %v4235
    %4327 = vmatprep.subr.bf16.mxu0 0
    %4328 = vmatpush1.bf16.msra.mxu0 %v4234
    %4329 = vmatprep.subr.bf16.mxu0 0
    %4330 = vmatpush1.bf16.msra.mxu0 %v4233
    %4331 = vmatprep.subr.bf16.mxu0 0
    %4332 = vmatpush1.bf16.msra.mxu0 %v4232
    %4333 = vmatprep.subr.bf16.mxu0 0
    %4334 = vmatpush1.bf16.msra.mxu0 %v4231
    %4335 = vmatprep.subr.bf16.mxu0 0
    %4336 = vmatpush1.bf16.msra.mxu0 %v4230
    %4337 = vmatprep.subr.bf16.mxu0 0
    %4338 = vmatpush1.bf16.msra.mxu0 %v4229
    %4339 = vmatprep.subr.bf16.mxu0 0
    %4340 = vmatpush1.bf16.msra.mxu0 %v4228
    %4341 = vmatprep.subr.bf16.mxu0 0
    %4342 = vmatpush2.bf16.msra.mxu0 0
    %4343 = vmatprep.subr.bf16.mxu0 0
    %4344 = vmatpush2.bf16.msra.mxu0 0
    %4345 = vmatprep.subr.bf16.mxu0 0
    %4346 = vmatpush2.bf16.msra.mxu0 0
    %4347 = vmatprep.subr.bf16.mxu0 0
    %4348 = vmatpush2.bf16.msra.mxu0 0
    %4349 = vmatprep.subr.bf16.mxu0 0
    %4350 = vmatpush2.bf16.msra.mxu0 0
    %4351 = vmatprep.subr.bf16.mxu0 0
    %4352 = vmatpush2.bf16.msra.mxu0 0
    %4353 = vmatprep.subr.bf16.mxu0 0
    %4354 = vmatpush2.bf16.msra.mxu0 0
    %4355 = vmatprep.subr.bf16.mxu0 0
    %4356 = vmatpush2.bf16.msra.mxu0 0
    %4357 = vmatprep.mubr.bf16.mxu0 0
    %4358 = vmatmul.mubr.bf16.gmra.mxu0 %v4051
    %v4359 = vpop.f32.mrf.mxu0
    %v4360 = vadd.f32 %v4295, %v4359
    %v4361 = vpop.f32.mrf.mxu0
    %v4362 = vpop.f32.mrf.mxu0
    %v4363 = vadd.f32 %v4298, %v4362
    %v4364 = vpop.f32.mrf.mxu0
    %4365 = vmatprep.mubr.bf16.mxu0 0
    %4366 = vmatmul.mubr.bf16.gmra.mxu0 %v4054
    %v4367 = vpop.f32.mrf.mxu0
    %v4368 = vadd.f32 %v4303, %v4367
    %v4369 = vpop.f32.mrf.mxu0
    %v4370 = vpop.f32.mrf.mxu0
    %v4371 = vadd.f32 %v4306, %v4370
    %v4372 = vpop.f32.mrf.mxu0
    %4373 = vmatprep.mubr.bf16.mxu0 0
    %4374 = vmatmul.mubr.bf16.gmra.mxu0 %v4057
    %v4375 = vpop.f32.mrf.mxu0
    %v4376 = vadd.f32 %v4311, %v4375
    %v4377 = vpop.f32.mrf.mxu0
    %v4378 = vpop.f32.mrf.mxu0
    %v4379 = vadd.f32 %v4314, %v4378
    %v4380 = vpop.f32.mrf.mxu0
    %4381 = vmatprep.mubr.bf16.mxu0 0
    %4382 = vmatmul.mubr.bf16.gmra.mxu0 %v4060
    %v4383 = vpop.f32.mrf.mxu0
    %v4384 = vadd.f32 %v4319, %v4383
    %v4385 = vpop.f32.mrf.mxu0
    %v4386 = vpop.f32.mrf.mxu0
    %v4387 = vadd.f32 %v4322, %v4386
    %v4388 = vpop.f32.mrf.mxu0
    %4389 = vdwg.mxu0
    %4390 = vmax.xlane.f32.xlu0 %v4360
    %v4391 = vpop.xlane.xlu0 %4390
    %4392 = vmax.xlane.f32.xlu0 %v4363
    %v4393 = vpop.xlane.xlu0 %4392
    %4394 = vmax.xlane.f32.xlu0 %v4368
    %v4395 = vpop.xlane.xlu0 %4394
    %4396 = vmax.xlane.f32.xlu0 %v4371
    %v4397 = vpop.xlane.xlu0 %4396
    %4398 = vmax.xlane.f32.xlu0 %v4376
    %v4399 = vpop.xlane.xlu0 %4398
    %4400 = vmax.xlane.f32.xlu0 %v4379
    %v4401 = vpop.xlane.xlu0 %4400
    %4402 = vmax.xlane.f32.xlu0 %v4384
    %v4403 = vpop.xlane.xlu0 %4402
    %4404 = vmax.xlane.f32.xlu0 %v4387
    %v4405 = vpop.xlane.xlu0 %4404
    %v4406 = vsub.f32 %v4360, %v4391
    %v4407 = vsub.f32 %v4363, %v4393
    %v4408 = vsub.f32 %v4368, %v4395
    %v4409 = vsub.f32 %v4371, %v4397
    %v4410 = vsub.f32 %v4376, %v4399
    %v4411 = vsub.f32 %v4379, %v4401
    %v4412 = vsub.f32 %v4384, %v4403
    %v4413 = vsub.f32 %v4387, %v4405
    %v4414 = vmul.f32 %v4406, 1.442695
    %v4415 = vpow.pop %v4414
    %v4416 = vmul.f32 %v4407, 1.442695
    %v4417 = vpow.pop %v4416
    %v4418 = vmul.f32 %v4408, 1.442695
    %v4419 = vpow.pop %v4418
    %v4420 = vmul.f32 %v4409, 1.442695
    %v4421 = vpow.pop %v4420
    %v4422 = vmul.f32 %v4410, 1.442695
    %v4423 = vpow.pop %v4422
    %v4424 = vmul.f32 %v4411, 1.442695
    %v4425 = vpow.pop %v4424
    %v4426 = vmul.f32 %v4412, 1.442695
    %v4427 = vpow.pop %v4426
    %v4428 = vmul.f32 %v4413, 1.442695
    %v4429 = vpow.pop %v4428
    %4430 = vadd.xlane.f32.xlu0 %v4415
    %v4431 = vpop.xlane.xlu0 %4430
    %4432 = vadd.xlane.f32.xlu0 %v4417
    %v4433 = vpop.xlane.xlu0 %4432
    %4434 = vadd.xlane.f32.xlu0 %v4419
    %v4435 = vpop.xlane.xlu0 %4434
    %4436 = vadd.xlane.f32.xlu0 %v4421
    %v4437 = vpop.xlane.xlu0 %4436
    %4438 = vadd.xlane.f32.xlu0 %v4423
    %v4439 = vpop.xlane.xlu0 %4438
    %4440 = vadd.xlane.f32.xlu0 %v4425
    %v4441 = vpop.xlane.xlu0 %4440
    %4442 = vadd.xlane.f32.xlu0 %v4427
    %v4443 = vpop.xlane.xlu0 %4442
    %4444 = vadd.xlane.f32.xlu0 %v4429
    %v4445 = vpop.xlane.xlu0 %4444
    %v4446 = vlog2.pop %v4431
    %v4447 = vmul.f32 %v4446, 0.6931472
    %v4448 = vlog2.pop %v4433
    %v4449 = vmul.f32 %v4448, 0.6931472
    %v4450 = vlog2.pop %v4435
    %v4451 = vmul.f32 %v4450, 0.6931472
    %v4452 = vlog2.pop %v4437
    %v4453 = vmul.f32 %v4452, 0.6931472
    %v4454 = vlog2.pop %v4439
    %v4455 = vmul.f32 %v4454, 0.6931472
    %v4456 = vlog2.pop %v4441
    %v4457 = vmul.f32 %v4456, 0.6931472
    %v4458 = vlog2.pop %v4443
    %v4459 = vmul.f32 %v4458, 0.6931472
    %v4460 = vlog2.pop %v4445
    %v4461 = vmul.f32 %v4460, 0.6931472
    %v4462 = vsub.f32 %v4406, %v4447
    %v4463 = vsub.f32 %v4407, %v4449
    %v4464 = vsub.f32 %v4408, %v4451
    %v4465 = vsub.f32 %v4409, %v4453
    %v4466 = vsub.f32 %v4410, %v4455
    %v4467 = vsub.f32 %v4411, %v4457
    %v4468 = vsub.f32 %v4412, %v4459
    %v4469 = vsub.f32 %v4413, %v4461
    %4470 = vst [vmem:[#allocation19] sm:$0xff] %v4462
    %4471 = vst [vmem:[#allocation19 + $0x8] sm:$0xff] %v4463
    %4472 = vst [vmem:[#allocation19 + $0x10] sm:$0xff] %v4464
    %4473 = vst [vmem:[#allocation19 + $0x18] sm:$0xff] %v4465
    %4474 = vst [vmem:[#allocation19 + $0x20] sm:$0xff] %v4466
    %4475 = vst [vmem:[#allocation19 + $0x28] sm:$0xff] %v4467
    %4476 = vst [vmem:[#allocation19 + $0x30] sm:$0xff] %v4468
    %4477 = vst [vmem:[#allocation19 + $0x38] sm:$0xff] %v4469
    // Predicated region
    $region74: #{tpu_custom_call.1} parent=1 // pred_check
      %p4478 = pneg %p126
    $region75: #{tpu_custom_call.1} parent=1 // pred_check_branch
      %4480 = sbr.rel (%p4478) target = $region77
    $region76: #{tpu_custom_call.1} parent=1 // pred_region
      %4481 = vst [vmem:[#allocation20] sm:$0xff] %v3580
      %s4482 = scalar_lea.vmem [#allocation20], 8
      %4483 = vst [vmem:[%s4482] sm:$0xff] %v3691
      %4484 = vst [vmem:[#allocation22] sm:$0xff] %v3578
      %s4485 = scalar_lea.vmem [#allocation22], 8
      %4486 = vst [vmem:[%s4485] sm:$0xff] %v3689
    $region77: #{tpu_custom_call.1} parent=1 // pred_fallthru
      _
    // Predicated region
    $region78: #{tpu_custom_call.1} parent=1 // pred_check
      _
    $region79: #{tpu_custom_call.1} parent=1 // pred_check_branch
      %4488 = sbr.rel (0) target = $region81
    $region80: #{tpu_custom_call.1} parent=1 // pred_region
      %s4490 = ssub.s32 1024, 1024
      %4491 = vsyncadd [#allocation10], %s4490
      %s4492 = sshll.u32 [#allocation19], 4
      %s4493 = int_to_ptr.vmem [resolvable:$true] %s4492
      %4498 = dma.vmem_to_hbm [thread:$0]  %s4493, 1024, %s11, [#allocation10], 128, 128, 8
    $region81: #{tpu_custom_call.1} parent=1 // pred_fallthru
      _
    // Predicated region
    $region82: #{tpu_custom_call.1} parent=1 // pred_check
      _
    $region83: #{tpu_custom_call.1} parent=1 // pred_check_branch
      %4500 = sbr.rel (0) target = $region85
    $region84: #{tpu_custom_call.1} parent=1 // pred_region
      %s4502 = ssub.s32 256, 256
      %4503 = vsyncadd [#allocation21], %s4502
      %s4504 = sshll.u32 [#allocation20], 4
      %s4505 = int_to_ptr.vmem [resolvable:$true] %s4504
      %4510 = dma.vmem_to_hbm [thread:$0]  %s4505, 256, %s12, [#allocation21], 128, 128, 8
    $region85: #{tpu_custom_call.1} parent=1 // pred_fallthru
      _
    // Predicated region
    $region86: #{tpu_custom_call.1} parent=1 // pred_check
      _
    $region87: #{tpu_custom_call.1} parent=1 // pred_check_branch
      %4512 = sbr.rel (0) target = $region89
    $region88: #{tpu_custom_call.1} parent=1 // pred_region
      %s4514 = ssub.s32 256, 256
      %4515 = vsyncadd [#allocation21], %s4514
      %s4516 = sshll.u32 [#allocation22], 4
      %s4517 = int_to_ptr.vmem [resolvable:$true] %s4516
      %4522 = dma.vmem_to_hbm [thread:$0]  %s4517, 256, %s13, [#allocation21], 128, 128, 8
    $region89: #{tpu_custom_call.1} parent=1 // pred_fallthru
      _
    // Predicated region
    $region90: #{tpu_custom_call.1} parent=1 // pred_check
      _
    $region91: #{tpu_custom_call.1} parent=1 // pred_check_branch
      %4524 = sbr.rel (0) target = $region93
    $region92: #{tpu_custom_call.1} parent=1 // pred_region
      %4525 = dma.done [#allocation10], 1024
    $region93: #{tpu_custom_call.1} parent=1 // pred_fallthru
      _
    // Predicated region
    $region94: #{tpu_custom_call.1} parent=1 // pred_check
      _
    $region95: #{tpu_custom_call.1} parent=1 // pred_check_branch
      %4527 = sbr.rel (0) target = $region97
    $region96: #{tpu_custom_call.1} parent=1 // pred_region
      %4528 = dma.done [#allocation21], 256
    $region97: #{tpu_custom_call.1} parent=1 // pred_fallthru
      _
    // Predicated region
    $region98: #{tpu_custom_call.1} parent=1 // pred_check
      _
    $region99: #{tpu_custom_call.1} parent=1 // pred_check_branch
      %4530 = sbr.rel (0) target = $region101
    $region100: #{tpu_custom_call.1} parent=1 // pred_region
      %4531 = dma.done [#allocation21], 256
    $region101: #{tpu_custom_call.1} parent=1 // pred_fallthru
      _
    %4532 = vsyncpa [#allocation9], 1
    %4533 = vsyncpa [#allocation12], 1
    %4534 = vsyncpa [#allocation15], 1
    %4535 = vsyncpa [#allocation18], 1
    %4536 = vsyncpa [#allocation10], 1
    %4537 = vsyncpa [#allocation21], 1

</llo_original>
